<compile_context>
chip_gen: v7x
topology: tpu7x:2x2x1
jax: 0.10.0
libtpu: 0.0.40
codegen_flags: <defaults>
</compile_context>

<pallas_src>
import functools

import jax
import jax.numpy as jnp
from jax.experimental import pallas as pl
from jax.experimental.pallas import tpu as pltpu

N_DIST, N_OMEGA, N_THETA, N_PHI = 61, 37, 37, 19
N_SYMM = N_DIST + N_OMEGA    # 98
N_ASYMM = N_THETA + N_PHI    # 56


def _to_chw(y, ti, tj, c):
    """(ti*tj, c) -> (c, ti, tj) using only well-supported layout moves:
    split the leading dim, swap the two minor dims (XLU transpose), then
    permute the major dims (pure VMEM copy, minor dim untouched)."""
    y = y.reshape(ti, tj, c)
    y = jnp.swapaxes(y, 1, 2)            # (ti, c, tj)  minor-dim transpose
    return jnp.transpose(y, (1, 0, 2))   # (c, ti, tj)  major-dim permutation


def _distance_kernel(x_ij_ref, x_ji_ref, ws_ref, bs_ref, wa_ref, ba_ref,
                     dist_ref, omega_ref, theta_ref, phi_ref):
    # x_ij_ref: (TI, TJ, F) tile of x[b, i-block, j-block]
    # x_ji_ref: (TJ, TI, F) tile of x[b, j-block, i-block] (for symmetrization)
    ti, tj, feat = x_ij_ref.shape

    x_ij = x_ij_ref[...]
    x_ji_t = jnp.transpose(x_ji_ref[...], (1, 0, 2))   # -> (TI, TJ, F)

    # ---- asymmetric head: logits_asymm = x @ Wa + ba ------------------------
    asymm = jnp.dot(x_ij.reshape(ti * tj, feat), wa_ref[...],
                    preferred_element_type=jnp.float32) + ba_ref[...]
    asymm = _to_chw(asymm, ti, tj, N_ASYMM)             # (56, TI, TJ)
    theta_ref[...] = asymm[:N_THETA].astype(theta_ref.dtype)
    phi_ref[...] = asymm[N_THETA:].astype(phi_ref.dtype)

    # ---- symmetric head:
    #   (logits_symm + logits_symm^T)[i,j] = (x[i,j] + x[j,i]) @ Ws + 2*bs ----
    x_sym = (x_ij + x_ji_t).reshape(ti * tj, feat)
    symm = jnp.dot(x_sym, ws_ref[...],
                   preferred_element_type=jnp.float32) + 2.0 * bs_ref[...]
    symm = _to_chw(symm, ti, tj, N_SYMM)                # (98, TI, TJ)
    dist_ref[...] = symm[:N_DIST].astype(dist_ref.dtype)
    omega_ref[...] = symm[N_DIST:].astype(omega_ref.dtype)


def _pick_tile(L):
    for t in (128, 64, 32, 16, 8):
        if L % t == 0:
            return t
    # TODO(synk): pad L to a multiple of 8 (or use pl.cdiv-based grids with
    # masked edge tiles) for sequence lengths that are not a multiple of 8.
    return L


@functools.partial(jax.jit, static_argnames=("tile",))
def distance_network(x, w_symm, b_symm, w_asymm, b_asymm, *, tile=None):
    """x: (B, L, L, F) float32 pair features (channels-last).

    Weights stored as (in_features, out_features) = W^T relative to nn.Linear;
    biases as (1, out_features).  Returns NCHW logits
    (dist, omega, theta, phi) matching the PyTorch module.
    """
    B, L, _, F = x.shape
    if tile is None:
        tile = _pick_tile(L)
    assert L % tile == 0, (L, tile)

    grid = (B, L // tile, L // tile)

    return pl.pallas_call(
        _distance_kernel,
        out_shape=(
            jax.ShapeDtypeStruct((B, N_DIST, L, L), jnp.float32),
            jax.ShapeDtypeStruct((B, N_OMEGA, L, L), jnp.float32),
            jax.ShapeDtypeStruct((B, N_THETA, L, L), jnp.float32),
            jax.ShapeDtypeStruct((B, N_PHI, L, L), jnp.float32),
        ),
        grid_spec=pltpu.PrefetchScalarGridSpec(
            num_scalar_prefetch=0,
            grid=grid,
            in_specs=[
                # x[b, i-tile, j-tile, :]
                pl.BlockSpec((None, tile, tile, F), lambda b, i, j: (b, i, j, 0)),
                # x[b, j-tile, i-tile, :]  (transposed access for symmetrization)
                # TODO(synk): iterate only i <= j blocks and write both (i,j)
                # and (j,i) output tiles per step (manual DMA outputs) to halve
                # the symm matmul work and the x HBM reads.
                pl.BlockSpec((None, tile, tile, F), lambda b, i, j: (b, j, i, 0)),
                # proj_symm weight / bias
                pl.BlockSpec((F, N_SYMM), lambda b, i, j: (0, 0)),
                pl.BlockSpec((1, N_SYMM), lambda b, i, j: (0, 0)),
                # proj_asymm weight / bias
                pl.BlockSpec((F, N_ASYMM), lambda b, i, j: (0, 0)),
                pl.BlockSpec((1, N_ASYMM), lambda b, i, j: (0, 0)),
            ],
            out_specs=[
                pl.BlockSpec((None, N_DIST, tile, tile), lambda b, i, j: (b, 0, i, j)),
                pl.BlockSpec((None, N_OMEGA, tile, tile), lambda b, i, j: (b, 0, i, j)),
                pl.BlockSpec((None, N_THETA, tile, tile), lambda b, i, j: (b, 0, i, j)),
                pl.BlockSpec((None, N_PHI, tile, tile), lambda b, i, j: (b, 0, i, j)),
            ],
        ),
        compiler_params=pltpu.CompilerParams(
            dimension_semantics=("parallel", "parallel", "parallel"),
            vmem_limit_bytes=64 * 1024 * 1024,
        ),
    )(x, x, w_symm, b_symm, w_asymm, b_asymm)


def distance_network_ref(x, w_symm, b_symm, w_asymm, b_asymm):
    """Pure-JAX reference mirroring the PyTorch forward."""
    logits_asymm = x @ w_asymm + b_asymm[0]
    logits_theta = jnp.transpose(logits_asymm[..., :N_THETA], (0, 3, 1, 2))
    logits_phi = jnp.transpose(logits_asymm[..., N_THETA:], (0, 3, 1, 2))
    logits_symm = x @ w_symm + b_symm[0]
    logits_symm = logits_symm + jnp.transpose(logits_symm, (0, 2, 1, 3))
    logits_dist = jnp.transpose(logits_symm[..., :N_DIST], (0, 3, 1, 2))
    logits_omega = jnp.transpose(logits_symm[..., N_DIST:], (0, 3, 1, 2))
    return logits_dist, logits_omega, logits_theta, logits_phi


def _check(out, ref, tag):
    names = ("dist", "omega", "theta", "phi")
    for name, o, r in zip(names, out, ref):
        assert o.shape == r.shape, (tag, name, o.shape, r.shape)
        assert jnp.allclose(o, r, atol=1e-5, rtol=1e-5), (tag, name)


if __name__ == "__main__":
    key = jax.random.PRNGKey(0)
    kx, kws, kbs, kwa, kba, kx2 = jax.random.split(key, 6)

    F = 32
    # The PyTorch module zero-inits its parameters; use deterministic random
    # values so the kernel exercises a non-trivial forward pass.
    w_symm = 0.1 * jax.random.normal(kws, (F, N_SYMM), dtype=jnp.float32)
    b_symm = 0.1 * jax.random.normal(kbs, (1, N_SYMM), dtype=jnp.float32)
    w_asymm = 0.1 * jax.random.normal(kwa, (F, N_ASYMM), dtype=jnp.float32)
    b_asymm = 0.1 * jax.random.normal(kba, (1, N_ASYMM), dtype=jnp.float32)

    # Small sanity shape: B=2, L=8 (single 8x8 tile per batch element).
    x = jax.random.normal(kx, (2, 8, 8, F), dtype=jnp.float32)
    out = jax.block_until_ready(
        distance_network(x, w_symm, b_symm, w_asymm, b_asymm))
    _check(out, distance_network_ref(x, w_symm, b_symm, w_asymm, b_asymm), "L=8")

    # Multi-tile path: L=256 with the default tile=128 exercises a (1,2,2)
    # grid, the transposed x[b, j, i] block access across tiles and the
    # channels-first output tiling (the configuration the review targets).
    x2 = jax.random.normal(kx2, (1, 256, 256, F), dtype=jnp.float32)
    out2 = jax.block_until_ready(
        distance_network(x2, w_symm, b_symm, w_asymm, b_asymm))
    _check(out2, distance_network_ref(x2, w_symm, b_symm, w_asymm, b_asymm),
           "L=256")

    print("KERNEL_OK")
</pallas_src>

<mosaic_0001>
module attributes {stable_mosaic.version = 11 : i64} {
  func.func @_distance_kernel(%arg0: i32, %arg1: i32, %arg2: i32, %arg3: memref<1x8x8x32xf32, #tpu.memory_space<vmem>>, %arg4: memref<1x8x8x32xf32, #tpu.memory_space<vmem>>, %arg5: memref<32x98xf32, #tpu.memory_space<vmem>>, %arg6: memref<1x98xf32, #tpu.memory_space<vmem>>, %arg7: memref<32x56xf32, #tpu.memory_space<vmem>>, %arg8: memref<1x56xf32, #tpu.memory_space<vmem>>, %arg9: memref<1x61x8x8xf32, #tpu.memory_space<vmem>>, %arg10: memref<1x37x8x8xf32, #tpu.memory_space<vmem>>, %arg11: memref<1x37x8x8xf32, #tpu.memory_space<vmem>>, %arg12: memref<1x19x8x8xf32, #tpu.memory_space<vmem>>) attributes {dimension_semantics = [#tpu.dimension_semantics<parallel>, #tpu.dimension_semantics<parallel>, #tpu.dimension_semantics<parallel>], iteration_bounds = array<i64: 2, 1, 1>, scalar_prefetch = 0 : i64, scratch_operands = 0 : i64, tpu.core_type = #tpu.core_type<tc>, window_params = [{transform_indices = @transform_0, window_bounds = array<i64: 1, 8, 8, 32>}, {transform_indices = @transform_1, window_bounds = array<i64: 1, 8, 8, 32>}, {pipeline_mode = #tpu.pipeline_mode<synchronous>, transform_indices = @transform_2, window_bounds = array<i64: 32, 98>}, {pipeline_mode = #tpu.pipeline_mode<synchronous>, transform_indices = @transform_3, window_bounds = array<i64: 1, 98>}, {pipeline_mode = #tpu.pipeline_mode<synchronous>, transform_indices = @transform_4, window_bounds = array<i64: 32, 56>}, {pipeline_mode = #tpu.pipeline_mode<synchronous>, transform_indices = @transform_5, window_bounds = array<i64: 1, 56>}, {transform_indices = @transform_6, window_bounds = array<i64: 1, 61, 8, 8>}, {transform_indices = @transform_7, window_bounds = array<i64: 1, 37, 8, 8>}, {transform_indices = @transform_8, window_bounds = array<i64: 1, 37, 8, 8>}, {transform_indices = @transform_9, window_bounds = array<i64: 1, 19, 8, 8>}]} {
    %c0 = arith.constant 0 : index
    %c0_0 = arith.constant 0 : index
    %c0_1 = arith.constant 0 : index
    %c0_2 = arith.constant 0 : index
    %0 = vector.load %arg3[%c0, %c0_0, %c0_1, %c0_2] : memref<1x8x8x32xf32, #tpu.memory_space<vmem>>, vector<1x8x8x32xf32>
    %1 = vector.shape_cast %0 : vector<1x8x8x32xf32> to vector<8x8x32xf32>
    %c0_3 = arith.constant 0 : index
    %c0_4 = arith.constant 0 : index
    %c0_5 = arith.constant 0 : index
    %c0_6 = arith.constant 0 : index
    %2 = vector.load %arg4[%c0_3, %c0_4, %c0_5, %c0_6] : memref<1x8x8x32xf32, #tpu.memory_space<vmem>>, vector<1x8x8x32xf32>
    %3 = vector.shape_cast %2 : vector<1x8x8x32xf32> to vector<8x8x32xf32>
    %4 = tpu.transpose %3, [1, 0, 2] : vector<8x8x32xf32> -> vector<8x8x32xf32>
    %5 = vector.shape_cast %1 : vector<8x8x32xf32> to vector<64x32xf32>
    %c0_7 = arith.constant 0 : index
    %c0_8 = arith.constant 0 : index
    %6 = vector.load %arg7[%c0_7, %c0_8] : memref<32x56xf32, #tpu.memory_space<vmem>>, vector<32x56xf32>
    %cst = arith.constant dense<0.000000e+00> : vector<64x56xf32>
    %7 = tpu.matmul %5, %6, %cst {dimension_numbers = #tpu.dot_dimension_numbers<[1], [0], [0], [1], [0, 0, 1, 1], [], []>} : vector<64x32xf32>, vector<32x56xf32>, vector<64x56xf32> -> vector<64x56xf32>
    %c0_9 = arith.constant 0 : index
    %c0_10 = arith.constant 0 : index
    %8 = vector.load %arg8[%c0_9, %c0_10] : memref<1x56xf32, #tpu.memory_space<vmem>>, vector<1x56xf32>
    %9 = vector.broadcast %8 : vector<1x56xf32> to vector<64x56xf32>
    %10 = arith.addf %7, %9 : vector<64x56xf32>
    %11 = vector.shape_cast %10 : vector<64x56xf32> to vector<8x8x56xf32>
    %12 = tpu.transpose %11, [0, 2, 1] : vector<8x8x56xf32> -> vector<8x56x8xf32>
    %13 = tpu.transpose %12, [1, 0, 2] : vector<8x56x8xf32> -> vector<56x8x8xf32>
    %14 = vector.extract_strided_slice %13 {offsets = [0, 0, 0], sizes = [37, 8, 8], strides = [1, 1, 1]} : vector<56x8x8xf32> to vector<37x8x8xf32>
    %c0_11 = arith.constant 0 : index
    %c0_12 = arith.constant 0 : index
    %c0_13 = arith.constant 0 : index
    %c0_14 = arith.constant 0 : index
    %15 = vector.load %arg11[%c0_11, %c0_12, %c0_13, %c0_14] : memref<1x37x8x8xf32, #tpu.memory_space<vmem>>, vector<1x37x8x8xf32>
    %16 = vector.shape_cast %15 : vector<1x37x8x8xf32> to vector<37x8x8xf32>
    %17 = vector.shape_cast %14 : vector<37x8x8xf32> to vector<1x37x8x8xf32>
    tpu.vector_store %arg11[%c0_11, %c0_12, %c0_13, %c0_14], %17 {strides = array<i32>} : memref<1x37x8x8xf32, #tpu.memory_space<vmem>>, vector<1x37x8x8xf32>,
    %18 = vector.extract_strided_slice %13 {offsets = [37, 0, 0], sizes = [19, 8, 8], strides = [1, 1, 1]} : vector<56x8x8xf32> to vector<19x8x8xf32>
    %c0_15 = arith.constant 0 : index
    %c0_16 = arith.constant 0 : index
    %c0_17 = arith.constant 0 : index
    %c0_18 = arith.constant 0 : index
    %19 = vector.load %arg12[%c0_15, %c0_16, %c0_17, %c0_18] : memref<1x19x8x8xf32, #tpu.memory_space<vmem>>, vector<1x19x8x8xf32>
    %20 = vector.shape_cast %19 : vector<1x19x8x8xf32> to vector<19x8x8xf32>
    %21 = vector.shape_cast %18 : vector<19x8x8xf32> to vector<1x19x8x8xf32>
    tpu.vector_store %arg12[%c0_15, %c0_16, %c0_17, %c0_18], %21 {strides = array<i32>} : memref<1x19x8x8xf32, #tpu.memory_space<vmem>>, vector<1x19x8x8xf32>,
    %22 = arith.addf %1, %4 : vector<8x8x32xf32>
    %23 = vector.shape_cast %22 : vector<8x8x32xf32> to vector<64x32xf32>
    %c0_19 = arith.constant 0 : index
    %c0_20 = arith.constant 0 : index
    %24 = vector.load %arg5[%c0_19, %c0_20] : memref<32x98xf32, #tpu.memory_space<vmem>>, vector<32x98xf32>
    %cst_21 = arith.constant dense<0.000000e+00> : vector<64x98xf32>
    %25 = tpu.matmul %23, %24, %cst_21 {dimension_numbers = #tpu.dot_dimension_numbers<[1], [0], [0], [1], [0, 0, 1, 1], [], []>} : vector<64x32xf32>, vector<32x98xf32>, vector<64x98xf32> -> vector<64x98xf32>
    %c0_22 = arith.constant 0 : index
    %c0_23 = arith.constant 0 : index
    %26 = vector.load %arg6[%c0_22, %c0_23] : memref<1x98xf32, #tpu.memory_space<vmem>>, vector<1x98xf32>
    %cst_24 = arith.constant 2.000000e+00 : f32
    %27 = vector.broadcast %cst_24 : f32 to vector<1x98xf32>
    %28 = arith.mulf %27, %26 : vector<1x98xf32>
    %29 = vector.broadcast %28 : vector<1x98xf32> to vector<64x98xf32>
    %30 = arith.addf %25, %29 : vector<64x98xf32>
    %31 = vector.shape_cast %30 : vector<64x98xf32> to vector<8x8x98xf32>
    %32 = tpu.transpose %31, [0, 2, 1] : vector<8x8x98xf32> -> vector<8x98x8xf32>
    %33 = tpu.transpose %32, [1, 0, 2] : vector<8x98x8xf32> -> vector<98x8x8xf32>
    %34 = vector.extract_strided_slice %33 {offsets = [0, 0, 0], sizes = [61, 8, 8], strides = [1, 1, 1]} : vector<98x8x8xf32> to vector<61x8x8xf32>
    %c0_25 = arith.constant 0 : index
    %c0_26 = arith.constant 0 : index
    %c0_27 = arith.constant 0 : index
    %c0_28 = arith.constant 0 : index
    %35 = vector.load %arg9[%c0_25, %c0_26, %c0_27, %c0_28] : memref<1x61x8x8xf32, #tpu.memory_space<vmem>>, vector<1x61x8x8xf32>
    %36 = vector.shape_cast %35 : vector<1x61x8x8xf32> to vector<61x8x8xf32>
    %37 = vector.shape_cast %34 : vector<61x8x8xf32> to vector<1x61x8x8xf32>
    tpu.vector_store %arg9[%c0_25, %c0_26, %c0_27, %c0_28], %37 {strides = array<i32>} : memref<1x61x8x8xf32, #tpu.memory_space<vmem>>, vector<1x61x8x8xf32>,
    %38 = vector.extract_strided_slice %33 {offsets = [61, 0, 0], sizes = [37, 8, 8], strides = [1, 1, 1]} : vector<98x8x8xf32> to vector<37x8x8xf32>
    %c0_29 = arith.constant 0 : index
    %c0_30 = arith.constant 0 : index
    %c0_31 = arith.constant 0 : index
    %c0_32 = arith.constant 0 : index
    %39 = vector.load %arg10[%c0_29, %c0_30, %c0_31, %c0_32] : memref<1x37x8x8xf32, #tpu.memory_space<vmem>>, vector<1x37x8x8xf32>
    %40 = vector.shape_cast %39 : vector<1x37x8x8xf32> to vector<37x8x8xf32>
    %41 = vector.shape_cast %38 : vector<37x8x8xf32> to vector<1x37x8x8xf32>
    tpu.vector_store %arg10[%c0_29, %c0_30, %c0_31, %c0_32], %41 {strides = array<i32>} : memref<1x37x8x8xf32, #tpu.memory_space<vmem>>, vector<1x37x8x8xf32>,
    return
  }
  func.func @transform_0(%arg0: i32, %arg1: i32, %arg2: i32) -> (i32, i32, i32, i32) {
    %c0_i32 = arith.constant 0 : i32
    %c0_i32_0 = arith.constant 0 : i32
    return %arg0, %arg1, %arg2, %c0_i32 : i32, i32, i32, i32
  }
  func.func @transform_1(%arg0: i32, %arg1: i32, %arg2: i32) -> (i32, i32, i32, i32) {
    %c0_i32 = arith.constant 0 : i32
    %c0_i32_0 = arith.constant 0 : i32
    return %arg0, %arg2, %arg1, %c0_i32 : i32, i32, i32, i32
  }
  func.func @transform_2(%arg0: i32, %arg1: i32, %arg2: i32) -> (i32, i32) {
    %c0_i32 = arith.constant 0 : i32
    %c0_i32_0 = arith.constant 0 : i32
    %c0_i32_1 = arith.constant 0 : i32
    return %c0_i32, %c0_i32_0 : i32, i32
  }
  func.func @transform_3(%arg0: i32, %arg1: i32, %arg2: i32) -> (i32, i32) {
    %c0_i32 = arith.constant 0 : i32
    %c0_i32_0 = arith.constant 0 : i32
    %c0_i32_1 = arith.constant 0 : i32
    return %c0_i32, %c0_i32_0 : i32, i32
  }
  func.func @transform_4(%arg0: i32, %arg1: i32, %arg2: i32) -> (i32, i32) {
    %c0_i32 = arith.constant 0 : i32
    %c0_i32_0 = arith.constant 0 : i32
    %c0_i32_1 = arith.constant 0 : i32
    return %c0_i32, %c0_i32_0 : i32, i32
  }
  func.func @transform_5(%arg0: i32, %arg1: i32, %arg2: i32) -> (i32, i32) {
    %c0_i32 = arith.constant 0 : i32
    %c0_i32_0 = arith.constant 0 : i32
    %c0_i32_1 = arith.constant 0 : i32
    return %c0_i32, %c0_i32_0 : i32, i32
  }
  func.func @transform_6(%arg0: i32, %arg1: i32, %arg2: i32) -> (i32, i32, i32, i32) {
    %c0_i32 = arith.constant 0 : i32
    %c0_i32_0 = arith.constant 0 : i32
    return %arg0, %c0_i32, %arg1, %arg2 : i32, i32, i32, i32
  }
  func.func @transform_7(%arg0: i32, %arg1: i32, %arg2: i32) -> (i32, i32, i32, i32) {
    %c0_i32 = arith.constant 0 : i32
    %c0_i32_0 = arith.constant 0 : i32
    return %arg0, %c0_i32, %arg1, %arg2 : i32, i32, i32, i32
  }
  func.func @transform_8(%arg0: i32, %arg1: i32, %arg2: i32) -> (i32, i32, i32, i32) {
    %c0_i32 = arith.constant 0 : i32
    %c0_i32_0 = arith.constant 0 : i32
    return %arg0, %c0_i32, %arg1, %arg2 : i32, i32, i32, i32
  }
  func.func @transform_9(%arg0: i32, %arg1: i32, %arg2: i32) -> (i32, i32, i32, i32) {
    %c0_i32 = arith.constant 0 : i32
    %c0_i32_0 = arith.constant 0 : i32
    return %arg0, %c0_i32, %arg1, %arg2 : i32, i32, i32, i32
  }
}

</mosaic_0001>

<llo_original>
// kernel: distance_network.1
$region0: #{distance_network.1}
  #allocation0 [shape = 'u32[]', space=smem, size = 0x4, offset = 0x4, fixed_abs, tag = 'smem constant byte address 0x4 - core index']
  #allocation1 [shape = 'u32[144,128]{1,0:T(1,128)}', space=vmem, size = 0x12000, scoped, tag = 'internal scratch']
  %s0 = inlined_call_operand.hbm [shape: f32[2,8,8,32], index: 0, kind: input, shape index: {}, may-alias: {0,1}]
  %s1 = inlined_call_operand.hbm [shape: f32[2,8,8,32], index: 1, kind: input, shape index: {}, may-alias: {0,1}]
  %s2 = inlined_call_operand.hbm [shape: f32[32,98], index: 2, kind: input, shape index: {}]
  %s3 = inlined_call_operand.hbm [shape: f32[1,98], index: 3, kind: input, shape index: {}]
  %s4 = inlined_call_operand.hbm [shape: f32[32,56], index: 4, kind: input, shape index: {}]
  %s5 = inlined_call_operand.hbm [shape: f32[1,56], index: 5, kind: input, shape index: {}]
  %s6 = inlined_call_operand.hbm [shape: f32[2,61,8,8], index: 6, kind: output, shape index: {0}]
  %s7 = inlined_call_operand.hbm [shape: f32[2,37,8,8], index: 7, kind: output, shape index: {1}]
  %s8 = inlined_call_operand.hbm [shape: f32[2,37,8,8], index: 8, kind: output, shape index: {2}]
  %s9 = inlined_call_operand.hbm [shape: f32[2,19,8,8], index: 9, kind: output, shape index: {3}]
  %10 = xla_tuple %s6, %s7, %s8, %s9
  %s11 = sld [smem:[#allocation0]]
  $region105: #{distance_network.1} parent=0
    _
  %s13 = ssub.s32 1, %s11
  %s14 = scalar_select 0, %s13, %s11
  $region1: #{distance_network.1} parent=0
    #allocation2 [shape = 'u8[65536]{0}', space=vmem, size = 0x10000, scoped, tag = 'input window, operand 0']
    #allocation3 [shape = 's32[2]{0}', space=sflag, size = 0x8, scoped, tag = 'scoped memory for distance_network.1']
    #allocation4 [shape = 's32[2]{0}', space=sflag, size = 0x8, scoped, tag = 'scoped memory for distance_network.1']
    #allocation5 [shape = 'u8[65536]{0}', space=vmem, size = 0x10000, scoped, tag = 'input window, operand 1']
    #allocation6 [shape = 's32[2]{0}', space=sflag, size = 0x8, scoped, tag = 'scoped memory for distance_network.1']
    #allocation7 [shape = 'u8[16384]{0}', space=vmem, size = 0x4000, scoped, tag = 'input window, operand 2, single buffered']
    #allocation8 [shape = 'u8[512]{0}', space=vmem, size = 0x400, scoped, tag = 'input window, operand 3, single buffered']
    #allocation9 [shape = 's32[1]{0}', space=sflag, size = 0x4, scoped, tag = 'scoped memory for distance_network.1']
    #allocation10 [shape = 'u8[16384]{0}', space=vmem, size = 0x4000, scoped, tag = 'input window, operand 4, single buffered']
    #allocation11 [shape = 'u8[512]{0}', space=vmem, size = 0x400, scoped, tag = 'input window, operand 5, single buffered']
    #allocation12 [shape = 's32[1]{0}', space=sflag, size = 0x4, scoped, tag = 'scoped memory for distance_network.1']
    #allocation13 [shape = 'u8[499712]{0}', space=vmem, size = 0x7a000, scoped, tag = 'output window, operand 0']
    #allocation14 [shape = 'u8[303104]{0}', space=vmem, size = 0x4a000, scoped, tag = 'output window, operand 1']
    #allocation15 [shape = 's32[2]{0}', space=sflag, size = 0x8, scoped, tag = 'scoped memory for distance_network.1']
    #allocation16 [shape = 'u8[303104]{0}', space=vmem, size = 0x4a000, scoped, tag = 'output window, operand 2']
    #allocation17 [shape = 'u8[155648]{0}', space=vmem, size = 0x26000, scoped, tag = 'output window, operand 3']
    #allocation18 [shape = 's32[2]{0}', space=sflag, size = 0x8, scoped, tag = 'scoped memory for distance_network.1']
    %15 = vsyncpa [#allocation3], 0
    %s16 = scalar_lea.sflag [#allocation3], 1
    %17 = vsyncpa %s16, 0
    %18 = vsyncpa [#allocation6], 0
    %s19 = scalar_lea.sflag [#allocation6], 1
    %20 = vsyncpa %s19, 0
    %21 = vsyncpa [#allocation9], 0
    %22 = vsyncpa [#allocation12], 0
    %23 = vsyncpa [#allocation4], 0
    %s24 = scalar_lea.sflag [#allocation4], 1
    %25 = vsyncpa %s24, 0
    %26 = vsyncpa [#allocation15], 0
    %s27 = scalar_lea.sflag [#allocation15], 1
    %28 = vsyncpa %s27, 0
    %29 = vsyncpa [#allocation18], 0
    %s30 = scalar_lea.sflag [#allocation18], 1
    %31 = vsyncpa %s30, 0
    loop: start=0, step=1, limit=4
    $region2: #{distance_network.1} parent=1 // loop_pre_header
      _
    $region3: #{distance_network.1} parent=1 // loop_header
      %s33 = sphi 0, %s37
      %p34 = scmp.ge.s32.totalorder %s33, 4
      %s40 = sphi 0, %s59
      %s41 = sphi 0, %s55
      %s42 = sphi 0, %s51
      %s43 = sphi 0, %s40
      %s44 = sphi 0, %s41
      %s45 = sphi 0, %s42
      %s46 = sphi 0, %s43
      %s47 = sphi 0, %s44
      %s48 = sphi 0, %s45
      %s66 = sphi 0, %s68
      %s69 = sphi 0, %s66
      %s70 = sphi 0, %s69
      %s86 = sphi 0, %s70
      %s96 = sphi 0, %s98
      %s99 = sphi 0, %s96
      %s100 = sphi 0, %s99
      %s116 = sphi 0, %s100
      %s120 = sphi 0, %s120
      %s122 = sphi 0, %s120
      %s123 = sphi 0, %s122
      %s137 = sphi 0, %s123
      %s141 = sphi 0, %s141
      %s143 = sphi 0, %s141
      %s144 = sphi 0, %s143
      %s158 = sphi 0, %s144
      %s162 = sphi 0, %s162
      %s164 = sphi 0, %s162
      %s165 = sphi 0, %s164
      %s179 = sphi 0, %s165
      %s183 = sphi 0, %s183
      %s185 = sphi 0, %s183
      %s186 = sphi 0, %s185
      %s200 = sphi 0, %s186
      %s210 = sphi 0, %s212
      %s213 = sphi 0, %s210
      %s214 = sphi 0, %s213
      %s230 = sphi 0, %s214
      %s240 = sphi 0, %s242
      %s243 = sphi 0, %s240
      %s244 = sphi 0, %s243
      %s260 = sphi 0, %s244
      %s270 = sphi 0, %s272
      %s273 = sphi 0, %s270
      %s274 = sphi 0, %s273
      %s290 = sphi 0, %s274
      %s300 = sphi 0, %s302
      %s303 = sphi 0, %s300
      %s304 = sphi 0, %s303
      %s320 = sphi 0, %s304
    $region4: #{distance_network.1} parent=1 // loop_header_branch
      %36 = sbr.rel (%p34) target = $region8
    $region5: #{distance_network.1} parent=1 // loop_body
      %s38 = ssub.s32 %s33, 1
      %s39 = ssub.s32 %s33, 2
      %s49 = sadd.s32 1, %s42
      %p50 = scmp.ge.s32.totalorder %s49, 1
      %s51 = scalar_select %p50, 0, %s49
      %s52 = sadd.s32 1, %s41
      %s53 = scalar_select %p50, %s52, %s41
      %p54 = scmp.ge.s32.totalorder %s53, 1
      %s55 = scalar_select %p54, 0, %s53
      %s56 = sadd.s32 1, %s40
      %s57 = scalar_select %p54, %s56, %s40
      %p58 = scmp.ge.s32.totalorder %s57, 2
      %s59 = scalar_select %p58, 0, %s57
      %s60 = ssub.s32 %s40, %s59
      %s61 = ssub.s32 %s41, %s55
      %s62 = sor.u32 %s60, %s61
      %s63 = ssub.s32 %s42, %s51
      %s64 = sor.u32 %s62, %s63
      %p65 = scmp.eq.s32.totalorder %s64, 0
      %s67 = sadd.s32 %s66, 1
      %s68 = scalar_select %p65, %s66, %s67
      %p71 = pneg %p65
      %p72 = scmp.eq.s32.totalorder %s33, 1
      %p73 = por %p71, %p72
      %p74 = scmp.ne.s32.totalorder %s66, %s69
      %p75 = scmp.eq.s32.totalorder %s33, 0
      %p76 = por %p74, %p75
      %p77 = scmp.ne.s32.totalorder %s66, %s69
      %p78 = scmp.eq.s32.totalorder %s38, 1
      %p79 = por %p77, %p78
      %p80 = scmp.ne.s32.totalorder %s69, %s70
      %p81 = scmp.eq.s32.totalorder %s38, 0
      %p82 = por %p80, %p81
      %p83 = scmp.ne.s32.totalorder %s69, %s70
      %p84 = scmp.eq.s32.totalorder %s39, 1
      %p85 = por %p83, %p84
      %p87 = scmp.ne.s32.totalorder %s70, %s86
      %p88 = scmp.eq.s32.totalorder %s39, 0
      %p89 = por %p87, %p88
      %s90 = ssub.s32 %s40, %s59
      %s91 = ssub.s32 %s42, %s51
      %s92 = sor.u32 %s90, %s91
      %s93 = ssub.s32 %s41, %s55
      %s94 = sor.u32 %s92, %s93
      %p95 = scmp.eq.s32.totalorder %s94, 0
      %s97 = sadd.s32 %s96, 1
      %s98 = scalar_select %p95, %s96, %s97
      %p101 = pneg %p95
      %p102 = scmp.eq.s32.totalorder %s33, 1
      %p103 = por %p101, %p102
      %p104 = scmp.ne.s32.totalorder %s96, %s99
      %p105 = scmp.eq.s32.totalorder %s33, 0
      %p106 = por %p104, %p105
      %p107 = scmp.ne.s32.totalorder %s96, %s99
      %p108 = scmp.eq.s32.totalorder %s38, 1
      %p109 = por %p107, %p108
      %p110 = scmp.ne.s32.totalorder %s99, %s100
      %p111 = scmp.eq.s32.totalorder %s38, 0
      %p112 = por %p110, %p111
      %p113 = scmp.ne.s32.totalorder %s99, %s100
      %p114 = scmp.eq.s32.totalorder %s39, 1
      %p115 = por %p113, %p114
      %p117 = scmp.ne.s32.totalorder %s100, %s116
      %p118 = scmp.eq.s32.totalorder %s39, 0
      %p119 = por %p117, %p118
      %s121 = sadd.s32 %s120, 1
      %p124 = scmp.eq.s32.totalorder %s33, 1
      %p125 = scmp.ne.s32.totalorder %s120, %s122
      %p126 = scmp.eq.s32.totalorder %s33, 0
      %p127 = por %p125, %p126
      %p128 = scmp.ne.s32.totalorder %s120, %s122
      %p129 = scmp.eq.s32.totalorder %s38, 1
      %p130 = por %p128, %p129
      %p131 = scmp.ne.s32.totalorder %s122, %s123
      %p132 = scmp.eq.s32.totalorder %s38, 0
      %p133 = por %p131, %p132
      %p134 = scmp.ne.s32.totalorder %s122, %s123
      %p135 = scmp.eq.s32.totalorder %s39, 1
      %p136 = por %p134, %p135
      %p138 = scmp.ne.s32.totalorder %s123, %s137
      %p139 = scmp.eq.s32.totalorder %s39, 0
      %p140 = por %p138, %p139
      %s142 = sadd.s32 %s141, 1
      %p145 = scmp.eq.s32.totalorder %s33, 1
      %p146 = scmp.ne.s32.totalorder %s141, %s143
      %p147 = scmp.eq.s32.totalorder %s33, 0
      %p148 = por %p146, %p147
      %p149 = scmp.ne.s32.totalorder %s141, %s143
      %p150 = scmp.eq.s32.totalorder %s38, 1
      %p151 = por %p149, %p150
      %p152 = scmp.ne.s32.totalorder %s143, %s144
      %p153 = scmp.eq.s32.totalorder %s38, 0
      %p154 = por %p152, %p153
      %p155 = scmp.ne.s32.totalorder %s143, %s144
      %p156 = scmp.eq.s32.totalorder %s39, 1
      %p157 = por %p155, %p156
      %p159 = scmp.ne.s32.totalorder %s144, %s158
      %p160 = scmp.eq.s32.totalorder %s39, 0
      %p161 = por %p159, %p160
      %s163 = sadd.s32 %s162, 1
      %p166 = scmp.eq.s32.totalorder %s33, 1
      %p167 = scmp.ne.s32.totalorder %s162, %s164
      %p168 = scmp.eq.s32.totalorder %s33, 0
      %p169 = por %p167, %p168
      %p170 = scmp.ne.s32.totalorder %s162, %s164
      %p171 = scmp.eq.s32.totalorder %s38, 1
      %p172 = por %p170, %p171
      %p173 = scmp.ne.s32.totalorder %s164, %s165
      %p174 = scmp.eq.s32.totalorder %s38, 0
      %p175 = por %p173, %p174
      %p176 = scmp.ne.s32.totalorder %s164, %s165
      %p177 = scmp.eq.s32.totalorder %s39, 1
      %p178 = por %p176, %p177
      %p180 = scmp.ne.s32.totalorder %s165, %s179
      %p181 = scmp.eq.s32.totalorder %s39, 0
      %p182 = por %p180, %p181
      %s184 = sadd.s32 %s183, 1
      %p187 = scmp.eq.s32.totalorder %s33, 1
      %p188 = scmp.ne.s32.totalorder %s183, %s185
      %p189 = scmp.eq.s32.totalorder %s33, 0
      %p190 = por %p188, %p189
      %p191 = scmp.ne.s32.totalorder %s183, %s185
      %p192 = scmp.eq.s32.totalorder %s38, 1
      %p193 = por %p191, %p192
      %p194 = scmp.ne.s32.totalorder %s185, %s186
      %p195 = scmp.eq.s32.totalorder %s38, 0
      %p196 = por %p194, %p195
      %p197 = scmp.ne.s32.totalorder %s185, %s186
      %p198 = scmp.eq.s32.totalorder %s39, 1
      %p199 = por %p197, %p198
      %p201 = scmp.ne.s32.totalorder %s186, %s200
      %p202 = scmp.eq.s32.totalorder %s39, 0
      %p203 = por %p201, %p202
      %s204 = ssub.s32 %s40, %s59
      %s205 = ssub.s32 %s41, %s55
      %s206 = sor.u32 %s204, %s205
      %s207 = ssub.s32 %s42, %s51
      %s208 = sor.u32 %s206, %s207
      %p209 = scmp.eq.s32.totalorder %s208, 0
      %s211 = sadd.s32 %s210, 1
      %s212 = scalar_select %p209, %s210, %s211
      %p215 = pneg %p209
      %p216 = scmp.eq.s32.totalorder %s33, 1
      %p217 = por %p215, %p216
      %p218 = scmp.ne.s32.totalorder %s210, %s213
      %p219 = scmp.eq.s32.totalorder %s33, 0
      %p220 = por %p218, %p219
      %p221 = scmp.ne.s32.totalorder %s210, %s213
      %p222 = scmp.eq.s32.totalorder %s38, 1
      %p223 = por %p221, %p222
      %p224 = scmp.ne.s32.totalorder %s213, %s214
      %p225 = scmp.eq.s32.totalorder %s38, 0
      %p226 = por %p224, %p225
      %p227 = scmp.ne.s32.totalorder %s213, %s214
      %p228 = scmp.eq.s32.totalorder %s39, 1
      %p229 = por %p227, %p228
      %p231 = scmp.ne.s32.totalorder %s214, %s230
      %p232 = scmp.eq.s32.totalorder %s39, 0
      %p233 = por %p231, %p232
      %s234 = ssub.s32 %s40, %s59
      %s235 = ssub.s32 %s41, %s55
      %s236 = sor.u32 %s234, %s235
      %s237 = ssub.s32 %s42, %s51
      %s238 = sor.u32 %s236, %s237
      %p239 = scmp.eq.s32.totalorder %s238, 0
      %s241 = sadd.s32 %s240, 1
      %s242 = scalar_select %p239, %s240, %s241
      %p245 = pneg %p239
      %p246 = scmp.eq.s32.totalorder %s33, 1
      %p247 = por %p245, %p246
      %p248 = scmp.ne.s32.totalorder %s240, %s243
      %p249 = scmp.eq.s32.totalorder %s33, 0
      %p250 = por %p248, %p249
      %p251 = scmp.ne.s32.totalorder %s240, %s243
      %p252 = scmp.eq.s32.totalorder %s38, 1
      %p253 = por %p251, %p252
      %p254 = scmp.ne.s32.totalorder %s243, %s244
      %p255 = scmp.eq.s32.totalorder %s38, 0
      %p256 = por %p254, %p255
      %p257 = scmp.ne.s32.totalorder %s243, %s244
      %p258 = scmp.eq.s32.totalorder %s39, 1
      %p259 = por %p257, %p258
      %p261 = scmp.ne.s32.totalorder %s244, %s260
      %p262 = scmp.eq.s32.totalorder %s39, 0
      %p263 = por %p261, %p262
      %s264 = ssub.s32 %s40, %s59
      %s265 = ssub.s32 %s41, %s55
      %s266 = sor.u32 %s264, %s265
      %s267 = ssub.s32 %s42, %s51
      %s268 = sor.u32 %s266, %s267
      %p269 = scmp.eq.s32.totalorder %s268, 0
      %s271 = sadd.s32 %s270, 1
      %s272 = scalar_select %p269, %s270, %s271
      %p275 = pneg %p269
      %p276 = scmp.eq.s32.totalorder %s33, 1
      %p277 = por %p275, %p276
      %p278 = scmp.ne.s32.totalorder %s270, %s273
      %p279 = scmp.eq.s32.totalorder %s33, 0
      %p280 = por %p278, %p279
      %p281 = scmp.ne.s32.totalorder %s270, %s273
      %p282 = scmp.eq.s32.totalorder %s38, 1
      %p283 = por %p281, %p282
      %p284 = scmp.ne.s32.totalorder %s273, %s274
      %p285 = scmp.eq.s32.totalorder %s38, 0
      %p286 = por %p284, %p285
      %p287 = scmp.ne.s32.totalorder %s273, %s274
      %p288 = scmp.eq.s32.totalorder %s39, 1
      %p289 = por %p287, %p288
      %p291 = scmp.ne.s32.totalorder %s274, %s290
      %p292 = scmp.eq.s32.totalorder %s39, 0
      %p293 = por %p291, %p292
      %s294 = ssub.s32 %s40, %s59
      %s295 = ssub.s32 %s41, %s55
      %s296 = sor.u32 %s294, %s295
      %s297 = ssub.s32 %s42, %s51
      %s298 = sor.u32 %s296, %s297
      %p299 = scmp.eq.s32.totalorder %s298, 0
      %s301 = sadd.s32 %s300, 1
      %s302 = scalar_select %p299, %s300, %s301
      %p305 = pneg %p299
      %p306 = scmp.eq.s32.totalorder %s33, 1
      %p307 = por %p305, %p306
      %p308 = scmp.ne.s32.totalorder %s300, %s303
      %p309 = scmp.eq.s32.totalorder %s33, 0
      %p310 = por %p308, %p309
      %p311 = scmp.ne.s32.totalorder %s300, %s303
      %p312 = scmp.eq.s32.totalorder %s38, 1
      %p313 = por %p311, %p312
      %p314 = scmp.ne.s32.totalorder %s303, %s304
      %p315 = scmp.eq.s32.totalorder %s38, 0
      %p316 = por %p314, %p315
      %p317 = scmp.ne.s32.totalorder %s303, %s304
      %p318 = scmp.eq.s32.totalorder %s39, 1
      %p319 = por %p317, %p318
      %p321 = scmp.ne.s32.totalorder %s304, %s320
      %p322 = scmp.eq.s32.totalorder %s39, 0
      %p323 = por %p321, %p322
      %p324 = scmp.le.s32.totalorder 1, %s33
      %p325 = scmp.lt.s32.totalorder %s33, 3
      %p326 = pnand %p324, %p325
      %p327 = pneg %p326
      // Predicated region
      $region9: #{distance_network.1} parent=5 // pred_check
        _
      $region10: #{distance_network.1} parent=5 // pred_check_branch
        %329 = sbr.rel (%p326) target = $region12
      $region11: #{distance_network.1} parent=5 // pred_region
        %s330 = ssub.s32 %s33, 1
        // Predicated region
        $region13: #{distance_network.1} parent=11 // pred_check
          %p331 = pneg %p133
        $region14: #{distance_network.1} parent=11 // pred_check_branch
          %333 = sbr.rel (%p331) target = $region16
        $region15: #{distance_network.1} parent=11 // pred_region
          %s335 = ssub.s32 512, 512
          %336 = vsyncadd [#allocation6], %s335
          %s337 = sshll.u32 [#allocation7], 4
          %s338 = int_to_ptr.vmem [resolvable:$true] %s337
          %343 = dma.hbm_to_vmem [thread:$0]  %s2, 512, %s338, [#allocation6], 128, 128, 8
        $region16: #{distance_network.1} parent=11 // pred_fallthru
          _
        // Predicated region
        $region17: #{distance_network.1} parent=11 // pred_check
          %p344 = pneg %p154
        $region18: #{distance_network.1} parent=11 // pred_check_branch
          %346 = sbr.rel (%p344) target = $region20
        $region19: #{distance_network.1} parent=11 // pred_region
          %s348 = ssub.s32 16, 16
          %349 = vsyncadd [#allocation9], %s348
          %s351 = sshll.u32 [#allocation8], 4
          %s352 = int_to_ptr.vmem [resolvable:$true] %s351
          %354 = dma.hbm_to_vmem [thread:$0]  %s3, 16, %s352, [#allocation9]
        $region20: #{distance_network.1} parent=11 // pred_fallthru
          _
        // Predicated region
        $region21: #{distance_network.1} parent=11 // pred_check
          %p355 = pneg %p175
        $region22: #{distance_network.1} parent=11 // pred_check_branch
          %357 = sbr.rel (%p355) target = $region24
        $region23: #{distance_network.1} parent=11 // pred_region
          %s359 = ssub.s32 512, 512
          %360 = vsyncadd [#allocation9], %s359
          %s361 = sshll.u32 [#allocation10], 4
          %s362 = int_to_ptr.vmem [resolvable:$true] %s361
          %367 = dma.hbm_to_vmem [thread:$0]  %s4, 512, %s362, [#allocation9], 128, 128, 8
        $region24: #{distance_network.1} parent=11 // pred_fallthru
          _
        // Predicated region
        $region25: #{distance_network.1} parent=11 // pred_check
          %p368 = pneg %p196
        $region26: #{distance_network.1} parent=11 // pred_check_branch
          %370 = sbr.rel (%p368) target = $region28
        $region27: #{distance_network.1} parent=11 // pred_region
          %s372 = ssub.s32 16, 16
          %373 = vsyncadd [#allocation12], %s372
          %s375 = sshll.u32 [#allocation11], 4
          %s376 = int_to_ptr.vmem [resolvable:$true] %s375
          %378 = dma.hbm_to_vmem [thread:$0]  %s5, 16, %s376, [#allocation12]
        $region28: #{distance_network.1} parent=11 // pred_fallthru
          _
      $region12: #{distance_network.1} parent=5 // pred_fallthru
        _
      %p379 = scmp.lt.s32.totalorder %s33, 2
      // Predicated region
      $region29: #{distance_network.1} parent=5 // pred_check
        %p380 = pneg %p379
      $region30: #{distance_network.1} parent=5 // pred_check_branch
        %382 = sbr.rel (%p380) target = $region32
      $region31: #{distance_network.1} parent=5 // pred_region
        // Predicated region
        $region33: #{distance_network.1} parent=31 // pred_check
          %p383 = pneg %p76
        $region34: #{distance_network.1} parent=31 // pred_check_branch
          %385 = sbr.rel (%p383) target = $region36
        $region35: #{distance_network.1} parent=31 // pred_region
          %s386 = sand.u32 %s66, 1
          %s387 = scalar_lea.sflag [#allocation3], %s386
          %s388 = sand.u32 %s66, 1
          %s389 = smul.addr %s388, 64
          %s390 = scalar_lea.vmem [#allocation2], %s389
          %s391 = smul.u32 8, %s41
          %s393 = ssub.s32 1024, 1024
          %394 = vsyncadd %s387, %s393
          %s395 = sadd.s32 %s42, %s391
          %s396 = smul.addr %s40, 8
          %s397 = sadd.s32 %s395, %s396
          %s398 = smul.addr %s397, 128
          %s399 = scalar_lea.hbm %s0, %s398
          %s400 = sshll.u32 %s390, 4
          %s401 = int_to_ptr.vmem [resolvable:$true] %s400
          %406 = dma.hbm_to_vmem [thread:$0]  %s399, 1024, %s401, %s387, 128, 128, 8
        $region36: #{distance_network.1} parent=31 // pred_fallthru
          _
        // Predicated region
        $region37: #{distance_network.1} parent=31 // pred_check
          %p407 = pneg %p106
        $region38: #{distance_network.1} parent=31 // pred_check_branch
          %409 = sbr.rel (%p407) target = $region40
        $region39: #{distance_network.1} parent=31 // pred_region
          %s410 = sand.u32 %s33, 1
          %s411 = scalar_lea.sflag [#allocation6], %s410
          %s412 = sand.u32 %s96, 1
          %s413 = smul.addr %s412, 64
          %s414 = scalar_lea.vmem [#allocation5], %s413
          %s415 = smul.u32 8, %s42
          %s417 = ssub.s32 1024, 1024
          %418 = vsyncadd %s411, %s417
          %s419 = sadd.s32 %s41, %s415
          %s420 = smul.addr %s40, 8
          %s421 = sadd.s32 %s419, %s420
          %s422 = smul.addr %s421, 128
          %s423 = scalar_lea.hbm %s1, %s422
          %s424 = sshll.u32 %s414, 4
          %s425 = int_to_ptr.vmem [resolvable:$true] %s424
          %430 = dma.hbm_to_vmem [thread:$0]  %s423, 1024, %s425, %s411, 128, 128, 8
        $region40: #{distance_network.1} parent=31 // pred_fallthru
          _
      $region32: #{distance_network.1} parent=5 // pred_fallthru
        _
      %p431 = scmp.le.s32.totalorder 1, %s33
      %p432 = scmp.lt.s32.totalorder %s33, 3
      %p433 = pnand %p431, %p432
      %p434 = pneg %p433
      // Predicated region
      $region41: #{distance_network.1} parent=5 // pred_check
        _
      $region42: #{distance_network.1} parent=5 // pred_check_branch
        %436 = sbr.rel (%p433) target = $region44
      $region43: #{distance_network.1} parent=5 // pred_region
        %s437 = ssub.s32 %s33, 1
        %s438 = sand.u32 %s69, 1
        %s439 = scalar_lea.sflag [#allocation3], %s438
        %s440 = sand.u32 %s69, 1
        %s441 = smul.addr %s440, 64
        %s442 = scalar_lea.vmem [#allocation2], %s441
        // Predicated region
        $region45: #{distance_network.1} parent=43 // pred_check
          %p443 = pneg %p82
        $region46: #{distance_network.1} parent=43 // pred_check_branch
          %445 = sbr.rel (%p443) target = $region48
        $region47: #{distance_network.1} parent=43 // pred_region
          %446 = dma.done %s439, 1024
        $region48: #{distance_network.1} parent=43 // pred_fallthru
          _
        %s447 = sand.u32 %s38, 1
        %s448 = scalar_lea.sflag [#allocation6], %s447
        %s449 = sand.u32 %s99, 1
        %s450 = smul.addr %s449, 64
        %s451 = scalar_lea.vmem [#allocation5], %s450
        // Predicated region
        $region49: #{distance_network.1} parent=43 // pred_check
          %p452 = pneg %p112
        $region50: #{distance_network.1} parent=43 // pred_check_branch
          %454 = sbr.rel (%p452) target = $region52
        $region51: #{distance_network.1} parent=43 // pred_region
          %455 = dma.done %s448, 1024
        $region52: #{distance_network.1} parent=43 // pred_fallthru
          _
        // Predicated region
        $region53: #{distance_network.1} parent=43 // pred_check
          %p456 = pneg %p133
        $region54: #{distance_network.1} parent=43 // pred_check_branch
          %458 = sbr.rel (%p456) target = $region56
        $region55: #{distance_network.1} parent=43 // pred_region
          %459 = dma.done [#allocation6], 512
        $region56: #{distance_network.1} parent=43 // pred_fallthru
          _
        // Predicated region
        $region57: #{distance_network.1} parent=43 // pred_check
          %p460 = pneg %p154
        $region58: #{distance_network.1} parent=43 // pred_check_branch
          %462 = sbr.rel (%p460) target = $region60
        $region59: #{distance_network.1} parent=43 // pred_region
          %463 = dma.done [#allocation9], 16
        $region60: #{distance_network.1} parent=43 // pred_fallthru
          _
        // Predicated region
        $region61: #{distance_network.1} parent=43 // pred_check
          %p464 = pneg %p175
        $region62: #{distance_network.1} parent=43 // pred_check_branch
          %466 = sbr.rel (%p464) target = $region64
        $region63: #{distance_network.1} parent=43 // pred_region
          %467 = dma.done [#allocation9], 512
        $region64: #{distance_network.1} parent=43 // pred_fallthru
          _
        // Predicated region
        $region65: #{distance_network.1} parent=43 // pred_check
          %p468 = pneg %p196
        $region66: #{distance_network.1} parent=43 // pred_check_branch
          %470 = sbr.rel (%p468) target = $region68
        $region67: #{distance_network.1} parent=43 // pred_region
          %471 = dma.done [#allocation12], 16
        $region68: #{distance_network.1} parent=43 // pred_fallthru
          _
        %s472 = sand.u32 %s69, 1
        %s473 = scalar_lea.sflag [#allocation3], %s472
        %s474 = sand.u32 %s69, 1
        %s475 = smul.addr %s474, 64
        %s476 = scalar_lea.vmem [#allocation2], %s475
        %p477 = pneg %p82
        %p478 = pneg %p79
        %s479 = sand.u32 %s38, 1
        %s480 = scalar_lea.sflag [#allocation6], %s479
        %s481 = sand.u32 %s99, 1
        %s482 = smul.addr %s481, 64
        %s483 = scalar_lea.vmem [#allocation5], %s482
        %p484 = pneg %p112
        %p485 = pneg %p109
        %p486 = pneg %p133
        %p487 = pneg %p130
        %p488 = pneg %p154
        %p489 = pneg %p151
        %p490 = pneg %p175
        %p491 = pneg %p172
        %p492 = pneg %p196
        %p493 = pneg %p193
        %p494 = pneg %p226
        %p495 = pneg %p223
        %s496 = sand.u32 %s213, 1
        %s497 = scalar_lea.sflag [#allocation4], %s496
        %s498 = sand.u32 %s213, 1
        %s499 = smul.addr %s498, 488
        %s500 = scalar_lea.vmem [#allocation13], %s499
        %p501 = pneg %p256
        %p502 = pneg %p253
        %s503 = sand.u32 %s38, 1
        %s504 = scalar_lea.sflag [#allocation15], %s503
        %s505 = sand.u32 %s243, 1
        %s506 = smul.addr %s505, 296
        %s507 = scalar_lea.vmem [#allocation14], %s506
        %p508 = pneg %p286
        %p509 = pneg %p283
        %s510 = sand.u32 %s38, 1
        %s511 = scalar_lea.sflag [#allocation15], %s510
        %s512 = sand.u32 %s273, 1
        %s513 = smul.addr %s512, 296
        %s514 = scalar_lea.vmem [#allocation16], %s513
        %p515 = pneg %p316
        %p516 = pneg %p313
        %s517 = sand.u32 %s303, 1
        %s518 = scalar_lea.sflag [#allocation18], %s517
        %s519 = sand.u32 %s303, 1
        %s520 = smul.addr %s519, 152
        %s521 = scalar_lea.vmem [#allocation17], %s520
        %s522 = smul.u32 8, %s44
        %s523 = smul.u32 8, %s45
        %v524 = vld [vmem:[%s442] sm:$0xff]
        %v525 = vld [vmem:[%s442 + $0x8] sm:$0xff]
        %v526 = vld [vmem:[%s442 + $0x10] sm:$0xff]
        %v527 = vld [vmem:[%s442 + $0x18] sm:$0xff]
        %v528 = vld [vmem:[%s442 + $0x20] sm:$0xff]
        %v529 = vld [vmem:[%s442 + $0x28] sm:$0xff]
        %v530 = vld [vmem:[%s442 + $0x30] sm:$0xff]
        %v531 = vld [vmem:[%s442 + $0x38] sm:$0xff]
        %v532 = vld [vmem:[%s451] sm:$0xff]
        %v533 = vld [vmem:[%s451 + $0x8] sm:$0xff]
        %v534 = vld [vmem:[%s451 + $0x10] sm:$0xff]
        %v535 = vld [vmem:[%s451 + $0x18] sm:$0xff]
        %v536 = vld [vmem:[%s451 + $0x20] sm:$0xff]
        %v537 = vld [vmem:[%s451 + $0x28] sm:$0xff]
        %v538 = vld [vmem:[%s451 + $0x30] sm:$0xff]
        %v539 = vld [vmem:[%s451 + $0x38] sm:$0xff]
        %v540 = vcombine.low %v532, %v534
        %v541 = vcombine.high %v532, %v534
        %v543 = vunpack.c.l.s4 1983009808
        %v544 = vunpack.c.0.s8 %v543
        %v545 = vlaneseq
        %v546 = vshrl.u32 %v545, 7
        %v547 = vsub.s32 %v544, %v546
        %v548 = vrot.slane %v540, %v547
        %v550 = vunpack.c.l.s4 1983009808
        %v551 = vunpack.c.0.s8 %v550
        %v552 = vlaneseq
        %v553 = vshrl.u32 %v552, 7
        %v554 = vsub.s32 %v551, %v553
        %v555 = vrot.slane %v541, %v554
        %v556 = vcombine.low %v533, %v535
        %v557 = vcombine.high %v533, %v535
        %v559 = vunpack.c.l.s4 1983009808
        %v560 = vunpack.c.0.s8 %v559
        %v561 = vlaneseq
        %v562 = vshrl.u32 %v561, 7
        %v563 = vsub.s32 %v560, %v562
        %v564 = vrot.slane %v556, %v563
        %v566 = vunpack.c.l.s4 1983009808
        %v567 = vunpack.c.0.s8 %v566
        %v568 = vlaneseq
        %v569 = vshrl.u32 %v568, 7
        %v570 = vsub.s32 %v567, %v569
        %v571 = vrot.slane %v557, %v570
        %v572 = vcombine.low %v536, %v538
        %v573 = vcombine.high %v536, %v538
        %v575 = vunpack.c.l.s4 1983009808
        %v576 = vunpack.c.0.s8 %v575
        %v577 = vlaneseq
        %v578 = vshrl.u32 %v577, 7
        %v579 = vsub.s32 %v576, %v578
        %v580 = vrot.slane %v572, %v579
        %v582 = vunpack.c.l.s4 1983009808
        %v583 = vunpack.c.0.s8 %v582
        %v584 = vlaneseq
        %v585 = vshrl.u32 %v584, 7
        %v586 = vsub.s32 %v583, %v585
        %v587 = vrot.slane %v573, %v586
        %v588 = vcombine.low %v537, %v539
        %v589 = vcombine.high %v537, %v539
        %v591 = vunpack.c.l.s4 1983009808
        %v592 = vunpack.c.0.s8 %v591
        %v593 = vlaneseq
        %v594 = vshrl.u32 %v593, 7
        %v595 = vsub.s32 %v592, %v594
        %v596 = vrot.slane %v588, %v595
        %v598 = vunpack.c.l.s4 1983009808
        %v599 = vunpack.c.0.s8 %v598
        %v600 = vlaneseq
        %v601 = vshrl.u32 %v600, 7
        %v602 = vsub.s32 %v599, %v601
        %v603 = vrot.slane %v589, %v602
        %v604 = vcombine.low %v548, %v564
        %v605 = vcombine.high %v548, %v564
        %v607 = vunpack.c.l.s4 1934713408
        %v608 = vunpack.c.0.s8 %v607
        %v609 = vlaneseq
        %v610 = vshrl.u32 %v609, 7
        %v611 = vsub.s32 %v608, %v610
        %v612 = vrot.slane %v604, %v611
        %v614 = vunpack.c.l.s4 1934713408
        %v615 = vunpack.c.0.s8 %v614
        %v616 = vlaneseq
        %v617 = vshrl.u32 %v616, 7
        %v618 = vsub.s32 %v615, %v617
        %v619 = vrot.slane %v605, %v618
        %v620 = vcombine.low %v555, %v571
        %v621 = vcombine.high %v555, %v571
        %v623 = vunpack.c.l.s4 1934713408
        %v624 = vunpack.c.0.s8 %v623
        %v625 = vlaneseq
        %v626 = vshrl.u32 %v625, 7
        %v627 = vsub.s32 %v624, %v626
        %v628 = vrot.slane %v620, %v627
        %v630 = vunpack.c.l.s4 1934713408
        %v631 = vunpack.c.0.s8 %v630
        %v632 = vlaneseq
        %v633 = vshrl.u32 %v632, 7
        %v634 = vsub.s32 %v631, %v633
        %v635 = vrot.slane %v621, %v634
        %v636 = vcombine.low %v580, %v596
        %v637 = vcombine.high %v580, %v596
        %v639 = vunpack.c.l.s4 1934713408
        %v640 = vunpack.c.0.s8 %v639
        %v641 = vlaneseq
        %v642 = vshrl.u32 %v641, 7
        %v643 = vsub.s32 %v640, %v642
        %v644 = vrot.slane %v636, %v643
        %v646 = vunpack.c.l.s4 1934713408
        %v647 = vunpack.c.0.s8 %v646
        %v648 = vlaneseq
        %v649 = vshrl.u32 %v648, 7
        %v650 = vsub.s32 %v647, %v649
        %v651 = vrot.slane %v637, %v650
        %v652 = vcombine.low %v587, %v603
        %v653 = vcombine.high %v587, %v603
        %v655 = vunpack.c.l.s4 1934713408
        %v656 = vunpack.c.0.s8 %v655
        %v657 = vlaneseq
        %v658 = vshrl.u32 %v657, 7
        %v659 = vsub.s32 %v656, %v658
        %v660 = vrot.slane %v652, %v659
        %v662 = vunpack.c.l.s4 1934713408
        %v663 = vunpack.c.0.s8 %v662
        %v664 = vlaneseq
        %v665 = vshrl.u32 %v664, 7
        %v666 = vsub.s32 %v663, %v665
        %v667 = vrot.slane %v653, %v666
        %v668 = vcombine.low %v612, %v644
        %v669 = vcombine.high %v612, %v644
        %v670 = vcombine.low %v619, %v651
        %v671 = vcombine.high %v619, %v651
        %v672 = vcombine.low %v628, %v660
        %v673 = vcombine.high %v628, %v660
        %v674 = vcombine.low %v635, %v667
        %v675 = vcombine.high %v635, %v667
        %v676 = vld [vmem:[#allocation10] sm:$0xff]
        %v677 = vld [vmem:[#allocation10 + $0x8] sm:$0xff]
        %v678 = vld [vmem:[#allocation10 + $0x10] sm:$0xff]
        %v679 = vld [vmem:[#allocation10 + $0x18] sm:$0xff]
        %v680 = vld [vmem:[#allocation11] sm:$0x1]
        %v682 = vlaneseq
        %v683 = vshrl.u32 %v682, 7
        %v684 = vsub.s32 0, %v683
        %v685 = vrot.slane %v680, %v684
        %vm687 = vcmask 261120
        %v689 = vsel %vm687, %v524, 0
        %v692 = vsel %vm687, %v525, 0
        %v695 = vsel %vm687, %v526, 0
        %v698 = vsel %vm687, %v527, 0
        %v701 = vsel %vm687, %v528, 0
        %v704 = vsel %vm687, %v529, 0
        %v707 = vsel %vm687, %v530, 0
        %v710 = vsel %vm687, %v531, 0
        %712 = vmatprep.subr.mxu0 0.0
        %713 = vmatpush1.msra.mxu0 %v676
        %714 = vmatprep.subr.mxu0 0.0
        %715 = vmatpush1.msra.mxu0 %v677
        %716 = vmatprep.subr.mxu0 0.0
        %717 = vmatpush1.msra.mxu0 %v678
        %718 = vmatprep.subr.mxu0 0.0
        %719 = vmatpush1.msra.mxu0 %v679
        %720 = vmatprep.subr.mxu0 0.0
        %721 = vmatpush1.msra.mxu0 0.0
        %722 = vmatprep.subr.mxu0 0.0
        %723 = vmatpush1.msra.mxu0 0.0
        %724 = vmatprep.subr.mxu0 0.0
        %725 = vmatpush1.msra.mxu0 0.0
        %726 = vmatprep.subr.mxu0 0.0
        %727 = vmatpush1.msra.mxu0 0.0
        %728 = vmatprep.subr.mxu0 0.0
        %729 = vmatpush1.msra.mxu0 0.0
        %730 = vmatprep.subr.mxu0 0.0
        %731 = vmatpush1.msra.mxu0 0.0
        %732 = vmatprep.subr.mxu0 0.0
        %733 = vmatpush1.msra.mxu0 0.0
        %734 = vmatprep.subr.mxu0 0.0
        %735 = vmatpush1.msra.mxu0 0.0
        %736 = vmatprep.subr.mxu0 0.0
        %737 = vmatpush1.msra.mxu0 0.0
        %738 = vmatprep.subr.mxu0 0.0
        %739 = vmatpush1.msra.mxu0 0.0
        %740 = vmatprep.subr.mxu0 0.0
        %741 = vmatpush1.msra.mxu0 0.0
        %742 = vmatprep.subr.mxu0 0.0
        %743 = vmatpush1.msra.mxu0 0.0
        %744 = vmatprep.subr.mxu0 0.0
        %745 = vmatpush1.msra.mxu0 0.0
        %746 = vmatprep.subr.mxu0 0.0
        %747 = vmatpush1.msra.mxu0 0.0
        %748 = vmatprep.subr.mxu0 0.0
        %749 = vmatpush1.msra.mxu0 0.0
        %750 = vmatprep.subr.mxu0 0.0
        %751 = vmatpush1.msra.mxu0 0.0
        %752 = vmatprep.subr.mxu0 0.0
        %753 = vmatpush1.msra.mxu0 0.0
        %754 = vmatprep.subr.mxu0 0.0
        %755 = vmatpush1.msra.mxu0 0.0
        %756 = vmatprep.subr.mxu0 0.0
        %757 = vmatpush1.msra.mxu0 0.0
        %758 = vmatprep.subr.mxu0 0.0
        %759 = vmatpush1.msra.mxu0 0.0
        %760 = vmatprep.subr.mxu0 0.0
        %761 = vmatpush1.msra.mxu0 0.0
        %762 = vmatprep.subr.mxu0 0.0
        %763 = vmatpush1.msra.mxu0 0.0
        %764 = vmatprep.subr.mxu0 0.0
        %765 = vmatpush1.msra.mxu0 0.0
        %766 = vmatprep.subr.mxu0 0.0
        %767 = vmatpush1.msra.mxu0 0.0
        %768 = vmatprep.subr.mxu0 0.0
        %769 = vmatpush1.msra.mxu0 0.0
        %770 = vmatprep.subr.mxu0 0.0
        %771 = vmatpush1.msra.mxu0 0.0
        %772 = vmatprep.subr.mxu0 0.0
        %773 = vmatpush1.msra.mxu0 0.0
        %774 = vmatprep.subr.mxu0 0.0
        %775 = vmatpush1.msra.mxu0 0.0
        %776 = vmatprep.mubr.f32.mxu0 0.0
        %777 = vmatmul.mubr.f32.gmra.mrb[0].mxu0 %v689
        %v778 = vpop.f32.mrb[0].mxu0
        %v779 = vadd.f32 %v685, %v778
        %v780 = vpop.f32.mrb[0].mxu0
        %781 = vmatprep.mubr.f32.mxu0 0.0
        %782 = vmatmul.mubr.f32.gmra.mrb[0].mxu0 %v692
        %v783 = vpop.f32.mrb[0].mxu0
        %v784 = vadd.f32 %v685, %v783
        %v785 = vpop.f32.mrb[0].mxu0
        %786 = vmatprep.mubr.f32.mxu0 0.0
        %787 = vmatmul.mubr.f32.gmra.mrb[0].mxu0 %v695
        %v788 = vpop.f32.mrb[0].mxu0
        %v789 = vadd.f32 %v685, %v788
        %v790 = vpop.f32.mrb[0].mxu0
        %791 = vmatprep.mubr.f32.mxu0 0.0
        %792 = vmatmul.mubr.f32.gmra.mrb[0].mxu0 %v698
        %v793 = vpop.f32.mrb[0].mxu0
        %v794 = vadd.f32 %v685, %v793
        %v795 = vpop.f32.mrb[0].mxu0
        %796 = vmatprep.mubr.f32.mxu0 0.0
        %797 = vmatmul.mubr.f32.gmra.mrb[0].mxu0 %v701
        %v798 = vpop.f32.mrb[0].mxu0
        %v799 = vadd.f32 %v685, %v798
        %v800 = vpop.f32.mrb[0].mxu0
        %801 = vmatprep.mubr.f32.mxu0 0.0
        %802 = vmatmul.mubr.f32.gmra.mrb[0].mxu0 %v704
        %v803 = vpop.f32.mrb[0].mxu0
        %v804 = vadd.f32 %v685, %v803
        %v805 = vpop.f32.mrb[0].mxu0
        %806 = vmatprep.mubr.f32.mxu0 0.0
        %807 = vmatmul.mubr.f32.gmra.mrb[0].mxu0 %v707
        %v808 = vpop.f32.mrb[0].mxu0
        %v809 = vadd.f32 %v685, %v808
        %v810 = vpop.f32.mrb[0].mxu0
        %811 = vmatprep.mubr.f32.mxu0 0.0
        %812 = vmatmul.mubr.f32.gmra.mrb[0].mxu0 %v710
        %v813 = vpop.f32.mrb[0].mxu0
        %v814 = vadd.f32 %v685, %v813
        %v815 = vpop.f32.mrb[0].mxu0
        %816 = vdwg.mxu0
        %817 = vxpose.xlu0.b32.start [1/16] %v779, 128
        %818 = vxpose.xlu0.b32.cont [2/16] 0.0, 128
        %819 = vxpose.xlu0.b32.cont [3/16] 0.0, 128
        %820 = vxpose.xlu0.b32.cont [4/16] 0.0, 128
        %821 = vxpose.xlu0.b32.cont [5/16] 0.0, 128
        %822 = vxpose.xlu0.b32.cont [6/16] 0.0, 128
        %823 = vxpose.xlu0.b32.cont [7/16] 0.0, 128
        %824 = vxpose.xlu0.b32.cont [8/16] 0.0, 128
        %825 = vxpose.xlu0.b32.cont [9/16] 0.0, 128
        %826 = vxpose.xlu0.b32.cont [10/16] 0.0, 128
        %827 = vxpose.xlu0.b32.cont [11/16] 0.0, 128
        %828 = vxpose.xlu0.b32.cont [12/16] 0.0, 128
        %829 = vxpose.xlu0.b32.cont [13/16] 0.0, 128
        %830 = vxpose.xlu0.b32.cont [14/16] 0.0, 128
        %831 = vxpose.xlu0.b32.cont [15/16] 0.0, 128
        %832 = vxpose.xlu0.b32.end [16/16] 0.0, 128
        %v833 = vpop.trf.xlu0
        %v834 = vpop.trf.xlu0
        %v835 = vpop.trf.xlu0
        %v836 = vpop.trf.xlu0
        %v837 = vpop.trf.xlu0
        %v838 = vpop.trf.xlu0
        %v839 = vpop.trf.xlu0
        %v840 = vpop.trf.xlu0
        %v841 = vpop.trf.xlu0
        %v842 = vpop.trf.xlu0
        %v843 = vpop.trf.xlu0
        %v844 = vpop.trf.xlu0
        %v845 = vpop.trf.xlu0
        %v846 = vpop.trf.xlu0
        %v847 = vpop.trf.xlu0
        %v848 = vpop.trf.xlu0
        %849 = vxpose.xlu0.b32.start [1/16] %v784, 128
        %850 = vxpose.xlu0.b32.cont [2/16] 0.0, 128
        %851 = vxpose.xlu0.b32.cont [3/16] 0.0, 128
        %852 = vxpose.xlu0.b32.cont [4/16] 0.0, 128
        %853 = vxpose.xlu0.b32.cont [5/16] 0.0, 128
        %854 = vxpose.xlu0.b32.cont [6/16] 0.0, 128
        %855 = vxpose.xlu0.b32.cont [7/16] 0.0, 128
        %856 = vxpose.xlu0.b32.cont [8/16] 0.0, 128
        %857 = vxpose.xlu0.b32.cont [9/16] 0.0, 128
        %858 = vxpose.xlu0.b32.cont [10/16] 0.0, 128
        %859 = vxpose.xlu0.b32.cont [11/16] 0.0, 128
        %860 = vxpose.xlu0.b32.cont [12/16] 0.0, 128
        %861 = vxpose.xlu0.b32.cont [13/16] 0.0, 128
        %862 = vxpose.xlu0.b32.cont [14/16] 0.0, 128
        %863 = vxpose.xlu0.b32.cont [15/16] 0.0, 128
        %864 = vxpose.xlu0.b32.end [16/16] 0.0, 128
        %v865 = vpop.trf.xlu0
        %v866 = vpop.trf.xlu0
        %v867 = vpop.trf.xlu0
        %v868 = vpop.trf.xlu0
        %v869 = vpop.trf.xlu0
        %v870 = vpop.trf.xlu0
        %v871 = vpop.trf.xlu0
        %v872 = vpop.trf.xlu0
        %v873 = vpop.trf.xlu0
        %v874 = vpop.trf.xlu0
        %v875 = vpop.trf.xlu0
        %v876 = vpop.trf.xlu0
        %v877 = vpop.trf.xlu0
        %v878 = vpop.trf.xlu0
        %v879 = vpop.trf.xlu0
        %v880 = vpop.trf.xlu0
        %881 = vxpose.xlu0.b32.start [1/16] %v789, 128
        %882 = vxpose.xlu0.b32.cont [2/16] 0.0, 128
        %883 = vxpose.xlu0.b32.cont [3/16] 0.0, 128
        %884 = vxpose.xlu0.b32.cont [4/16] 0.0, 128
        %885 = vxpose.xlu0.b32.cont [5/16] 0.0, 128
        %886 = vxpose.xlu0.b32.cont [6/16] 0.0, 128
        %887 = vxpose.xlu0.b32.cont [7/16] 0.0, 128
        %888 = vxpose.xlu0.b32.cont [8/16] 0.0, 128
        %889 = vxpose.xlu0.b32.cont [9/16] 0.0, 128
        %890 = vxpose.xlu0.b32.cont [10/16] 0.0, 128
        %891 = vxpose.xlu0.b32.cont [11/16] 0.0, 128
        %892 = vxpose.xlu0.b32.cont [12/16] 0.0, 128
        %893 = vxpose.xlu0.b32.cont [13/16] 0.0, 128
        %894 = vxpose.xlu0.b32.cont [14/16] 0.0, 128
        %895 = vxpose.xlu0.b32.cont [15/16] 0.0, 128
        %896 = vxpose.xlu0.b32.end [16/16] 0.0, 128
        %v897 = vpop.trf.xlu0
        %v898 = vpop.trf.xlu0
        %v899 = vpop.trf.xlu0
        %v900 = vpop.trf.xlu0
        %v901 = vpop.trf.xlu0
        %v902 = vpop.trf.xlu0
        %v903 = vpop.trf.xlu0
        %v904 = vpop.trf.xlu0
        %v905 = vpop.trf.xlu0
        %v906 = vpop.trf.xlu0
        %v907 = vpop.trf.xlu0
        %v908 = vpop.trf.xlu0
        %v909 = vpop.trf.xlu0
        %v910 = vpop.trf.xlu0
        %v911 = vpop.trf.xlu0
        %v912 = vpop.trf.xlu0
        %913 = vxpose.xlu0.b32.start [1/16] %v794, 128
        %914 = vxpose.xlu0.b32.cont [2/16] 0.0, 128
        %915 = vxpose.xlu0.b32.cont [3/16] 0.0, 128
        %916 = vxpose.xlu0.b32.cont [4/16] 0.0, 128
        %917 = vxpose.xlu0.b32.cont [5/16] 0.0, 128
        %918 = vxpose.xlu0.b32.cont [6/16] 0.0, 128
        %919 = vxpose.xlu0.b32.cont [7/16] 0.0, 128
        %920 = vxpose.xlu0.b32.cont [8/16] 0.0, 128
        %921 = vxpose.xlu0.b32.cont [9/16] 0.0, 128
        %922 = vxpose.xlu0.b32.cont [10/16] 0.0, 128
        %923 = vxpose.xlu0.b32.cont [11/16] 0.0, 128
        %924 = vxpose.xlu0.b32.cont [12/16] 0.0, 128
        %925 = vxpose.xlu0.b32.cont [13/16] 0.0, 128
        %926 = vxpose.xlu0.b32.cont [14/16] 0.0, 128
        %927 = vxpose.xlu0.b32.cont [15/16] 0.0, 128
        %928 = vxpose.xlu0.b32.end [16/16] 0.0, 128
        %v929 = vpop.trf.xlu0
        %v930 = vpop.trf.xlu0
        %v931 = vpop.trf.xlu0
        %v932 = vpop.trf.xlu0
        %v933 = vpop.trf.xlu0
        %v934 = vpop.trf.xlu0
        %v935 = vpop.trf.xlu0
        %v936 = vpop.trf.xlu0
        %v937 = vpop.trf.xlu0
        %v938 = vpop.trf.xlu0
        %v939 = vpop.trf.xlu0
        %v940 = vpop.trf.xlu0
        %v941 = vpop.trf.xlu0
        %v942 = vpop.trf.xlu0
        %v943 = vpop.trf.xlu0
        %v944 = vpop.trf.xlu0
        %945 = vxpose.xlu0.b32.start [1/16] %v799, 128
        %946 = vxpose.xlu0.b32.cont [2/16] 0.0, 128
        %947 = vxpose.xlu0.b32.cont [3/16] 0.0, 128
        %948 = vxpose.xlu0.b32.cont [4/16] 0.0, 128
        %949 = vxpose.xlu0.b32.cont [5/16] 0.0, 128
        %950 = vxpose.xlu0.b32.cont [6/16] 0.0, 128
        %951 = vxpose.xlu0.b32.cont [7/16] 0.0, 128
        %952 = vxpose.xlu0.b32.cont [8/16] 0.0, 128
        %953 = vxpose.xlu0.b32.cont [9/16] 0.0, 128
        %954 = vxpose.xlu0.b32.cont [10/16] 0.0, 128
        %955 = vxpose.xlu0.b32.cont [11/16] 0.0, 128
        %956 = vxpose.xlu0.b32.cont [12/16] 0.0, 128
        %957 = vxpose.xlu0.b32.cont [13/16] 0.0, 128
        %958 = vxpose.xlu0.b32.cont [14/16] 0.0, 128
        %959 = vxpose.xlu0.b32.cont [15/16] 0.0, 128
        %960 = vxpose.xlu0.b32.end [16/16] 0.0, 128
        %v961 = vpop.trf.xlu0
        %v962 = vpop.trf.xlu0
        %v963 = vpop.trf.xlu0
        %v964 = vpop.trf.xlu0
        %v965 = vpop.trf.xlu0
        %v966 = vpop.trf.xlu0
        %v967 = vpop.trf.xlu0
        %v968 = vpop.trf.xlu0
        %v969 = vpop.trf.xlu0
        %v970 = vpop.trf.xlu0
        %v971 = vpop.trf.xlu0
        %v972 = vpop.trf.xlu0
        %v973 = vpop.trf.xlu0
        %v974 = vpop.trf.xlu0
        %v975 = vpop.trf.xlu0
        %v976 = vpop.trf.xlu0
        %977 = vxpose.xlu0.b32.start [1/16] %v804, 128
        %978 = vxpose.xlu0.b32.cont [2/16] 0.0, 128
        %979 = vxpose.xlu0.b32.cont [3/16] 0.0, 128
        %980 = vxpose.xlu0.b32.cont [4/16] 0.0, 128
        %981 = vxpose.xlu0.b32.cont [5/16] 0.0, 128
        %982 = vxpose.xlu0.b32.cont [6/16] 0.0, 128
        %983 = vxpose.xlu0.b32.cont [7/16] 0.0, 128
        %984 = vxpose.xlu0.b32.cont [8/16] 0.0, 128
        %985 = vxpose.xlu0.b32.cont [9/16] 0.0, 128
        %986 = vxpose.xlu0.b32.cont [10/16] 0.0, 128
        %987 = vxpose.xlu0.b32.cont [11/16] 0.0, 128
        %988 = vxpose.xlu0.b32.cont [12/16] 0.0, 128
        %989 = vxpose.xlu0.b32.cont [13/16] 0.0, 128
        %990 = vxpose.xlu0.b32.cont [14/16] 0.0, 128
        %991 = vxpose.xlu0.b32.cont [15/16] 0.0, 128
        %992 = vxpose.xlu0.b32.end [16/16] 0.0, 128
        %v993 = vpop.trf.xlu0
        %v994 = vpop.trf.xlu0
        %v995 = vpop.trf.xlu0
        %v996 = vpop.trf.xlu0
        %v997 = vpop.trf.xlu0
        %v998 = vpop.trf.xlu0
        %v999 = vpop.trf.xlu0
        %v1000 = vpop.trf.xlu0
        %v1001 = vpop.trf.xlu0
        %v1002 = vpop.trf.xlu0
        %v1003 = vpop.trf.xlu0
        %v1004 = vpop.trf.xlu0
        %v1005 = vpop.trf.xlu0
        %v1006 = vpop.trf.xlu0
        %v1007 = vpop.trf.xlu0
        %v1008 = vpop.trf.xlu0
        %1009 = vxpose.xlu0.b32.start [1/16] %v809, 128
        %1010 = vxpose.xlu0.b32.cont [2/16] 0.0, 128
        %1011 = vxpose.xlu0.b32.cont [3/16] 0.0, 128
        %1012 = vxpose.xlu0.b32.cont [4/16] 0.0, 128
        %1013 = vxpose.xlu0.b32.cont [5/16] 0.0, 128
        %1014 = vxpose.xlu0.b32.cont [6/16] 0.0, 128
        %1015 = vxpose.xlu0.b32.cont [7/16] 0.0, 128
        %1016 = vxpose.xlu0.b32.cont [8/16] 0.0, 128
        %1017 = vxpose.xlu0.b32.cont [9/16] 0.0, 128
        %1018 = vxpose.xlu0.b32.cont [10/16] 0.0, 128
        %1019 = vxpose.xlu0.b32.cont [11/16] 0.0, 128
        %1020 = vxpose.xlu0.b32.cont [12/16] 0.0, 128
        %1021 = vxpose.xlu0.b32.cont [13/16] 0.0, 128
        %1022 = vxpose.xlu0.b32.cont [14/16] 0.0, 128
        %1023 = vxpose.xlu0.b32.cont [15/16] 0.0, 128
        %1024 = vxpose.xlu0.b32.end [16/16] 0.0, 128
        %v1025 = vpop.trf.xlu0
        %v1026 = vpop.trf.xlu0
        %v1027 = vpop.trf.xlu0
        %v1028 = vpop.trf.xlu0
        %v1029 = vpop.trf.xlu0
        %v1030 = vpop.trf.xlu0
        %v1031 = vpop.trf.xlu0
        %v1032 = vpop.trf.xlu0
        %v1033 = vpop.trf.xlu0
        %v1034 = vpop.trf.xlu0
        %v1035 = vpop.trf.xlu0
        %v1036 = vpop.trf.xlu0
        %v1037 = vpop.trf.xlu0
        %v1038 = vpop.trf.xlu0
        %v1039 = vpop.trf.xlu0
        %v1040 = vpop.trf.xlu0
        %1041 = vxpose.xlu0.b32.start [1/16] %v814, 128
        %1042 = vxpose.xlu0.b32.cont [2/16] 0.0, 128
        %1043 = vxpose.xlu0.b32.cont [3/16] 0.0, 128
        %1044 = vxpose.xlu0.b32.cont [4/16] 0.0, 128
        %1045 = vxpose.xlu0.b32.cont [5/16] 0.0, 128
        %1046 = vxpose.xlu0.b32.cont [6/16] 0.0, 128
        %1047 = vxpose.xlu0.b32.cont [7/16] 0.0, 128
        %1048 = vxpose.xlu0.b32.cont [8/16] 0.0, 128
        %1049 = vxpose.xlu0.b32.cont [9/16] 0.0, 128
        %1050 = vxpose.xlu0.b32.cont [10/16] 0.0, 128
        %1051 = vxpose.xlu0.b32.cont [11/16] 0.0, 128
        %1052 = vxpose.xlu0.b32.cont [12/16] 0.0, 128
        %1053 = vxpose.xlu0.b32.cont [13/16] 0.0, 128
        %1054 = vxpose.xlu0.b32.cont [14/16] 0.0, 128
        %1055 = vxpose.xlu0.b32.cont [15/16] 0.0, 128
        %1056 = vxpose.xlu0.b32.end [16/16] 0.0, 128
        %v1057 = vpop.trf.xlu0
        %v1058 = vpop.trf.xlu0
        %v1059 = vpop.trf.xlu0
        %v1060 = vpop.trf.xlu0
        %v1061 = vpop.trf.xlu0
        %v1062 = vpop.trf.xlu0
        %v1063 = vpop.trf.xlu0
        %v1064 = vpop.trf.xlu0
        %v1065 = vpop.trf.xlu0
        %v1066 = vpop.trf.xlu0
        %v1067 = vpop.trf.xlu0
        %v1068 = vpop.trf.xlu0
        %v1069 = vpop.trf.xlu0
        %v1070 = vpop.trf.xlu0
        %v1071 = vpop.trf.xlu0
        %v1072 = vpop.trf.xlu0
        %v1073 = vcombine.low %v833, %v897
        %v1074 = vcombine.high %v833, %v897
        %v1076 = vunpack.c.l.s4 1983009808
        %v1077 = vunpack.c.0.s8 %v1076
        %v1078 = vlaneseq
        %v1079 = vshrl.u32 %v1078, 7
        %v1080 = vsub.s32 %v1077, %v1079
        %v1081 = vrot.slane %v1073, %v1080
        %v1083 = vunpack.c.l.s4 1983009808
        %v1084 = vunpack.c.0.s8 %v1083
        %v1085 = vlaneseq
        %v1086 = vshrl.u32 %v1085, 7
        %v1087 = vsub.s32 %v1084, %v1086
        %v1088 = vrot.slane %v1074, %v1087
        %v1089 = vcombine.low %v865, %v929
        %v1090 = vcombine.high %v865, %v929
        %v1092 = vunpack.c.l.s4 1983009808
        %v1093 = vunpack.c.0.s8 %v1092
        %v1094 = vlaneseq
        %v1095 = vshrl.u32 %v1094, 7
        %v1096 = vsub.s32 %v1093, %v1095
        %v1097 = vrot.slane %v1089, %v1096
        %v1099 = vunpack.c.l.s4 1983009808
        %v1100 = vunpack.c.0.s8 %v1099
        %v1101 = vlaneseq
        %v1102 = vshrl.u32 %v1101, 7
        %v1103 = vsub.s32 %v1100, %v1102
        %v1104 = vrot.slane %v1090, %v1103
        %v1105 = vcombine.low %v961, %v1025
        %v1106 = vcombine.high %v961, %v1025
        %v1108 = vunpack.c.l.s4 1983009808
        %v1109 = vunpack.c.0.s8 %v1108
        %v1110 = vlaneseq
        %v1111 = vshrl.u32 %v1110, 7
        %v1112 = vsub.s32 %v1109, %v1111
        %v1113 = vrot.slane %v1105, %v1112
        %v1115 = vunpack.c.l.s4 1983009808
        %v1116 = vunpack.c.0.s8 %v1115
        %v1117 = vlaneseq
        %v1118 = vshrl.u32 %v1117, 7
        %v1119 = vsub.s32 %v1116, %v1118
        %v1120 = vrot.slane %v1106, %v1119
        %v1121 = vcombine.low %v993, %v1057
        %v1122 = vcombine.high %v993, %v1057
        %v1124 = vunpack.c.l.s4 1983009808
        %v1125 = vunpack.c.0.s8 %v1124
        %v1126 = vlaneseq
        %v1127 = vshrl.u32 %v1126, 7
        %v1128 = vsub.s32 %v1125, %v1127
        %v1129 = vrot.slane %v1121, %v1128
        %v1131 = vunpack.c.l.s4 1983009808
        %v1132 = vunpack.c.0.s8 %v1131
        %v1133 = vlaneseq
        %v1134 = vshrl.u32 %v1133, 7
        %v1135 = vsub.s32 %v1132, %v1134
        %v1136 = vrot.slane %v1122, %v1135
        %v1137 = vcombine.low %v1081, %v1097
        %v1138 = vcombine.high %v1081, %v1097
        %v1140 = vunpack.c.l.s4 1934713408
        %v1141 = vunpack.c.0.s8 %v1140
        %v1142 = vlaneseq
        %v1143 = vshrl.u32 %v1142, 7
        %v1144 = vsub.s32 %v1141, %v1143
        %v1145 = vrot.slane %v1137, %v1144
        %v1147 = vunpack.c.l.s4 1934713408
        %v1148 = vunpack.c.0.s8 %v1147
        %v1149 = vlaneseq
        %v1150 = vshrl.u32 %v1149, 7
        %v1151 = vsub.s32 %v1148, %v1150
        %v1152 = vrot.slane %v1138, %v1151
        %v1153 = vcombine.low %v1088, %v1104
        %v1154 = vcombine.high %v1088, %v1104
        %v1156 = vunpack.c.l.s4 1934713408
        %v1157 = vunpack.c.0.s8 %v1156
        %v1158 = vlaneseq
        %v1159 = vshrl.u32 %v1158, 7
        %v1160 = vsub.s32 %v1157, %v1159
        %v1161 = vrot.slane %v1153, %v1160
        %v1163 = vunpack.c.l.s4 1934713408
        %v1164 = vunpack.c.0.s8 %v1163
        %v1165 = vlaneseq
        %v1166 = vshrl.u32 %v1165, 7
        %v1167 = vsub.s32 %v1164, %v1166
        %v1168 = vrot.slane %v1154, %v1167
        %v1169 = vcombine.low %v1113, %v1129
        %v1170 = vcombine.high %v1113, %v1129
        %v1172 = vunpack.c.l.s4 1934713408
        %v1173 = vunpack.c.0.s8 %v1172
        %v1174 = vlaneseq
        %v1175 = vshrl.u32 %v1174, 7
        %v1176 = vsub.s32 %v1173, %v1175
        %v1177 = vrot.slane %v1169, %v1176
        %v1179 = vunpack.c.l.s4 1934713408
        %v1180 = vunpack.c.0.s8 %v1179
        %v1181 = vlaneseq
        %v1182 = vshrl.u32 %v1181, 7
        %v1183 = vsub.s32 %v1180, %v1182
        %v1184 = vrot.slane %v1170, %v1183
        %v1185 = vcombine.low %v1120, %v1136
        %v1186 = vcombine.high %v1120, %v1136
        %v1188 = vunpack.c.l.s4 1934713408
        %v1189 = vunpack.c.0.s8 %v1188
        %v1190 = vlaneseq
        %v1191 = vshrl.u32 %v1190, 7
        %v1192 = vsub.s32 %v1189, %v1191
        %v1193 = vrot.slane %v1185, %v1192
        %v1195 = vunpack.c.l.s4 1934713408
        %v1196 = vunpack.c.0.s8 %v1195
        %v1197 = vlaneseq
        %v1198 = vshrl.u32 %v1197, 7
        %v1199 = vsub.s32 %v1196, %v1198
        %v1200 = vrot.slane %v1186, %v1199
        %v1201 = vcombine.low %v1145, %v1177
        %v1202 = vcombine.high %v1145, %v1177
        %v1203 = vcombine.low %v1152, %v1184
        %v1204 = vcombine.high %v1152, %v1184
        %v1205 = vcombine.low %v1161, %v1193
        %v1206 = vcombine.high %v1161, %v1193
        %v1207 = vcombine.low %v1168, %v1200
        %v1208 = vcombine.high %v1168, %v1200
        %v1209 = vcombine.low %v834, %v898
        %v1210 = vcombine.high %v834, %v898
        %v1212 = vunpack.c.l.s4 1983009808
        %v1213 = vunpack.c.0.s8 %v1212
        %v1214 = vlaneseq
        %v1215 = vshrl.u32 %v1214, 7
        %v1216 = vsub.s32 %v1213, %v1215
        %v1217 = vrot.slane %v1209, %v1216
        %v1219 = vunpack.c.l.s4 1983009808
        %v1220 = vunpack.c.0.s8 %v1219
        %v1221 = vlaneseq
        %v1222 = vshrl.u32 %v1221, 7
        %v1223 = vsub.s32 %v1220, %v1222
        %v1224 = vrot.slane %v1210, %v1223
        %v1225 = vcombine.low %v866, %v930
        %v1226 = vcombine.high %v866, %v930
        %v1228 = vunpack.c.l.s4 1983009808
        %v1229 = vunpack.c.0.s8 %v1228
        %v1230 = vlaneseq
        %v1231 = vshrl.u32 %v1230, 7
        %v1232 = vsub.s32 %v1229, %v1231
        %v1233 = vrot.slane %v1225, %v1232
        %v1235 = vunpack.c.l.s4 1983009808
        %v1236 = vunpack.c.0.s8 %v1235
        %v1237 = vlaneseq
        %v1238 = vshrl.u32 %v1237, 7
        %v1239 = vsub.s32 %v1236, %v1238
        %v1240 = vrot.slane %v1226, %v1239
        %v1241 = vcombine.low %v962, %v1026
        %v1242 = vcombine.high %v962, %v1026
        %v1244 = vunpack.c.l.s4 1983009808
        %v1245 = vunpack.c.0.s8 %v1244
        %v1246 = vlaneseq
        %v1247 = vshrl.u32 %v1246, 7
        %v1248 = vsub.s32 %v1245, %v1247
        %v1249 = vrot.slane %v1241, %v1248
        %v1251 = vunpack.c.l.s4 1983009808
        %v1252 = vunpack.c.0.s8 %v1251
        %v1253 = vlaneseq
        %v1254 = vshrl.u32 %v1253, 7
        %v1255 = vsub.s32 %v1252, %v1254
        %v1256 = vrot.slane %v1242, %v1255
        %v1257 = vcombine.low %v994, %v1058
        %v1258 = vcombine.high %v994, %v1058
        %v1260 = vunpack.c.l.s4 1983009808
        %v1261 = vunpack.c.0.s8 %v1260
        %v1262 = vlaneseq
        %v1263 = vshrl.u32 %v1262, 7
        %v1264 = vsub.s32 %v1261, %v1263
        %v1265 = vrot.slane %v1257, %v1264
        %v1267 = vunpack.c.l.s4 1983009808
        %v1268 = vunpack.c.0.s8 %v1267
        %v1269 = vlaneseq
        %v1270 = vshrl.u32 %v1269, 7
        %v1271 = vsub.s32 %v1268, %v1270
        %v1272 = vrot.slane %v1258, %v1271
        %v1273 = vcombine.low %v1217, %v1233
        %v1274 = vcombine.high %v1217, %v1233
        %v1276 = vunpack.c.l.s4 1934713408
        %v1277 = vunpack.c.0.s8 %v1276
        %v1278 = vlaneseq
        %v1279 = vshrl.u32 %v1278, 7
        %v1280 = vsub.s32 %v1277, %v1279
        %v1281 = vrot.slane %v1273, %v1280
        %v1283 = vunpack.c.l.s4 1934713408
        %v1284 = vunpack.c.0.s8 %v1283
        %v1285 = vlaneseq
        %v1286 = vshrl.u32 %v1285, 7
        %v1287 = vsub.s32 %v1284, %v1286
        %v1288 = vrot.slane %v1274, %v1287
        %v1289 = vcombine.low %v1224, %v1240
        %v1290 = vcombine.high %v1224, %v1240
        %v1292 = vunpack.c.l.s4 1934713408
        %v1293 = vunpack.c.0.s8 %v1292
        %v1294 = vlaneseq
        %v1295 = vshrl.u32 %v1294, 7
        %v1296 = vsub.s32 %v1293, %v1295
        %v1297 = vrot.slane %v1289, %v1296
        %v1299 = vunpack.c.l.s4 1934713408
        %v1300 = vunpack.c.0.s8 %v1299
        %v1301 = vlaneseq
        %v1302 = vshrl.u32 %v1301, 7
        %v1303 = vsub.s32 %v1300, %v1302
        %v1304 = vrot.slane %v1290, %v1303
        %v1305 = vcombine.low %v1249, %v1265
        %v1306 = vcombine.high %v1249, %v1265
        %v1308 = vunpack.c.l.s4 1934713408
        %v1309 = vunpack.c.0.s8 %v1308
        %v1310 = vlaneseq
        %v1311 = vshrl.u32 %v1310, 7
        %v1312 = vsub.s32 %v1309, %v1311
        %v1313 = vrot.slane %v1305, %v1312
        %v1315 = vunpack.c.l.s4 1934713408
        %v1316 = vunpack.c.0.s8 %v1315
        %v1317 = vlaneseq
        %v1318 = vshrl.u32 %v1317, 7
        %v1319 = vsub.s32 %v1316, %v1318
        %v1320 = vrot.slane %v1306, %v1319
        %v1321 = vcombine.low %v1256, %v1272
        %v1322 = vcombine.high %v1256, %v1272
        %v1324 = vunpack.c.l.s4 1934713408
        %v1325 = vunpack.c.0.s8 %v1324
        %v1326 = vlaneseq
        %v1327 = vshrl.u32 %v1326, 7
        %v1328 = vsub.s32 %v1325, %v1327
        %v1329 = vrot.slane %v1321, %v1328
        %v1331 = vunpack.c.l.s4 1934713408
        %v1332 = vunpack.c.0.s8 %v1331
        %v1333 = vlaneseq
        %v1334 = vshrl.u32 %v1333, 7
        %v1335 = vsub.s32 %v1332, %v1334
        %v1336 = vrot.slane %v1322, %v1335
        %v1337 = vcombine.low %v1281, %v1313
        %v1338 = vcombine.high %v1281, %v1313
        %v1339 = vcombine.low %v1288, %v1320
        %v1340 = vcombine.high %v1288, %v1320
        %v1341 = vcombine.low %v1297, %v1329
        %v1342 = vcombine.high %v1297, %v1329
        %v1343 = vcombine.low %v1304, %v1336
        %v1344 = vcombine.high %v1304, %v1336
        %v1345 = vcombine.low %v835, %v899
        %v1346 = vcombine.high %v835, %v899
        %v1348 = vunpack.c.l.s4 1983009808
        %v1349 = vunpack.c.0.s8 %v1348
        %v1350 = vlaneseq
        %v1351 = vshrl.u32 %v1350, 7
        %v1352 = vsub.s32 %v1349, %v1351
        %v1353 = vrot.slane %v1345, %v1352
        %v1355 = vunpack.c.l.s4 1983009808
        %v1356 = vunpack.c.0.s8 %v1355
        %v1357 = vlaneseq
        %v1358 = vshrl.u32 %v1357, 7
        %v1359 = vsub.s32 %v1356, %v1358
        %v1360 = vrot.slane %v1346, %v1359
        %v1361 = vcombine.low %v867, %v931
        %v1362 = vcombine.high %v867, %v931
        %v1364 = vunpack.c.l.s4 1983009808
        %v1365 = vunpack.c.0.s8 %v1364
        %v1366 = vlaneseq
        %v1367 = vshrl.u32 %v1366, 7
        %v1368 = vsub.s32 %v1365, %v1367
        %v1369 = vrot.slane %v1361, %v1368
        %v1371 = vunpack.c.l.s4 1983009808
        %v1372 = vunpack.c.0.s8 %v1371
        %v1373 = vlaneseq
        %v1374 = vshrl.u32 %v1373, 7
        %v1375 = vsub.s32 %v1372, %v1374
        %v1376 = vrot.slane %v1362, %v1375
        %v1377 = vcombine.low %v963, %v1027
        %v1378 = vcombine.high %v963, %v1027
        %v1380 = vunpack.c.l.s4 1983009808
        %v1381 = vunpack.c.0.s8 %v1380
        %v1382 = vlaneseq
        %v1383 = vshrl.u32 %v1382, 7
        %v1384 = vsub.s32 %v1381, %v1383
        %v1385 = vrot.slane %v1377, %v1384
        %v1387 = vunpack.c.l.s4 1983009808
        %v1388 = vunpack.c.0.s8 %v1387
        %v1389 = vlaneseq
        %v1390 = vshrl.u32 %v1389, 7
        %v1391 = vsub.s32 %v1388, %v1390
        %v1392 = vrot.slane %v1378, %v1391
        %v1393 = vcombine.low %v995, %v1059
        %v1394 = vcombine.high %v995, %v1059
        %v1396 = vunpack.c.l.s4 1983009808
        %v1397 = vunpack.c.0.s8 %v1396
        %v1398 = vlaneseq
        %v1399 = vshrl.u32 %v1398, 7
        %v1400 = vsub.s32 %v1397, %v1399
        %v1401 = vrot.slane %v1393, %v1400
        %v1403 = vunpack.c.l.s4 1983009808
        %v1404 = vunpack.c.0.s8 %v1403
        %v1405 = vlaneseq
        %v1406 = vshrl.u32 %v1405, 7
        %v1407 = vsub.s32 %v1404, %v1406
        %v1408 = vrot.slane %v1394, %v1407
        %v1409 = vcombine.low %v1353, %v1369
        %v1410 = vcombine.high %v1353, %v1369
        %v1412 = vunpack.c.l.s4 1934713408
        %v1413 = vunpack.c.0.s8 %v1412
        %v1414 = vlaneseq
        %v1415 = vshrl.u32 %v1414, 7
        %v1416 = vsub.s32 %v1413, %v1415
        %v1417 = vrot.slane %v1409, %v1416
        %v1419 = vunpack.c.l.s4 1934713408
        %v1420 = vunpack.c.0.s8 %v1419
        %v1421 = vlaneseq
        %v1422 = vshrl.u32 %v1421, 7
        %v1423 = vsub.s32 %v1420, %v1422
        %v1424 = vrot.slane %v1410, %v1423
        %v1425 = vcombine.low %v1360, %v1376
        %v1426 = vcombine.high %v1360, %v1376
        %v1428 = vunpack.c.l.s4 1934713408
        %v1429 = vunpack.c.0.s8 %v1428
        %v1430 = vlaneseq
        %v1431 = vshrl.u32 %v1430, 7
        %v1432 = vsub.s32 %v1429, %v1431
        %v1433 = vrot.slane %v1425, %v1432
        %v1435 = vunpack.c.l.s4 1934713408
        %v1436 = vunpack.c.0.s8 %v1435
        %v1437 = vlaneseq
        %v1438 = vshrl.u32 %v1437, 7
        %v1439 = vsub.s32 %v1436, %v1438
        %v1440 = vrot.slane %v1426, %v1439
        %v1441 = vcombine.low %v1385, %v1401
        %v1442 = vcombine.high %v1385, %v1401
        %v1444 = vunpack.c.l.s4 1934713408
        %v1445 = vunpack.c.0.s8 %v1444
        %v1446 = vlaneseq
        %v1447 = vshrl.u32 %v1446, 7
        %v1448 = vsub.s32 %v1445, %v1447
        %v1449 = vrot.slane %v1441, %v1448
        %v1451 = vunpack.c.l.s4 1934713408
        %v1452 = vunpack.c.0.s8 %v1451
        %v1453 = vlaneseq
        %v1454 = vshrl.u32 %v1453, 7
        %v1455 = vsub.s32 %v1452, %v1454
        %v1456 = vrot.slane %v1442, %v1455
        %v1457 = vcombine.low %v1392, %v1408
        %v1458 = vcombine.high %v1392, %v1408
        %v1460 = vunpack.c.l.s4 1934713408
        %v1461 = vunpack.c.0.s8 %v1460
        %v1462 = vlaneseq
        %v1463 = vshrl.u32 %v1462, 7
        %v1464 = vsub.s32 %v1461, %v1463
        %v1465 = vrot.slane %v1457, %v1464
        %v1467 = vunpack.c.l.s4 1934713408
        %v1468 = vunpack.c.0.s8 %v1467
        %v1469 = vlaneseq
        %v1470 = vshrl.u32 %v1469, 7
        %v1471 = vsub.s32 %v1468, %v1470
        %v1472 = vrot.slane %v1458, %v1471
        %v1473 = vcombine.low %v1417, %v1449
        %v1474 = vcombine.high %v1417, %v1449
        %v1475 = vcombine.low %v1424, %v1456
        %v1476 = vcombine.high %v1424, %v1456
        %v1477 = vcombine.low %v1433, %v1465
        %v1478 = vcombine.high %v1433, %v1465
        %v1479 = vcombine.low %v1440, %v1472
        %v1480 = vcombine.high %v1440, %v1472
        %v1481 = vcombine.low %v836, %v900
        %v1482 = vcombine.high %v836, %v900
        %v1484 = vunpack.c.l.s4 1983009808
        %v1485 = vunpack.c.0.s8 %v1484
        %v1486 = vlaneseq
        %v1487 = vshrl.u32 %v1486, 7
        %v1488 = vsub.s32 %v1485, %v1487
        %v1489 = vrot.slane %v1481, %v1488
        %v1491 = vunpack.c.l.s4 1983009808
        %v1492 = vunpack.c.0.s8 %v1491
        %v1493 = vlaneseq
        %v1494 = vshrl.u32 %v1493, 7
        %v1495 = vsub.s32 %v1492, %v1494
        %v1496 = vrot.slane %v1482, %v1495
        %v1497 = vcombine.low %v868, %v932
        %v1498 = vcombine.high %v868, %v932
        %v1500 = vunpack.c.l.s4 1983009808
        %v1501 = vunpack.c.0.s8 %v1500
        %v1502 = vlaneseq
        %v1503 = vshrl.u32 %v1502, 7
        %v1504 = vsub.s32 %v1501, %v1503
        %v1505 = vrot.slane %v1497, %v1504
        %v1507 = vunpack.c.l.s4 1983009808
        %v1508 = vunpack.c.0.s8 %v1507
        %v1509 = vlaneseq
        %v1510 = vshrl.u32 %v1509, 7
        %v1511 = vsub.s32 %v1508, %v1510
        %v1512 = vrot.slane %v1498, %v1511
        %v1513 = vcombine.low %v964, %v1028
        %v1514 = vcombine.high %v964, %v1028
        %v1516 = vunpack.c.l.s4 1983009808
        %v1517 = vunpack.c.0.s8 %v1516
        %v1518 = vlaneseq
        %v1519 = vshrl.u32 %v1518, 7
        %v1520 = vsub.s32 %v1517, %v1519
        %v1521 = vrot.slane %v1513, %v1520
        %v1523 = vunpack.c.l.s4 1983009808
        %v1524 = vunpack.c.0.s8 %v1523
        %v1525 = vlaneseq
        %v1526 = vshrl.u32 %v1525, 7
        %v1527 = vsub.s32 %v1524, %v1526
        %v1528 = vrot.slane %v1514, %v1527
        %v1529 = vcombine.low %v996, %v1060
        %v1530 = vcombine.high %v996, %v1060
        %v1532 = vunpack.c.l.s4 1983009808
        %v1533 = vunpack.c.0.s8 %v1532
        %v1534 = vlaneseq
        %v1535 = vshrl.u32 %v1534, 7
        %v1536 = vsub.s32 %v1533, %v1535
        %v1537 = vrot.slane %v1529, %v1536
        %v1539 = vunpack.c.l.s4 1983009808
        %v1540 = vunpack.c.0.s8 %v1539
        %v1541 = vlaneseq
        %v1542 = vshrl.u32 %v1541, 7
        %v1543 = vsub.s32 %v1540, %v1542
        %v1544 = vrot.slane %v1530, %v1543
        %v1545 = vcombine.low %v1489, %v1505
        %v1546 = vcombine.high %v1489, %v1505
        %v1548 = vunpack.c.l.s4 1934713408
        %v1549 = vunpack.c.0.s8 %v1548
        %v1550 = vlaneseq
        %v1551 = vshrl.u32 %v1550, 7
        %v1552 = vsub.s32 %v1549, %v1551
        %v1553 = vrot.slane %v1545, %v1552
        %v1555 = vunpack.c.l.s4 1934713408
        %v1556 = vunpack.c.0.s8 %v1555
        %v1557 = vlaneseq
        %v1558 = vshrl.u32 %v1557, 7
        %v1559 = vsub.s32 %v1556, %v1558
        %v1560 = vrot.slane %v1546, %v1559
        %v1561 = vcombine.low %v1496, %v1512
        %v1562 = vcombine.high %v1496, %v1512
        %v1564 = vunpack.c.l.s4 1934713408
        %v1565 = vunpack.c.0.s8 %v1564
        %v1566 = vlaneseq
        %v1567 = vshrl.u32 %v1566, 7
        %v1568 = vsub.s32 %v1565, %v1567
        %v1569 = vrot.slane %v1561, %v1568
        %v1571 = vunpack.c.l.s4 1934713408
        %v1572 = vunpack.c.0.s8 %v1571
        %v1573 = vlaneseq
        %v1574 = vshrl.u32 %v1573, 7
        %v1575 = vsub.s32 %v1572, %v1574
        %v1576 = vrot.slane %v1562, %v1575
        %v1577 = vcombine.low %v1521, %v1537
        %v1578 = vcombine.high %v1521, %v1537
        %v1580 = vunpack.c.l.s4 1934713408
        %v1581 = vunpack.c.0.s8 %v1580
        %v1582 = vlaneseq
        %v1583 = vshrl.u32 %v1582, 7
        %v1584 = vsub.s32 %v1581, %v1583
        %v1585 = vrot.slane %v1577, %v1584
        %v1587 = vunpack.c.l.s4 1934713408
        %v1588 = vunpack.c.0.s8 %v1587
        %v1589 = vlaneseq
        %v1590 = vshrl.u32 %v1589, 7
        %v1591 = vsub.s32 %v1588, %v1590
        %v1592 = vrot.slane %v1578, %v1591
        %v1593 = vcombine.low %v1528, %v1544
        %v1594 = vcombine.high %v1528, %v1544
        %v1596 = vunpack.c.l.s4 1934713408
        %v1597 = vunpack.c.0.s8 %v1596
        %v1598 = vlaneseq
        %v1599 = vshrl.u32 %v1598, 7
        %v1600 = vsub.s32 %v1597, %v1599
        %v1601 = vrot.slane %v1593, %v1600
        %v1603 = vunpack.c.l.s4 1934713408
        %v1604 = vunpack.c.0.s8 %v1603
        %v1605 = vlaneseq
        %v1606 = vshrl.u32 %v1605, 7
        %v1607 = vsub.s32 %v1604, %v1606
        %v1608 = vrot.slane %v1594, %v1607
        %v1609 = vcombine.low %v1553, %v1585
        %v1610 = vcombine.high %v1553, %v1585
        %v1611 = vcombine.low %v1560, %v1592
        %v1612 = vcombine.high %v1560, %v1592
        %v1613 = vcombine.low %v1569, %v1601
        %v1614 = vcombine.high %v1569, %v1601
        %v1615 = vcombine.low %v1576, %v1608
        %v1616 = vcombine.high %v1576, %v1608
        %v1617 = vcombine.low %v837, %v901
        %v1618 = vcombine.high %v837, %v901
        %v1620 = vunpack.c.l.s4 1983009808
        %v1621 = vunpack.c.0.s8 %v1620
        %v1622 = vlaneseq
        %v1623 = vshrl.u32 %v1622, 7
        %v1624 = vsub.s32 %v1621, %v1623
        %v1625 = vrot.slane %v1617, %v1624
        %v1627 = vunpack.c.l.s4 1983009808
        %v1628 = vunpack.c.0.s8 %v1627
        %v1629 = vlaneseq
        %v1630 = vshrl.u32 %v1629, 7
        %v1631 = vsub.s32 %v1628, %v1630
        %v1632 = vrot.slane %v1618, %v1631
        %v1633 = vcombine.low %v869, %v933
        %v1634 = vcombine.high %v869, %v933
        %v1636 = vunpack.c.l.s4 1983009808
        %v1637 = vunpack.c.0.s8 %v1636
        %v1638 = vlaneseq
        %v1639 = vshrl.u32 %v1638, 7
        %v1640 = vsub.s32 %v1637, %v1639
        %v1641 = vrot.slane %v1633, %v1640
        %v1643 = vunpack.c.l.s4 1983009808
        %v1644 = vunpack.c.0.s8 %v1643
        %v1645 = vlaneseq
        %v1646 = vshrl.u32 %v1645, 7
        %v1647 = vsub.s32 %v1644, %v1646
        %v1648 = vrot.slane %v1634, %v1647
        %v1649 = vcombine.low %v965, %v1029
        %v1650 = vcombine.high %v965, %v1029
        %v1652 = vunpack.c.l.s4 1983009808
        %v1653 = vunpack.c.0.s8 %v1652
        %v1654 = vlaneseq
        %v1655 = vshrl.u32 %v1654, 7
        %v1656 = vsub.s32 %v1653, %v1655
        %v1657 = vrot.slane %v1649, %v1656
        %v1659 = vunpack.c.l.s4 1983009808
        %v1660 = vunpack.c.0.s8 %v1659
        %v1661 = vlaneseq
        %v1662 = vshrl.u32 %v1661, 7
        %v1663 = vsub.s32 %v1660, %v1662
        %v1664 = vrot.slane %v1650, %v1663
        %v1665 = vcombine.low %v997, %v1061
        %v1666 = vcombine.high %v997, %v1061
        %v1668 = vunpack.c.l.s4 1983009808
        %v1669 = vunpack.c.0.s8 %v1668
        %v1670 = vlaneseq
        %v1671 = vshrl.u32 %v1670, 7
        %v1672 = vsub.s32 %v1669, %v1671
        %v1673 = vrot.slane %v1665, %v1672
        %v1675 = vunpack.c.l.s4 1983009808
        %v1676 = vunpack.c.0.s8 %v1675
        %v1677 = vlaneseq
        %v1678 = vshrl.u32 %v1677, 7
        %v1679 = vsub.s32 %v1676, %v1678
        %v1680 = vrot.slane %v1666, %v1679
        %v1681 = vcombine.low %v1625, %v1641
        %v1682 = vcombine.high %v1625, %v1641
        %v1684 = vunpack.c.l.s4 1934713408
        %v1685 = vunpack.c.0.s8 %v1684
        %v1686 = vlaneseq
        %v1687 = vshrl.u32 %v1686, 7
        %v1688 = vsub.s32 %v1685, %v1687
        %v1689 = vrot.slane %v1681, %v1688
        %v1691 = vunpack.c.l.s4 1934713408
        %v1692 = vunpack.c.0.s8 %v1691
        %v1693 = vlaneseq
        %v1694 = vshrl.u32 %v1693, 7
        %v1695 = vsub.s32 %v1692, %v1694
        %v1696 = vrot.slane %v1682, %v1695
        %v1697 = vcombine.low %v1632, %v1648
        %v1698 = vcombine.high %v1632, %v1648
        %v1700 = vunpack.c.l.s4 1934713408
        %v1701 = vunpack.c.0.s8 %v1700
        %v1702 = vlaneseq
        %v1703 = vshrl.u32 %v1702, 7
        %v1704 = vsub.s32 %v1701, %v1703
        %v1705 = vrot.slane %v1697, %v1704
        %v1707 = vunpack.c.l.s4 1934713408
        %v1708 = vunpack.c.0.s8 %v1707
        %v1709 = vlaneseq
        %v1710 = vshrl.u32 %v1709, 7
        %v1711 = vsub.s32 %v1708, %v1710
        %v1712 = vrot.slane %v1698, %v1711
        %v1713 = vcombine.low %v1657, %v1673
        %v1714 = vcombine.high %v1657, %v1673
        %v1716 = vunpack.c.l.s4 1934713408
        %v1717 = vunpack.c.0.s8 %v1716
        %v1718 = vlaneseq
        %v1719 = vshrl.u32 %v1718, 7
        %v1720 = vsub.s32 %v1717, %v1719
        %v1721 = vrot.slane %v1713, %v1720
        %v1723 = vunpack.c.l.s4 1934713408
        %v1724 = vunpack.c.0.s8 %v1723
        %v1725 = vlaneseq
        %v1726 = vshrl.u32 %v1725, 7
        %v1727 = vsub.s32 %v1724, %v1726
        %v1728 = vrot.slane %v1714, %v1727
        %v1729 = vcombine.low %v1664, %v1680
        %v1730 = vcombine.high %v1664, %v1680
        %v1732 = vunpack.c.l.s4 1934713408
        %v1733 = vunpack.c.0.s8 %v1732
        %v1734 = vlaneseq
        %v1735 = vshrl.u32 %v1734, 7
        %v1736 = vsub.s32 %v1733, %v1735
        %v1737 = vrot.slane %v1729, %v1736
        %v1739 = vunpack.c.l.s4 1934713408
        %v1740 = vunpack.c.0.s8 %v1739
        %v1741 = vlaneseq
        %v1742 = vshrl.u32 %v1741, 7
        %v1743 = vsub.s32 %v1740, %v1742
        %v1744 = vrot.slane %v1730, %v1743
        %v1745 = vcombine.low %v1689, %v1721
        %v1746 = vcombine.high %v1689, %v1721
        %v1747 = vcombine.low %v1696, %v1728
        %v1748 = vcombine.high %v1696, %v1728
        %v1749 = vcombine.low %v1705, %v1737
        %v1750 = vcombine.high %v1705, %v1737
        %v1751 = vcombine.low %v1712, %v1744
        %v1752 = vcombine.high %v1712, %v1744
        %v1753 = vcombine.low %v838, %v902
        %v1754 = vcombine.high %v838, %v902
        %v1756 = vunpack.c.l.s4 1983009808
        %v1757 = vunpack.c.0.s8 %v1756
        %v1758 = vlaneseq
        %v1759 = vshrl.u32 %v1758, 7
        %v1760 = vsub.s32 %v1757, %v1759
        %v1761 = vrot.slane %v1753, %v1760
        %v1763 = vunpack.c.l.s4 1983009808
        %v1764 = vunpack.c.0.s8 %v1763
        %v1765 = vlaneseq
        %v1766 = vshrl.u32 %v1765, 7
        %v1767 = vsub.s32 %v1764, %v1766
        %v1768 = vrot.slane %v1754, %v1767
        %v1769 = vcombine.low %v870, %v934
        %v1770 = vcombine.high %v870, %v934
        %v1772 = vunpack.c.l.s4 1983009808
        %v1773 = vunpack.c.0.s8 %v1772
        %v1774 = vlaneseq
        %v1775 = vshrl.u32 %v1774, 7
        %v1776 = vsub.s32 %v1773, %v1775
        %v1777 = vrot.slane %v1769, %v1776
        %v1779 = vunpack.c.l.s4 1983009808
        %v1780 = vunpack.c.0.s8 %v1779
        %v1781 = vlaneseq
        %v1782 = vshrl.u32 %v1781, 7
        %v1783 = vsub.s32 %v1780, %v1782
        %v1784 = vrot.slane %v1770, %v1783
        %v1785 = vcombine.low %v966, %v1030
        %v1786 = vcombine.high %v966, %v1030
        %v1788 = vunpack.c.l.s4 1983009808
        %v1789 = vunpack.c.0.s8 %v1788
        %v1790 = vlaneseq
        %v1791 = vshrl.u32 %v1790, 7
        %v1792 = vsub.s32 %v1789, %v1791
        %v1793 = vrot.slane %v1785, %v1792
        %v1795 = vunpack.c.l.s4 1983009808
        %v1796 = vunpack.c.0.s8 %v1795
        %v1797 = vlaneseq
        %v1798 = vshrl.u32 %v1797, 7
        %v1799 = vsub.s32 %v1796, %v1798
        %v1800 = vrot.slane %v1786, %v1799
        %v1801 = vcombine.low %v998, %v1062
        %v1802 = vcombine.high %v998, %v1062
        %v1804 = vunpack.c.l.s4 1983009808
        %v1805 = vunpack.c.0.s8 %v1804
        %v1806 = vlaneseq
        %v1807 = vshrl.u32 %v1806, 7
        %v1808 = vsub.s32 %v1805, %v1807
        %v1809 = vrot.slane %v1801, %v1808
        %v1811 = vunpack.c.l.s4 1983009808
        %v1812 = vunpack.c.0.s8 %v1811
        %v1813 = vlaneseq
        %v1814 = vshrl.u32 %v1813, 7
        %v1815 = vsub.s32 %v1812, %v1814
        %v1816 = vrot.slane %v1802, %v1815
        %v1817 = vcombine.low %v1761, %v1777
        %v1818 = vcombine.high %v1761, %v1777
        %v1820 = vunpack.c.l.s4 1934713408
        %v1821 = vunpack.c.0.s8 %v1820
        %v1822 = vlaneseq
        %v1823 = vshrl.u32 %v1822, 7
        %v1824 = vsub.s32 %v1821, %v1823
        %v1825 = vrot.slane %v1817, %v1824
        %v1827 = vunpack.c.l.s4 1934713408
        %v1828 = vunpack.c.0.s8 %v1827
        %v1829 = vlaneseq
        %v1830 = vshrl.u32 %v1829, 7
        %v1831 = vsub.s32 %v1828, %v1830
        %v1832 = vrot.slane %v1818, %v1831
        %v1833 = vcombine.low %v1768, %v1784
        %v1834 = vcombine.high %v1768, %v1784
        %v1836 = vunpack.c.l.s4 1934713408
        %v1837 = vunpack.c.0.s8 %v1836
        %v1838 = vlaneseq
        %v1839 = vshrl.u32 %v1838, 7
        %v1840 = vsub.s32 %v1837, %v1839
        %v1841 = vrot.slane %v1833, %v1840
        %v1843 = vunpack.c.l.s4 1934713408
        %v1844 = vunpack.c.0.s8 %v1843
        %v1845 = vlaneseq
        %v1846 = vshrl.u32 %v1845, 7
        %v1847 = vsub.s32 %v1844, %v1846
        %v1848 = vrot.slane %v1834, %v1847
        %v1849 = vcombine.low %v1793, %v1809
        %v1850 = vcombine.high %v1793, %v1809
        %v1852 = vunpack.c.l.s4 1934713408
        %v1853 = vunpack.c.0.s8 %v1852
        %v1854 = vlaneseq
        %v1855 = vshrl.u32 %v1854, 7
        %v1856 = vsub.s32 %v1853, %v1855
        %v1857 = vrot.slane %v1849, %v1856
        %v1859 = vunpack.c.l.s4 1934713408
        %v1860 = vunpack.c.0.s8 %v1859
        %v1861 = vlaneseq
        %v1862 = vshrl.u32 %v1861, 7
        %v1863 = vsub.s32 %v1860, %v1862
        %v1864 = vrot.slane %v1850, %v1863
        %v1865 = vcombine.low %v1800, %v1816
        %v1866 = vcombine.high %v1800, %v1816
        %v1868 = vunpack.c.l.s4 1934713408
        %v1869 = vunpack.c.0.s8 %v1868
        %v1870 = vlaneseq
        %v1871 = vshrl.u32 %v1870, 7
        %v1872 = vsub.s32 %v1869, %v1871
        %v1873 = vrot.slane %v1865, %v1872
        %v1875 = vunpack.c.l.s4 1934713408
        %v1876 = vunpack.c.0.s8 %v1875
        %v1877 = vlaneseq
        %v1878 = vshrl.u32 %v1877, 7
        %v1879 = vsub.s32 %v1876, %v1878
        %v1880 = vrot.slane %v1866, %v1879
        %v1881 = vcombine.low %v1825, %v1857
        %v1882 = vcombine.high %v1825, %v1857
        %v1883 = vcombine.low %v1832, %v1864
        %v1884 = vcombine.high %v1832, %v1864
        %v1885 = vcombine.low %v1841, %v1873
        %v1886 = vcombine.high %v1841, %v1873
        %v1887 = vcombine.low %v1848, %v1880
        %v1888 = vcombine.high %v1848, %v1880
        %v1889 = vcombine.low %v839, %v903
        %v1890 = vcombine.high %v839, %v903
        %v1892 = vunpack.c.l.s4 1983009808
        %v1893 = vunpack.c.0.s8 %v1892
        %v1894 = vlaneseq
        %v1895 = vshrl.u32 %v1894, 7
        %v1896 = vsub.s32 %v1893, %v1895
        %v1897 = vrot.slane %v1889, %v1896
        %v1899 = vunpack.c.l.s4 1983009808
        %v1900 = vunpack.c.0.s8 %v1899
        %v1901 = vlaneseq
        %v1902 = vshrl.u32 %v1901, 7
        %v1903 = vsub.s32 %v1900, %v1902
        %v1904 = vrot.slane %v1890, %v1903
        %v1905 = vcombine.low %v871, %v935
        %v1906 = vcombine.high %v871, %v935
        %v1908 = vunpack.c.l.s4 1983009808
        %v1909 = vunpack.c.0.s8 %v1908
        %v1910 = vlaneseq
        %v1911 = vshrl.u32 %v1910, 7
        %v1912 = vsub.s32 %v1909, %v1911
        %v1913 = vrot.slane %v1905, %v1912
        %v1915 = vunpack.c.l.s4 1983009808
        %v1916 = vunpack.c.0.s8 %v1915
        %v1917 = vlaneseq
        %v1918 = vshrl.u32 %v1917, 7
        %v1919 = vsub.s32 %v1916, %v1918
        %v1920 = vrot.slane %v1906, %v1919
        %v1921 = vcombine.low %v967, %v1031
        %v1922 = vcombine.high %v967, %v1031
        %v1924 = vunpack.c.l.s4 1983009808
        %v1925 = vunpack.c.0.s8 %v1924
        %v1926 = vlaneseq
        %v1927 = vshrl.u32 %v1926, 7
        %v1928 = vsub.s32 %v1925, %v1927
        %v1929 = vrot.slane %v1921, %v1928
        %v1931 = vunpack.c.l.s4 1983009808
        %v1932 = vunpack.c.0.s8 %v1931
        %v1933 = vlaneseq
        %v1934 = vshrl.u32 %v1933, 7
        %v1935 = vsub.s32 %v1932, %v1934
        %v1936 = vrot.slane %v1922, %v1935
        %v1937 = vcombine.low %v999, %v1063
        %v1938 = vcombine.high %v999, %v1063
        %v1940 = vunpack.c.l.s4 1983009808
        %v1941 = vunpack.c.0.s8 %v1940
        %v1942 = vlaneseq
        %v1943 = vshrl.u32 %v1942, 7
        %v1944 = vsub.s32 %v1941, %v1943
        %v1945 = vrot.slane %v1937, %v1944
        %v1947 = vunpack.c.l.s4 1983009808
        %v1948 = vunpack.c.0.s8 %v1947
        %v1949 = vlaneseq
        %v1950 = vshrl.u32 %v1949, 7
        %v1951 = vsub.s32 %v1948, %v1950
        %v1952 = vrot.slane %v1938, %v1951
        %v1953 = vcombine.low %v1897, %v1913
        %v1954 = vcombine.high %v1897, %v1913
        %v1956 = vunpack.c.l.s4 1934713408
        %v1957 = vunpack.c.0.s8 %v1956
        %v1958 = vlaneseq
        %v1959 = vshrl.u32 %v1958, 7
        %v1960 = vsub.s32 %v1957, %v1959
        %v1961 = vrot.slane %v1953, %v1960
        %v1963 = vunpack.c.l.s4 1934713408
        %v1964 = vunpack.c.0.s8 %v1963
        %v1965 = vlaneseq
        %v1966 = vshrl.u32 %v1965, 7
        %v1967 = vsub.s32 %v1964, %v1966
        %v1968 = vrot.slane %v1954, %v1967
        %v1969 = vcombine.low %v1904, %v1920
        %v1970 = vcombine.high %v1904, %v1920
        %v1972 = vunpack.c.l.s4 1934713408
        %v1973 = vunpack.c.0.s8 %v1972
        %v1974 = vlaneseq
        %v1975 = vshrl.u32 %v1974, 7
        %v1976 = vsub.s32 %v1973, %v1975
        %v1977 = vrot.slane %v1969, %v1976
        %v1979 = vunpack.c.l.s4 1934713408
        %v1980 = vunpack.c.0.s8 %v1979
        %v1981 = vlaneseq
        %v1982 = vshrl.u32 %v1981, 7
        %v1983 = vsub.s32 %v1980, %v1982
        %v1984 = vrot.slane %v1970, %v1983
        %v1985 = vcombine.low %v1929, %v1945
        %v1986 = vcombine.high %v1929, %v1945
        %v1988 = vunpack.c.l.s4 1934713408
        %v1989 = vunpack.c.0.s8 %v1988
        %v1990 = vlaneseq
        %v1991 = vshrl.u32 %v1990, 7
        %v1992 = vsub.s32 %v1989, %v1991
        %v1993 = vrot.slane %v1985, %v1992
        %v1995 = vunpack.c.l.s4 1934713408
        %v1996 = vunpack.c.0.s8 %v1995
        %v1997 = vlaneseq
        %v1998 = vshrl.u32 %v1997, 7
        %v1999 = vsub.s32 %v1996, %v1998
        %v2000 = vrot.slane %v1986, %v1999
        %v2001 = vcombine.low %v1936, %v1952
        %v2002 = vcombine.high %v1936, %v1952
        %v2004 = vunpack.c.l.s4 1934713408
        %v2005 = vunpack.c.0.s8 %v2004
        %v2006 = vlaneseq
        %v2007 = vshrl.u32 %v2006, 7
        %v2008 = vsub.s32 %v2005, %v2007
        %v2009 = vrot.slane %v2001, %v2008
        %v2011 = vunpack.c.l.s4 1934713408
        %v2012 = vunpack.c.0.s8 %v2011
        %v2013 = vlaneseq
        %v2014 = vshrl.u32 %v2013, 7
        %v2015 = vsub.s32 %v2012, %v2014
        %v2016 = vrot.slane %v2002, %v2015
        %v2017 = vcombine.low %v1961, %v1993
        %v2018 = vcombine.high %v1961, %v1993
        %v2019 = vcombine.low %v1968, %v2000
        %v2020 = vcombine.high %v1968, %v2000
        %v2021 = vcombine.low %v1977, %v2009
        %v2022 = vcombine.high %v1977, %v2009
        %v2023 = vcombine.low %v1984, %v2016
        %v2024 = vcombine.high %v1984, %v2016
        %vm2025 = vcmask 64512
        %2026 = vst.msk [vmem:[%s514] sm:$0xff] %vm2025, %v1201
        %2027 = vst.msk [vmem:[%s514 + $0x8] sm:$0xff] %vm2025, %v1202
        %2028 = vst.msk [vmem:[%s514 + $0x10] sm:$0xff] %vm2025, %v1203
        %2029 = vst.msk [vmem:[%s514 + $0x18] sm:$0xff] %vm2025, %v1204
        %2030 = vst.msk [vmem:[%s514 + $0x20] sm:$0xff] %vm2025, %v1205
        %2031 = vst.msk [vmem:[%s514 + $0x28] sm:$0xff] %vm2025, %v1206
        %2032 = vst.msk [vmem:[%s514 + $0x30] sm:$0xff] %vm2025, %v1207
        %2033 = vst.msk [vmem:[%s514 + $0x38] sm:$0xff] %vm2025, %v1208
        %2034 = vst.msk [vmem:[%s514 + $0x40] sm:$0xff] %vm2025, %v1337
        %2035 = vst.msk [vmem:[%s514 + $0x48] sm:$0xff] %vm2025, %v1338
        %2036 = vst.msk [vmem:[%s514 + $0x50] sm:$0xff] %vm2025, %v1339
        %2037 = vst.msk [vmem:[%s514 + $0x58] sm:$0xff] %vm2025, %v1340
        %2038 = vst.msk [vmem:[%s514 + $0x60] sm:$0xff] %vm2025, %v1341
        %2039 = vst.msk [vmem:[%s514 + $0x68] sm:$0xff] %vm2025, %v1342
        %2040 = vst.msk [vmem:[%s514 + $0x70] sm:$0xff] %vm2025, %v1343
        %2041 = vst.msk [vmem:[%s514 + $0x78] sm:$0xff] %vm2025, %v1344
        %2042 = vst.msk [vmem:[%s514 + $0x80] sm:$0xff] %vm2025, %v1473
        %2043 = vst.msk [vmem:[%s514 + $0x88] sm:$0xff] %vm2025, %v1474
        %2044 = vst.msk [vmem:[%s514 + $0x90] sm:$0xff] %vm2025, %v1475
        %2045 = vst.msk [vmem:[%s514 + $0x98] sm:$0xff] %vm2025, %v1476
        %2046 = vst.msk [vmem:[%s514 + $0xa0] sm:$0xff] %vm2025, %v1477
        %2047 = vst.msk [vmem:[%s514 + $0xa8] sm:$0xff] %vm2025, %v1478
        %2048 = vst.msk [vmem:[%s514 + $0xb0] sm:$0xff] %vm2025, %v1479
        %2049 = vst.msk [vmem:[%s514 + $0xb8] sm:$0xff] %vm2025, %v1480
        %2050 = vst.msk [vmem:[%s514 + $0xc0] sm:$0xff] %vm2025, %v1609
        %2051 = vst.msk [vmem:[%s514 + $0xc8] sm:$0xff] %vm2025, %v1610
        %2052 = vst.msk [vmem:[%s514 + $0xd0] sm:$0xff] %vm2025, %v1611
        %2053 = vst.msk [vmem:[%s514 + $0xd8] sm:$0xff] %vm2025, %v1612
        %2054 = vst.msk [vmem:[%s514 + $0xe0] sm:$0xff] %vm2025, %v1613
        %2055 = vst.msk [vmem:[%s514 + $0xe8] sm:$0xff] %vm2025, %v1614
        %2056 = vst.msk [vmem:[%s514 + $0xf0] sm:$0xff] %vm2025, %v1615
        %2057 = vst.msk [vmem:[%s514 + $0xf8] sm:$0xff] %vm2025, %v1616
        %2058 = vst.msk [vmem:[%s514 + $0x100] sm:$0xff] %vm2025, %v1745
        %2059 = vst.msk [vmem:[%s514 + $0x108] sm:$0xff] %vm2025, %v1746
        %2060 = vst.msk [vmem:[%s514 + $0x110] sm:$0xff] %vm2025, %v1747
        %2061 = vst.msk [vmem:[%s514 + $0x118] sm:$0xff] %vm2025, %v1748
        %2062 = vst.msk [vmem:[%s514 + $0x120] sm:$0xff] %vm2025, %v1749
        %2063 = vst.msk [vmem:[%s521] sm:$0xff] %vm2025, %v1750
        %2064 = vst.msk [vmem:[%s521 + $0x8] sm:$0xff] %vm2025, %v1751
        %2065 = vst.msk [vmem:[%s521 + $0x10] sm:$0xff] %vm2025, %v1752
        %2066 = vst.msk [vmem:[%s521 + $0x18] sm:$0xff] %vm2025, %v1881
        %2067 = vst.msk [vmem:[%s521 + $0x20] sm:$0xff] %vm2025, %v1882
        %2068 = vst.msk [vmem:[%s521 + $0x28] sm:$0xff] %vm2025, %v1883
        %2069 = vst.msk [vmem:[%s521 + $0x30] sm:$0xff] %vm2025, %v1884
        %2070 = vst.msk [vmem:[%s521 + $0x38] sm:$0xff] %vm2025, %v1885
        %2071 = vst.msk [vmem:[%s521 + $0x40] sm:$0xff] %vm2025, %v1886
        %2072 = vst.msk [vmem:[%s521 + $0x48] sm:$0xff] %vm2025, %v1887
        %2073 = vst.msk [vmem:[%s521 + $0x50] sm:$0xff] %vm2025, %v1888
        %2074 = vst.msk [vmem:[%s521 + $0x58] sm:$0xff] %vm2025, %v2017
        %2075 = vst.msk [vmem:[%s521 + $0x60] sm:$0xff] %vm2025, %v2018
        %2076 = vst.msk [vmem:[%s521 + $0x68] sm:$0xff] %vm2025, %v2019
        %2077 = vst.msk [vmem:[%s521 + $0x70] sm:$0xff] %vm2025, %v2020
        %2078 = vst.msk [vmem:[%s521 + $0x78] sm:$0xff] %vm2025, %v2021
        %2079 = vst.msk [vmem:[%s521 + $0x80] sm:$0xff] %vm2025, %v2022
        %2080 = vst.msk [vmem:[%s521 + $0x88] sm:$0xff] %vm2025, %v2023
        %2081 = vst.msk [vmem:[%s521 + $0x90] sm:$0xff] %vm2025, %v2024
        %v2082 = vadd.f32 %v524, %v668
        %v2083 = vadd.f32 %v525, %v669
        %v2084 = vadd.f32 %v526, %v670
        %v2085 = vadd.f32 %v527, %v671
        %v2086 = vadd.f32 %v528, %v672
        %v2087 = vadd.f32 %v529, %v673
        %v2088 = vadd.f32 %v530, %v674
        %v2089 = vadd.f32 %v531, %v675
        %v2090 = vld [vmem:[#allocation7] sm:$0xff]
        %v2091 = vld [vmem:[#allocation7 + $0x8] sm:$0xff]
        %v2092 = vld [vmem:[#allocation7 + $0x10] sm:$0xff]
        %v2093 = vld [vmem:[#allocation7 + $0x18] sm:$0xff]
        %v2094 = vld [vmem:[#allocation8] sm:$0x1]
        %v2095 = vmul.f32 %v2094, 2.0
        %v2097 = vlaneseq
        %v2098 = vshrl.u32 %v2097, 7
        %v2099 = vsub.s32 0, %v2098
        %v2100 = vrot.slane %v2095, %v2099
        %v2103 = vsel %vm687, %v2082, 0
        %v2106 = vsel %vm687, %v2083, 0
        %v2109 = vsel %vm687, %v2084, 0
        %v2112 = vsel %vm687, %v2085, 0
        %v2115 = vsel %vm687, %v2086, 0
        %v2118 = vsel %vm687, %v2087, 0
        %v2121 = vsel %vm687, %v2088, 0
        %v2124 = vsel %vm687, %v2089, 0
        %2126 = vmatprep.subr.mxu0 0.0
        %2127 = vmatpush1.msra.mxu0 %v2090
        %2128 = vmatprep.subr.mxu0 0.0
        %2129 = vmatpush1.msra.mxu0 %v2091
        %2130 = vmatprep.subr.mxu0 0.0
        %2131 = vmatpush1.msra.mxu0 %v2092
        %2132 = vmatprep.subr.mxu0 0.0
        %2133 = vmatpush1.msra.mxu0 %v2093
        %2134 = vmatprep.subr.mxu0 0.0
        %2135 = vmatpush1.msra.mxu0 0.0
        %2136 = vmatprep.subr.mxu0 0.0
        %2137 = vmatpush1.msra.mxu0 0.0
        %2138 = vmatprep.subr.mxu0 0.0
        %2139 = vmatpush1.msra.mxu0 0.0
        %2140 = vmatprep.subr.mxu0 0.0
        %2141 = vmatpush1.msra.mxu0 0.0
        %2142 = vmatprep.subr.mxu0 0.0
        %2143 = vmatpush1.msra.mxu0 0.0
        %2144 = vmatprep.subr.mxu0 0.0
        %2145 = vmatpush1.msra.mxu0 0.0
        %2146 = vmatprep.subr.mxu0 0.0
        %2147 = vmatpush1.msra.mxu0 0.0
        %2148 = vmatprep.subr.mxu0 0.0
        %2149 = vmatpush1.msra.mxu0 0.0
        %2150 = vmatprep.subr.mxu0 0.0
        %2151 = vmatpush1.msra.mxu0 0.0
        %2152 = vmatprep.subr.mxu0 0.0
        %2153 = vmatpush1.msra.mxu0 0.0
        %2154 = vmatprep.subr.mxu0 0.0
        %2155 = vmatpush1.msra.mxu0 0.0
        %2156 = vmatprep.subr.mxu0 0.0
        %2157 = vmatpush1.msra.mxu0 0.0
        %2158 = vmatprep.subr.mxu0 0.0
        %2159 = vmatpush1.msra.mxu0 0.0
        %2160 = vmatprep.subr.mxu0 0.0
        %2161 = vmatpush1.msra.mxu0 0.0
        %2162 = vmatprep.subr.mxu0 0.0
        %2163 = vmatpush1.msra.mxu0 0.0
        %2164 = vmatprep.subr.mxu0 0.0
        %2165 = vmatpush1.msra.mxu0 0.0
        %2166 = vmatprep.subr.mxu0 0.0
        %2167 = vmatpush1.msra.mxu0 0.0
        %2168 = vmatprep.subr.mxu0 0.0
        %2169 = vmatpush1.msra.mxu0 0.0
        %2170 = vmatprep.subr.mxu0 0.0
        %2171 = vmatpush1.msra.mxu0 0.0
        %2172 = vmatprep.subr.mxu0 0.0
        %2173 = vmatpush1.msra.mxu0 0.0
        %2174 = vmatprep.subr.mxu0 0.0
        %2175 = vmatpush1.msra.mxu0 0.0
        %2176 = vmatprep.subr.mxu0 0.0
        %2177 = vmatpush1.msra.mxu0 0.0
        %2178 = vmatprep.subr.mxu0 0.0
        %2179 = vmatpush1.msra.mxu0 0.0
        %2180 = vmatprep.subr.mxu0 0.0
        %2181 = vmatpush1.msra.mxu0 0.0
        %2182 = vmatprep.subr.mxu0 0.0
        %2183 = vmatpush1.msra.mxu0 0.0
        %2184 = vmatprep.subr.mxu0 0.0
        %2185 = vmatpush1.msra.mxu0 0.0
        %2186 = vmatprep.subr.mxu0 0.0
        %2187 = vmatpush1.msra.mxu0 0.0
        %2188 = vmatprep.subr.mxu0 0.0
        %2189 = vmatpush1.msra.mxu0 0.0
        %2190 = vmatprep.mubr.f32.mxu0 0.0
        %2191 = vmatmul.mubr.f32.gmra.mrb[0].mxu0 %v2103
        %v2192 = vpop.f32.mrb[0].mxu0
        %v2193 = vadd.f32 %v2100, %v2192
        %v2194 = vpop.f32.mrb[0].mxu0
        %2195 = vmatprep.mubr.f32.mxu0 0.0
        %2196 = vmatmul.mubr.f32.gmra.mrb[0].mxu0 %v2106
        %v2197 = vpop.f32.mrb[0].mxu0
        %v2198 = vadd.f32 %v2100, %v2197
        %v2199 = vpop.f32.mrb[0].mxu0
        %2200 = vmatprep.mubr.f32.mxu0 0.0
        %2201 = vmatmul.mubr.f32.gmra.mrb[0].mxu0 %v2109
        %v2202 = vpop.f32.mrb[0].mxu0
        %v2203 = vadd.f32 %v2100, %v2202
        %v2204 = vpop.f32.mrb[0].mxu0
        %2205 = vmatprep.mubr.f32.mxu0 0.0
        %2206 = vmatmul.mubr.f32.gmra.mrb[0].mxu0 %v2112
        %v2207 = vpop.f32.mrb[0].mxu0
        %v2208 = vadd.f32 %v2100, %v2207
        %v2209 = vpop.f32.mrb[0].mxu0
        %2210 = vmatprep.mubr.f32.mxu0 0.0
        %2211 = vmatmul.mubr.f32.gmra.mrb[0].mxu0 %v2115
        %v2212 = vpop.f32.mrb[0].mxu0
        %v2213 = vadd.f32 %v2100, %v2212
        %v2214 = vpop.f32.mrb[0].mxu0
        %2215 = vmatprep.mubr.f32.mxu0 0.0
        %2216 = vmatmul.mubr.f32.gmra.mrb[0].mxu0 %v2118
        %v2217 = vpop.f32.mrb[0].mxu0
        %v2218 = vadd.f32 %v2100, %v2217
        %v2219 = vpop.f32.mrb[0].mxu0
        %2220 = vmatprep.mubr.f32.mxu0 0.0
        %2221 = vmatmul.mubr.f32.gmra.mrb[0].mxu0 %v2121
        %v2222 = vpop.f32.mrb[0].mxu0
        %v2223 = vadd.f32 %v2100, %v2222
        %v2224 = vpop.f32.mrb[0].mxu0
        %2225 = vmatprep.mubr.f32.mxu0 0.0
        %2226 = vmatmul.mubr.f32.gmra.mrb[0].mxu0 %v2124
        %v2227 = vpop.f32.mrb[0].mxu0
        %v2228 = vadd.f32 %v2100, %v2227
        %v2229 = vpop.f32.mrb[0].mxu0
        %2230 = vdwg.mxu0
        %2231 = vxpose.xlu0.b32.start [1/16] %v2193, 128
        %2232 = vxpose.xlu0.b32.cont [2/16] 0.0, 128
        %2233 = vxpose.xlu0.b32.cont [3/16] 0.0, 128
        %2234 = vxpose.xlu0.b32.cont [4/16] 0.0, 128
        %2235 = vxpose.xlu0.b32.cont [5/16] 0.0, 128
        %2236 = vxpose.xlu0.b32.cont [6/16] 0.0, 128
        %2237 = vxpose.xlu0.b32.cont [7/16] 0.0, 128
        %2238 = vxpose.xlu0.b32.cont [8/16] 0.0, 128
        %2239 = vxpose.xlu0.b32.cont [9/16] 0.0, 128
        %2240 = vxpose.xlu0.b32.cont [10/16] 0.0, 128
        %2241 = vxpose.xlu0.b32.cont [11/16] 0.0, 128
        %2242 = vxpose.xlu0.b32.cont [12/16] 0.0, 128
        %2243 = vxpose.xlu0.b32.cont [13/16] 0.0, 128
        %2244 = vxpose.xlu0.b32.cont [14/16] 0.0, 128
        %2245 = vxpose.xlu0.b32.cont [15/16] 0.0, 128
        %2246 = vxpose.xlu0.b32.end [16/16] 0.0, 128
        %v2247 = vpop.trf.xlu0
        %v2248 = vpop.trf.xlu0
        %v2249 = vpop.trf.xlu0
        %v2250 = vpop.trf.xlu0
        %v2251 = vpop.trf.xlu0
        %v2252 = vpop.trf.xlu0
        %v2253 = vpop.trf.xlu0
        %v2254 = vpop.trf.xlu0
        %v2255 = vpop.trf.xlu0
        %v2256 = vpop.trf.xlu0
        %v2257 = vpop.trf.xlu0
        %v2258 = vpop.trf.xlu0
        %v2259 = vpop.trf.xlu0
        %v2260 = vpop.trf.xlu0
        %v2261 = vpop.trf.xlu0
        %v2262 = vpop.trf.xlu0
        %2263 = vxpose.xlu0.b32.start [1/16] %v2198, 128
        %2264 = vxpose.xlu0.b32.cont [2/16] 0.0, 128
        %2265 = vxpose.xlu0.b32.cont [3/16] 0.0, 128
        %2266 = vxpose.xlu0.b32.cont [4/16] 0.0, 128
        %2267 = vxpose.xlu0.b32.cont [5/16] 0.0, 128
        %2268 = vxpose.xlu0.b32.cont [6/16] 0.0, 128
        %2269 = vxpose.xlu0.b32.cont [7/16] 0.0, 128
        %2270 = vxpose.xlu0.b32.cont [8/16] 0.0, 128
        %2271 = vxpose.xlu0.b32.cont [9/16] 0.0, 128
        %2272 = vxpose.xlu0.b32.cont [10/16] 0.0, 128
        %2273 = vxpose.xlu0.b32.cont [11/16] 0.0, 128
        %2274 = vxpose.xlu0.b32.cont [12/16] 0.0, 128
        %2275 = vxpose.xlu0.b32.cont [13/16] 0.0, 128
        %2276 = vxpose.xlu0.b32.cont [14/16] 0.0, 128
        %2277 = vxpose.xlu0.b32.cont [15/16] 0.0, 128
        %2278 = vxpose.xlu0.b32.end [16/16] 0.0, 128
        %v2279 = vpop.trf.xlu0
        %v2280 = vpop.trf.xlu0
        %v2281 = vpop.trf.xlu0
        %v2282 = vpop.trf.xlu0
        %v2283 = vpop.trf.xlu0
        %v2284 = vpop.trf.xlu0
        %v2285 = vpop.trf.xlu0
        %v2286 = vpop.trf.xlu0
        %v2287 = vpop.trf.xlu0
        %v2288 = vpop.trf.xlu0
        %v2289 = vpop.trf.xlu0
        %v2290 = vpop.trf.xlu0
        %v2291 = vpop.trf.xlu0
        %v2292 = vpop.trf.xlu0
        %v2293 = vpop.trf.xlu0
        %v2294 = vpop.trf.xlu0
        %2295 = vxpose.xlu0.b32.start [1/16] %v2203, 128
        %2296 = vxpose.xlu0.b32.cont [2/16] 0.0, 128
        %2297 = vxpose.xlu0.b32.cont [3/16] 0.0, 128
        %2298 = vxpose.xlu0.b32.cont [4/16] 0.0, 128
        %2299 = vxpose.xlu0.b32.cont [5/16] 0.0, 128
        %2300 = vxpose.xlu0.b32.cont [6/16] 0.0, 128
        %2301 = vxpose.xlu0.b32.cont [7/16] 0.0, 128
        %2302 = vxpose.xlu0.b32.cont [8/16] 0.0, 128
        %2303 = vxpose.xlu0.b32.cont [9/16] 0.0, 128
        %2304 = vxpose.xlu0.b32.cont [10/16] 0.0, 128
        %2305 = vxpose.xlu0.b32.cont [11/16] 0.0, 128
        %2306 = vxpose.xlu0.b32.cont [12/16] 0.0, 128
        %2307 = vxpose.xlu0.b32.cont [13/16] 0.0, 128
        %2308 = vxpose.xlu0.b32.cont [14/16] 0.0, 128
        %2309 = vxpose.xlu0.b32.cont [15/16] 0.0, 128
        %2310 = vxpose.xlu0.b32.end [16/16] 0.0, 128
        %v2311 = vpop.trf.xlu0
        %v2312 = vpop.trf.xlu0
        %v2313 = vpop.trf.xlu0
        %v2314 = vpop.trf.xlu0
        %v2315 = vpop.trf.xlu0
        %v2316 = vpop.trf.xlu0
        %v2317 = vpop.trf.xlu0
        %v2318 = vpop.trf.xlu0
        %v2319 = vpop.trf.xlu0
        %v2320 = vpop.trf.xlu0
        %v2321 = vpop.trf.xlu0
        %v2322 = vpop.trf.xlu0
        %v2323 = vpop.trf.xlu0
        %v2324 = vpop.trf.xlu0
        %v2325 = vpop.trf.xlu0
        %v2326 = vpop.trf.xlu0
        %2327 = vxpose.xlu0.b32.start [1/16] %v2208, 128
        %2328 = vxpose.xlu0.b32.cont [2/16] 0.0, 128
        %2329 = vxpose.xlu0.b32.cont [3/16] 0.0, 128
        %2330 = vxpose.xlu0.b32.cont [4/16] 0.0, 128
        %2331 = vxpose.xlu0.b32.cont [5/16] 0.0, 128
        %2332 = vxpose.xlu0.b32.cont [6/16] 0.0, 128
        %2333 = vxpose.xlu0.b32.cont [7/16] 0.0, 128
        %2334 = vxpose.xlu0.b32.cont [8/16] 0.0, 128
        %2335 = vxpose.xlu0.b32.cont [9/16] 0.0, 128
        %2336 = vxpose.xlu0.b32.cont [10/16] 0.0, 128
        %2337 = vxpose.xlu0.b32.cont [11/16] 0.0, 128
        %2338 = vxpose.xlu0.b32.cont [12/16] 0.0, 128
        %2339 = vxpose.xlu0.b32.cont [13/16] 0.0, 128
        %2340 = vxpose.xlu0.b32.cont [14/16] 0.0, 128
        %2341 = vxpose.xlu0.b32.cont [15/16] 0.0, 128
        %2342 = vxpose.xlu0.b32.end [16/16] 0.0, 128
        %v2343 = vpop.trf.xlu0
        %v2344 = vpop.trf.xlu0
        %v2345 = vpop.trf.xlu0
        %v2346 = vpop.trf.xlu0
        %v2347 = vpop.trf.xlu0
        %v2348 = vpop.trf.xlu0
        %v2349 = vpop.trf.xlu0
        %v2350 = vpop.trf.xlu0
        %v2351 = vpop.trf.xlu0
        %v2352 = vpop.trf.xlu0
        %v2353 = vpop.trf.xlu0
        %v2354 = vpop.trf.xlu0
        %v2355 = vpop.trf.xlu0
        %v2356 = vpop.trf.xlu0
        %v2357 = vpop.trf.xlu0
        %v2358 = vpop.trf.xlu0
        %2359 = vxpose.xlu0.b32.start [1/16] %v2213, 128
        %2360 = vxpose.xlu0.b32.cont [2/16] 0.0, 128
        %2361 = vxpose.xlu0.b32.cont [3/16] 0.0, 128
        %2362 = vxpose.xlu0.b32.cont [4/16] 0.0, 128
        %2363 = vxpose.xlu0.b32.cont [5/16] 0.0, 128
        %2364 = vxpose.xlu0.b32.cont [6/16] 0.0, 128
        %2365 = vxpose.xlu0.b32.cont [7/16] 0.0, 128
        %2366 = vxpose.xlu0.b32.cont [8/16] 0.0, 128
        %2367 = vxpose.xlu0.b32.cont [9/16] 0.0, 128
        %2368 = vxpose.xlu0.b32.cont [10/16] 0.0, 128
        %2369 = vxpose.xlu0.b32.cont [11/16] 0.0, 128
        %2370 = vxpose.xlu0.b32.cont [12/16] 0.0, 128
        %2371 = vxpose.xlu0.b32.cont [13/16] 0.0, 128
        %2372 = vxpose.xlu0.b32.cont [14/16] 0.0, 128
        %2373 = vxpose.xlu0.b32.cont [15/16] 0.0, 128
        %2374 = vxpose.xlu0.b32.end [16/16] 0.0, 128
        %v2375 = vpop.trf.xlu0
        %v2376 = vpop.trf.xlu0
        %v2377 = vpop.trf.xlu0
        %v2378 = vpop.trf.xlu0
        %v2379 = vpop.trf.xlu0
        %v2380 = vpop.trf.xlu0
        %v2381 = vpop.trf.xlu0
        %v2382 = vpop.trf.xlu0
        %v2383 = vpop.trf.xlu0
        %v2384 = vpop.trf.xlu0
        %v2385 = vpop.trf.xlu0
        %v2386 = vpop.trf.xlu0
        %v2387 = vpop.trf.xlu0
        %v2388 = vpop.trf.xlu0
        %v2389 = vpop.trf.xlu0
        %v2390 = vpop.trf.xlu0
        %2391 = vxpose.xlu0.b32.start [1/16] %v2218, 128
        %2392 = vxpose.xlu0.b32.cont [2/16] 0.0, 128
        %2393 = vxpose.xlu0.b32.cont [3/16] 0.0, 128
        %2394 = vxpose.xlu0.b32.cont [4/16] 0.0, 128
        %2395 = vxpose.xlu0.b32.cont [5/16] 0.0, 128
        %2396 = vxpose.xlu0.b32.cont [6/16] 0.0, 128
        %2397 = vxpose.xlu0.b32.cont [7/16] 0.0, 128
        %2398 = vxpose.xlu0.b32.cont [8/16] 0.0, 128
        %2399 = vxpose.xlu0.b32.cont [9/16] 0.0, 128
        %2400 = vxpose.xlu0.b32.cont [10/16] 0.0, 128
        %2401 = vxpose.xlu0.b32.cont [11/16] 0.0, 128
        %2402 = vxpose.xlu0.b32.cont [12/16] 0.0, 128
        %2403 = vxpose.xlu0.b32.cont [13/16] 0.0, 128
        %2404 = vxpose.xlu0.b32.cont [14/16] 0.0, 128
        %2405 = vxpose.xlu0.b32.cont [15/16] 0.0, 128
        %2406 = vxpose.xlu0.b32.end [16/16] 0.0, 128
        %v2407 = vpop.trf.xlu0
        %v2408 = vpop.trf.xlu0
        %v2409 = vpop.trf.xlu0
        %v2410 = vpop.trf.xlu0
        %v2411 = vpop.trf.xlu0
        %v2412 = vpop.trf.xlu0
        %v2413 = vpop.trf.xlu0
        %v2414 = vpop.trf.xlu0
        %v2415 = vpop.trf.xlu0
        %v2416 = vpop.trf.xlu0
        %v2417 = vpop.trf.xlu0
        %v2418 = vpop.trf.xlu0
        %v2419 = vpop.trf.xlu0
        %v2420 = vpop.trf.xlu0
        %v2421 = vpop.trf.xlu0
        %v2422 = vpop.trf.xlu0
        %2423 = vxpose.xlu0.b32.start [1/16] %v2223, 128
        %2424 = vxpose.xlu0.b32.cont [2/16] 0.0, 128
        %2425 = vxpose.xlu0.b32.cont [3/16] 0.0, 128
        %2426 = vxpose.xlu0.b32.cont [4/16] 0.0, 128
        %2427 = vxpose.xlu0.b32.cont [5/16] 0.0, 128
        %2428 = vxpose.xlu0.b32.cont [6/16] 0.0, 128
        %2429 = vxpose.xlu0.b32.cont [7/16] 0.0, 128
        %2430 = vxpose.xlu0.b32.cont [8/16] 0.0, 128
        %2431 = vxpose.xlu0.b32.cont [9/16] 0.0, 128
        %2432 = vxpose.xlu0.b32.cont [10/16] 0.0, 128
        %2433 = vxpose.xlu0.b32.cont [11/16] 0.0, 128
        %2434 = vxpose.xlu0.b32.cont [12/16] 0.0, 128
        %2435 = vxpose.xlu0.b32.cont [13/16] 0.0, 128
        %2436 = vxpose.xlu0.b32.cont [14/16] 0.0, 128
        %2437 = vxpose.xlu0.b32.cont [15/16] 0.0, 128
        %2438 = vxpose.xlu0.b32.end [16/16] 0.0, 128
        %v2439 = vpop.trf.xlu0
        %v2440 = vpop.trf.xlu0
        %v2441 = vpop.trf.xlu0
        %v2442 = vpop.trf.xlu0
        %v2443 = vpop.trf.xlu0
        %v2444 = vpop.trf.xlu0
        %v2445 = vpop.trf.xlu0
        %v2446 = vpop.trf.xlu0
        %v2447 = vpop.trf.xlu0
        %v2448 = vpop.trf.xlu0
        %v2449 = vpop.trf.xlu0
        %v2450 = vpop.trf.xlu0
        %v2451 = vpop.trf.xlu0
        %v2452 = vpop.trf.xlu0
        %v2453 = vpop.trf.xlu0
        %v2454 = vpop.trf.xlu0
        %2455 = vxpose.xlu0.b32.start [1/16] %v2228, 128
        %2456 = vxpose.xlu0.b32.cont [2/16] 0.0, 128
        %2457 = vxpose.xlu0.b32.cont [3/16] 0.0, 128
        %2458 = vxpose.xlu0.b32.cont [4/16] 0.0, 128
        %2459 = vxpose.xlu0.b32.cont [5/16] 0.0, 128
        %2460 = vxpose.xlu0.b32.cont [6/16] 0.0, 128
        %2461 = vxpose.xlu0.b32.cont [7/16] 0.0, 128
        %2462 = vxpose.xlu0.b32.cont [8/16] 0.0, 128
        %2463 = vxpose.xlu0.b32.cont [9/16] 0.0, 128
        %2464 = vxpose.xlu0.b32.cont [10/16] 0.0, 128
        %2465 = vxpose.xlu0.b32.cont [11/16] 0.0, 128
        %2466 = vxpose.xlu0.b32.cont [12/16] 0.0, 128
        %2467 = vxpose.xlu0.b32.cont [13/16] 0.0, 128
        %2468 = vxpose.xlu0.b32.cont [14/16] 0.0, 128
        %2469 = vxpose.xlu0.b32.cont [15/16] 0.0, 128
        %2470 = vxpose.xlu0.b32.end [16/16] 0.0, 128
        %v2471 = vpop.trf.xlu0
        %v2472 = vpop.trf.xlu0
        %v2473 = vpop.trf.xlu0
        %v2474 = vpop.trf.xlu0
        %v2475 = vpop.trf.xlu0
        %v2476 = vpop.trf.xlu0
        %v2477 = vpop.trf.xlu0
        %v2478 = vpop.trf.xlu0
        %v2479 = vpop.trf.xlu0
        %v2480 = vpop.trf.xlu0
        %v2481 = vpop.trf.xlu0
        %v2482 = vpop.trf.xlu0
        %v2483 = vpop.trf.xlu0
        %v2484 = vpop.trf.xlu0
        %v2485 = vpop.trf.xlu0
        %v2486 = vpop.trf.xlu0
        %v2487 = vcombine.low %v2247, %v2311
        %v2488 = vcombine.high %v2247, %v2311
        %v2490 = vunpack.c.l.s4 1983009808
        %v2491 = vunpack.c.0.s8 %v2490
        %v2492 = vlaneseq
        %v2493 = vshrl.u32 %v2492, 7
        %v2494 = vsub.s32 %v2491, %v2493
        %v2495 = vrot.slane %v2487, %v2494
        %v2497 = vunpack.c.l.s4 1983009808
        %v2498 = vunpack.c.0.s8 %v2497
        %v2499 = vlaneseq
        %v2500 = vshrl.u32 %v2499, 7
        %v2501 = vsub.s32 %v2498, %v2500
        %v2502 = vrot.slane %v2488, %v2501
        %v2503 = vcombine.low %v2279, %v2343
        %v2504 = vcombine.high %v2279, %v2343
        %v2506 = vunpack.c.l.s4 1983009808
        %v2507 = vunpack.c.0.s8 %v2506
        %v2508 = vlaneseq
        %v2509 = vshrl.u32 %v2508, 7
        %v2510 = vsub.s32 %v2507, %v2509
        %v2511 = vrot.slane %v2503, %v2510
        %v2513 = vunpack.c.l.s4 1983009808
        %v2514 = vunpack.c.0.s8 %v2513
        %v2515 = vlaneseq
        %v2516 = vshrl.u32 %v2515, 7
        %v2517 = vsub.s32 %v2514, %v2516
        %v2518 = vrot.slane %v2504, %v2517
        %v2519 = vcombine.low %v2375, %v2439
        %v2520 = vcombine.high %v2375, %v2439
        %v2522 = vunpack.c.l.s4 1983009808
        %v2523 = vunpack.c.0.s8 %v2522
        %v2524 = vlaneseq
        %v2525 = vshrl.u32 %v2524, 7
        %v2526 = vsub.s32 %v2523, %v2525
        %v2527 = vrot.slane %v2519, %v2526
        %v2529 = vunpack.c.l.s4 1983009808
        %v2530 = vunpack.c.0.s8 %v2529
        %v2531 = vlaneseq
        %v2532 = vshrl.u32 %v2531, 7
        %v2533 = vsub.s32 %v2530, %v2532
        %v2534 = vrot.slane %v2520, %v2533
        %v2535 = vcombine.low %v2407, %v2471
        %v2536 = vcombine.high %v2407, %v2471
        %v2538 = vunpack.c.l.s4 1983009808
        %v2539 = vunpack.c.0.s8 %v2538
        %v2540 = vlaneseq
        %v2541 = vshrl.u32 %v2540, 7
        %v2542 = vsub.s32 %v2539, %v2541
        %v2543 = vrot.slane %v2535, %v2542
        %v2545 = vunpack.c.l.s4 1983009808
        %v2546 = vunpack.c.0.s8 %v2545
        %v2547 = vlaneseq
        %v2548 = vshrl.u32 %v2547, 7
        %v2549 = vsub.s32 %v2546, %v2548
        %v2550 = vrot.slane %v2536, %v2549
        %v2551 = vcombine.low %v2495, %v2511
        %v2552 = vcombine.high %v2495, %v2511
        %v2554 = vunpack.c.l.s4 1934713408
        %v2555 = vunpack.c.0.s8 %v2554
        %v2556 = vlaneseq
        %v2557 = vshrl.u32 %v2556, 7
        %v2558 = vsub.s32 %v2555, %v2557
        %v2559 = vrot.slane %v2551, %v2558
        %v2561 = vunpack.c.l.s4 1934713408
        %v2562 = vunpack.c.0.s8 %v2561
        %v2563 = vlaneseq
        %v2564 = vshrl.u32 %v2563, 7
        %v2565 = vsub.s32 %v2562, %v2564
        %v2566 = vrot.slane %v2552, %v2565
        %v2567 = vcombine.low %v2502, %v2518
        %v2568 = vcombine.high %v2502, %v2518
        %v2570 = vunpack.c.l.s4 1934713408
        %v2571 = vunpack.c.0.s8 %v2570
        %v2572 = vlaneseq
        %v2573 = vshrl.u32 %v2572, 7
        %v2574 = vsub.s32 %v2571, %v2573
        %v2575 = vrot.slane %v2567, %v2574
        %v2577 = vunpack.c.l.s4 1934713408
        %v2578 = vunpack.c.0.s8 %v2577
        %v2579 = vlaneseq
        %v2580 = vshrl.u32 %v2579, 7
        %v2581 = vsub.s32 %v2578, %v2580
        %v2582 = vrot.slane %v2568, %v2581
        %v2583 = vcombine.low %v2527, %v2543
        %v2584 = vcombine.high %v2527, %v2543
        %v2586 = vunpack.c.l.s4 1934713408
        %v2587 = vunpack.c.0.s8 %v2586
        %v2588 = vlaneseq
        %v2589 = vshrl.u32 %v2588, 7
        %v2590 = vsub.s32 %v2587, %v2589
        %v2591 = vrot.slane %v2583, %v2590
        %v2593 = vunpack.c.l.s4 1934713408
        %v2594 = vunpack.c.0.s8 %v2593
        %v2595 = vlaneseq
        %v2596 = vshrl.u32 %v2595, 7
        %v2597 = vsub.s32 %v2594, %v2596
        %v2598 = vrot.slane %v2584, %v2597
        %v2599 = vcombine.low %v2534, %v2550
        %v2600 = vcombine.high %v2534, %v2550
        %v2602 = vunpack.c.l.s4 1934713408
        %v2603 = vunpack.c.0.s8 %v2602
        %v2604 = vlaneseq
        %v2605 = vshrl.u32 %v2604, 7
        %v2606 = vsub.s32 %v2603, %v2605
        %v2607 = vrot.slane %v2599, %v2606
        %v2609 = vunpack.c.l.s4 1934713408
        %v2610 = vunpack.c.0.s8 %v2609
        %v2611 = vlaneseq
        %v2612 = vshrl.u32 %v2611, 7
        %v2613 = vsub.s32 %v2610, %v2612
        %v2614 = vrot.slane %v2600, %v2613
        %v2615 = vcombine.low %v2559, %v2591
        %v2616 = vcombine.high %v2559, %v2591
        %v2617 = vcombine.low %v2566, %v2598
        %v2618 = vcombine.high %v2566, %v2598
        %v2619 = vcombine.low %v2575, %v2607
        %v2620 = vcombine.high %v2575, %v2607
        %v2621 = vcombine.low %v2582, %v2614
        %v2622 = vcombine.high %v2582, %v2614
        %v2623 = vcombine.low %v2248, %v2312
        %v2624 = vcombine.high %v2248, %v2312
        %v2626 = vunpack.c.l.s4 1983009808
        %v2627 = vunpack.c.0.s8 %v2626
        %v2628 = vlaneseq
        %v2629 = vshrl.u32 %v2628, 7
        %v2630 = vsub.s32 %v2627, %v2629
        %v2631 = vrot.slane %v2623, %v2630
        %v2633 = vunpack.c.l.s4 1983009808
        %v2634 = vunpack.c.0.s8 %v2633
        %v2635 = vlaneseq
        %v2636 = vshrl.u32 %v2635, 7
        %v2637 = vsub.s32 %v2634, %v2636
        %v2638 = vrot.slane %v2624, %v2637
        %v2639 = vcombine.low %v2280, %v2344
        %v2640 = vcombine.high %v2280, %v2344
        %v2642 = vunpack.c.l.s4 1983009808
        %v2643 = vunpack.c.0.s8 %v2642
        %v2644 = vlaneseq
        %v2645 = vshrl.u32 %v2644, 7
        %v2646 = vsub.s32 %v2643, %v2645
        %v2647 = vrot.slane %v2639, %v2646
        %v2649 = vunpack.c.l.s4 1983009808
        %v2650 = vunpack.c.0.s8 %v2649
        %v2651 = vlaneseq
        %v2652 = vshrl.u32 %v2651, 7
        %v2653 = vsub.s32 %v2650, %v2652
        %v2654 = vrot.slane %v2640, %v2653
        %v2655 = vcombine.low %v2376, %v2440
        %v2656 = vcombine.high %v2376, %v2440
        %v2658 = vunpack.c.l.s4 1983009808
        %v2659 = vunpack.c.0.s8 %v2658
        %v2660 = vlaneseq
        %v2661 = vshrl.u32 %v2660, 7
        %v2662 = vsub.s32 %v2659, %v2661
        %v2663 = vrot.slane %v2655, %v2662
        %v2665 = vunpack.c.l.s4 1983009808
        %v2666 = vunpack.c.0.s8 %v2665
        %v2667 = vlaneseq
        %v2668 = vshrl.u32 %v2667, 7
        %v2669 = vsub.s32 %v2666, %v2668
        %v2670 = vrot.slane %v2656, %v2669
        %v2671 = vcombine.low %v2408, %v2472
        %v2672 = vcombine.high %v2408, %v2472
        %v2674 = vunpack.c.l.s4 1983009808
        %v2675 = vunpack.c.0.s8 %v2674
        %v2676 = vlaneseq
        %v2677 = vshrl.u32 %v2676, 7
        %v2678 = vsub.s32 %v2675, %v2677
        %v2679 = vrot.slane %v2671, %v2678
        %v2681 = vunpack.c.l.s4 1983009808
        %v2682 = vunpack.c.0.s8 %v2681
        %v2683 = vlaneseq
        %v2684 = vshrl.u32 %v2683, 7
        %v2685 = vsub.s32 %v2682, %v2684
        %v2686 = vrot.slane %v2672, %v2685
        %v2687 = vcombine.low %v2631, %v2647
        %v2688 = vcombine.high %v2631, %v2647
        %v2690 = vunpack.c.l.s4 1934713408
        %v2691 = vunpack.c.0.s8 %v2690
        %v2692 = vlaneseq
        %v2693 = vshrl.u32 %v2692, 7
        %v2694 = vsub.s32 %v2691, %v2693
        %v2695 = vrot.slane %v2687, %v2694
        %v2697 = vunpack.c.l.s4 1934713408
        %v2698 = vunpack.c.0.s8 %v2697
        %v2699 = vlaneseq
        %v2700 = vshrl.u32 %v2699, 7
        %v2701 = vsub.s32 %v2698, %v2700
        %v2702 = vrot.slane %v2688, %v2701
        %v2703 = vcombine.low %v2638, %v2654
        %v2704 = vcombine.high %v2638, %v2654
        %v2706 = vunpack.c.l.s4 1934713408
        %v2707 = vunpack.c.0.s8 %v2706
        %v2708 = vlaneseq
        %v2709 = vshrl.u32 %v2708, 7
        %v2710 = vsub.s32 %v2707, %v2709
        %v2711 = vrot.slane %v2703, %v2710
        %v2713 = vunpack.c.l.s4 1934713408
        %v2714 = vunpack.c.0.s8 %v2713
        %v2715 = vlaneseq
        %v2716 = vshrl.u32 %v2715, 7
        %v2717 = vsub.s32 %v2714, %v2716
        %v2718 = vrot.slane %v2704, %v2717
        %v2719 = vcombine.low %v2663, %v2679
        %v2720 = vcombine.high %v2663, %v2679
        %v2722 = vunpack.c.l.s4 1934713408
        %v2723 = vunpack.c.0.s8 %v2722
        %v2724 = vlaneseq
        %v2725 = vshrl.u32 %v2724, 7
        %v2726 = vsub.s32 %v2723, %v2725
        %v2727 = vrot.slane %v2719, %v2726
        %v2729 = vunpack.c.l.s4 1934713408
        %v2730 = vunpack.c.0.s8 %v2729
        %v2731 = vlaneseq
        %v2732 = vshrl.u32 %v2731, 7
        %v2733 = vsub.s32 %v2730, %v2732
        %v2734 = vrot.slane %v2720, %v2733
        %v2735 = vcombine.low %v2670, %v2686
        %v2736 = vcombine.high %v2670, %v2686
        %v2738 = vunpack.c.l.s4 1934713408
        %v2739 = vunpack.c.0.s8 %v2738
        %v2740 = vlaneseq
        %v2741 = vshrl.u32 %v2740, 7
        %v2742 = vsub.s32 %v2739, %v2741
        %v2743 = vrot.slane %v2735, %v2742
        %v2745 = vunpack.c.l.s4 1934713408
        %v2746 = vunpack.c.0.s8 %v2745
        %v2747 = vlaneseq
        %v2748 = vshrl.u32 %v2747, 7
        %v2749 = vsub.s32 %v2746, %v2748
        %v2750 = vrot.slane %v2736, %v2749
        %v2751 = vcombine.low %v2695, %v2727
        %v2752 = vcombine.high %v2695, %v2727
        %v2753 = vcombine.low %v2702, %v2734
        %v2754 = vcombine.high %v2702, %v2734
        %v2755 = vcombine.low %v2711, %v2743
        %v2756 = vcombine.high %v2711, %v2743
        %v2757 = vcombine.low %v2718, %v2750
        %v2758 = vcombine.high %v2718, %v2750
        %v2759 = vcombine.low %v2249, %v2313
        %v2760 = vcombine.high %v2249, %v2313
        %v2762 = vunpack.c.l.s4 1983009808
        %v2763 = vunpack.c.0.s8 %v2762
        %v2764 = vlaneseq
        %v2765 = vshrl.u32 %v2764, 7
        %v2766 = vsub.s32 %v2763, %v2765
        %v2767 = vrot.slane %v2759, %v2766
        %v2769 = vunpack.c.l.s4 1983009808
        %v2770 = vunpack.c.0.s8 %v2769
        %v2771 = vlaneseq
        %v2772 = vshrl.u32 %v2771, 7
        %v2773 = vsub.s32 %v2770, %v2772
        %v2774 = vrot.slane %v2760, %v2773
        %v2775 = vcombine.low %v2281, %v2345
        %v2776 = vcombine.high %v2281, %v2345
        %v2778 = vunpack.c.l.s4 1983009808
        %v2779 = vunpack.c.0.s8 %v2778
        %v2780 = vlaneseq
        %v2781 = vshrl.u32 %v2780, 7
        %v2782 = vsub.s32 %v2779, %v2781
        %v2783 = vrot.slane %v2775, %v2782
        %v2785 = vunpack.c.l.s4 1983009808
        %v2786 = vunpack.c.0.s8 %v2785
        %v2787 = vlaneseq
        %v2788 = vshrl.u32 %v2787, 7
        %v2789 = vsub.s32 %v2786, %v2788
        %v2790 = vrot.slane %v2776, %v2789
        %v2791 = vcombine.low %v2377, %v2441
        %v2792 = vcombine.high %v2377, %v2441
        %v2794 = vunpack.c.l.s4 1983009808
        %v2795 = vunpack.c.0.s8 %v2794
        %v2796 = vlaneseq
        %v2797 = vshrl.u32 %v2796, 7
        %v2798 = vsub.s32 %v2795, %v2797
        %v2799 = vrot.slane %v2791, %v2798
        %v2801 = vunpack.c.l.s4 1983009808
        %v2802 = vunpack.c.0.s8 %v2801
        %v2803 = vlaneseq
        %v2804 = vshrl.u32 %v2803, 7
        %v2805 = vsub.s32 %v2802, %v2804
        %v2806 = vrot.slane %v2792, %v2805
        %v2807 = vcombine.low %v2409, %v2473
        %v2808 = vcombine.high %v2409, %v2473
        %v2810 = vunpack.c.l.s4 1983009808
        %v2811 = vunpack.c.0.s8 %v2810
        %v2812 = vlaneseq
        %v2813 = vshrl.u32 %v2812, 7
        %v2814 = vsub.s32 %v2811, %v2813
        %v2815 = vrot.slane %v2807, %v2814
        %v2817 = vunpack.c.l.s4 1983009808
        %v2818 = vunpack.c.0.s8 %v2817
        %v2819 = vlaneseq
        %v2820 = vshrl.u32 %v2819, 7
        %v2821 = vsub.s32 %v2818, %v2820
        %v2822 = vrot.slane %v2808, %v2821
        %v2823 = vcombine.low %v2767, %v2783
        %v2824 = vcombine.high %v2767, %v2783
        %v2826 = vunpack.c.l.s4 1934713408
        %v2827 = vunpack.c.0.s8 %v2826
        %v2828 = vlaneseq
        %v2829 = vshrl.u32 %v2828, 7
        %v2830 = vsub.s32 %v2827, %v2829
        %v2831 = vrot.slane %v2823, %v2830
        %v2833 = vunpack.c.l.s4 1934713408
        %v2834 = vunpack.c.0.s8 %v2833
        %v2835 = vlaneseq
        %v2836 = vshrl.u32 %v2835, 7
        %v2837 = vsub.s32 %v2834, %v2836
        %v2838 = vrot.slane %v2824, %v2837
        %v2839 = vcombine.low %v2774, %v2790
        %v2840 = vcombine.high %v2774, %v2790
        %v2842 = vunpack.c.l.s4 1934713408
        %v2843 = vunpack.c.0.s8 %v2842
        %v2844 = vlaneseq
        %v2845 = vshrl.u32 %v2844, 7
        %v2846 = vsub.s32 %v2843, %v2845
        %v2847 = vrot.slane %v2839, %v2846
        %v2849 = vunpack.c.l.s4 1934713408
        %v2850 = vunpack.c.0.s8 %v2849
        %v2851 = vlaneseq
        %v2852 = vshrl.u32 %v2851, 7
        %v2853 = vsub.s32 %v2850, %v2852
        %v2854 = vrot.slane %v2840, %v2853
        %v2855 = vcombine.low %v2799, %v2815
        %v2856 = vcombine.high %v2799, %v2815
        %v2858 = vunpack.c.l.s4 1934713408
        %v2859 = vunpack.c.0.s8 %v2858
        %v2860 = vlaneseq
        %v2861 = vshrl.u32 %v2860, 7
        %v2862 = vsub.s32 %v2859, %v2861
        %v2863 = vrot.slane %v2855, %v2862
        %v2865 = vunpack.c.l.s4 1934713408
        %v2866 = vunpack.c.0.s8 %v2865
        %v2867 = vlaneseq
        %v2868 = vshrl.u32 %v2867, 7
        %v2869 = vsub.s32 %v2866, %v2868
        %v2870 = vrot.slane %v2856, %v2869
        %v2871 = vcombine.low %v2806, %v2822
        %v2872 = vcombine.high %v2806, %v2822
        %v2874 = vunpack.c.l.s4 1934713408
        %v2875 = vunpack.c.0.s8 %v2874
        %v2876 = vlaneseq
        %v2877 = vshrl.u32 %v2876, 7
        %v2878 = vsub.s32 %v2875, %v2877
        %v2879 = vrot.slane %v2871, %v2878
        %v2881 = vunpack.c.l.s4 1934713408
        %v2882 = vunpack.c.0.s8 %v2881
        %v2883 = vlaneseq
        %v2884 = vshrl.u32 %v2883, 7
        %v2885 = vsub.s32 %v2882, %v2884
        %v2886 = vrot.slane %v2872, %v2885
        %v2887 = vcombine.low %v2831, %v2863
        %v2888 = vcombine.high %v2831, %v2863
        %v2889 = vcombine.low %v2838, %v2870
        %v2890 = vcombine.high %v2838, %v2870
        %v2891 = vcombine.low %v2847, %v2879
        %v2892 = vcombine.high %v2847, %v2879
        %v2893 = vcombine.low %v2854, %v2886
        %v2894 = vcombine.high %v2854, %v2886
        %v2895 = vcombine.low %v2250, %v2314
        %v2896 = vcombine.high %v2250, %v2314
        %v2898 = vunpack.c.l.s4 1983009808
        %v2899 = vunpack.c.0.s8 %v2898
        %v2900 = vlaneseq
        %v2901 = vshrl.u32 %v2900, 7
        %v2902 = vsub.s32 %v2899, %v2901
        %v2903 = vrot.slane %v2895, %v2902
        %v2905 = vunpack.c.l.s4 1983009808
        %v2906 = vunpack.c.0.s8 %v2905
        %v2907 = vlaneseq
        %v2908 = vshrl.u32 %v2907, 7
        %v2909 = vsub.s32 %v2906, %v2908
        %v2910 = vrot.slane %v2896, %v2909
        %v2911 = vcombine.low %v2282, %v2346
        %v2912 = vcombine.high %v2282, %v2346
        %v2914 = vunpack.c.l.s4 1983009808
        %v2915 = vunpack.c.0.s8 %v2914
        %v2916 = vlaneseq
        %v2917 = vshrl.u32 %v2916, 7
        %v2918 = vsub.s32 %v2915, %v2917
        %v2919 = vrot.slane %v2911, %v2918
        %v2921 = vunpack.c.l.s4 1983009808
        %v2922 = vunpack.c.0.s8 %v2921
        %v2923 = vlaneseq
        %v2924 = vshrl.u32 %v2923, 7
        %v2925 = vsub.s32 %v2922, %v2924
        %v2926 = vrot.slane %v2912, %v2925
        %v2927 = vcombine.low %v2378, %v2442
        %v2928 = vcombine.high %v2378, %v2442
        %v2930 = vunpack.c.l.s4 1983009808
        %v2931 = vunpack.c.0.s8 %v2930
        %v2932 = vlaneseq
        %v2933 = vshrl.u32 %v2932, 7
        %v2934 = vsub.s32 %v2931, %v2933
        %v2935 = vrot.slane %v2927, %v2934
        %v2937 = vunpack.c.l.s4 1983009808
        %v2938 = vunpack.c.0.s8 %v2937
        %v2939 = vlaneseq
        %v2940 = vshrl.u32 %v2939, 7
        %v2941 = vsub.s32 %v2938, %v2940
        %v2942 = vrot.slane %v2928, %v2941
        %v2943 = vcombine.low %v2410, %v2474
        %v2944 = vcombine.high %v2410, %v2474
        %v2946 = vunpack.c.l.s4 1983009808
        %v2947 = vunpack.c.0.s8 %v2946
        %v2948 = vlaneseq
        %v2949 = vshrl.u32 %v2948, 7
        %v2950 = vsub.s32 %v2947, %v2949
        %v2951 = vrot.slane %v2943, %v2950
        %v2953 = vunpack.c.l.s4 1983009808
        %v2954 = vunpack.c.0.s8 %v2953
        %v2955 = vlaneseq
        %v2956 = vshrl.u32 %v2955, 7
        %v2957 = vsub.s32 %v2954, %v2956
        %v2958 = vrot.slane %v2944, %v2957
        %v2959 = vcombine.low %v2903, %v2919
        %v2960 = vcombine.high %v2903, %v2919
        %v2962 = vunpack.c.l.s4 1934713408
        %v2963 = vunpack.c.0.s8 %v2962
        %v2964 = vlaneseq
        %v2965 = vshrl.u32 %v2964, 7
        %v2966 = vsub.s32 %v2963, %v2965
        %v2967 = vrot.slane %v2959, %v2966
        %v2969 = vunpack.c.l.s4 1934713408
        %v2970 = vunpack.c.0.s8 %v2969
        %v2971 = vlaneseq
        %v2972 = vshrl.u32 %v2971, 7
        %v2973 = vsub.s32 %v2970, %v2972
        %v2974 = vrot.slane %v2960, %v2973
        %v2975 = vcombine.low %v2910, %v2926
        %v2976 = vcombine.high %v2910, %v2926
        %v2978 = vunpack.c.l.s4 1934713408
        %v2979 = vunpack.c.0.s8 %v2978
        %v2980 = vlaneseq
        %v2981 = vshrl.u32 %v2980, 7
        %v2982 = vsub.s32 %v2979, %v2981
        %v2983 = vrot.slane %v2975, %v2982
        %v2985 = vunpack.c.l.s4 1934713408
        %v2986 = vunpack.c.0.s8 %v2985
        %v2987 = vlaneseq
        %v2988 = vshrl.u32 %v2987, 7
        %v2989 = vsub.s32 %v2986, %v2988
        %v2990 = vrot.slane %v2976, %v2989
        %v2991 = vcombine.low %v2935, %v2951
        %v2992 = vcombine.high %v2935, %v2951
        %v2994 = vunpack.c.l.s4 1934713408
        %v2995 = vunpack.c.0.s8 %v2994
        %v2996 = vlaneseq
        %v2997 = vshrl.u32 %v2996, 7
        %v2998 = vsub.s32 %v2995, %v2997
        %v2999 = vrot.slane %v2991, %v2998
        %v3001 = vunpack.c.l.s4 1934713408
        %v3002 = vunpack.c.0.s8 %v3001
        %v3003 = vlaneseq
        %v3004 = vshrl.u32 %v3003, 7
        %v3005 = vsub.s32 %v3002, %v3004
        %v3006 = vrot.slane %v2992, %v3005
        %v3007 = vcombine.low %v2942, %v2958
        %v3008 = vcombine.high %v2942, %v2958
        %v3010 = vunpack.c.l.s4 1934713408
        %v3011 = vunpack.c.0.s8 %v3010
        %v3012 = vlaneseq
        %v3013 = vshrl.u32 %v3012, 7
        %v3014 = vsub.s32 %v3011, %v3013
        %v3015 = vrot.slane %v3007, %v3014
        %v3017 = vunpack.c.l.s4 1934713408
        %v3018 = vunpack.c.0.s8 %v3017
        %v3019 = vlaneseq
        %v3020 = vshrl.u32 %v3019, 7
        %v3021 = vsub.s32 %v3018, %v3020
        %v3022 = vrot.slane %v3008, %v3021
        %v3023 = vcombine.low %v2967, %v2999
        %v3024 = vcombine.high %v2967, %v2999
        %v3025 = vcombine.low %v2974, %v3006
        %v3026 = vcombine.high %v2974, %v3006
        %v3027 = vcombine.low %v2983, %v3015
        %v3028 = vcombine.high %v2983, %v3015
        %v3029 = vcombine.low %v2990, %v3022
        %v3030 = vcombine.high %v2990, %v3022
        %v3031 = vcombine.low %v2251, %v2315
        %v3032 = vcombine.high %v2251, %v2315
        %v3034 = vunpack.c.l.s4 1983009808
        %v3035 = vunpack.c.0.s8 %v3034
        %v3036 = vlaneseq
        %v3037 = vshrl.u32 %v3036, 7
        %v3038 = vsub.s32 %v3035, %v3037
        %v3039 = vrot.slane %v3031, %v3038
        %v3041 = vunpack.c.l.s4 1983009808
        %v3042 = vunpack.c.0.s8 %v3041
        %v3043 = vlaneseq
        %v3044 = vshrl.u32 %v3043, 7
        %v3045 = vsub.s32 %v3042, %v3044
        %v3046 = vrot.slane %v3032, %v3045
        %v3047 = vcombine.low %v2283, %v2347
        %v3048 = vcombine.high %v2283, %v2347
        %v3050 = vunpack.c.l.s4 1983009808
        %v3051 = vunpack.c.0.s8 %v3050
        %v3052 = vlaneseq
        %v3053 = vshrl.u32 %v3052, 7
        %v3054 = vsub.s32 %v3051, %v3053
        %v3055 = vrot.slane %v3047, %v3054
        %v3057 = vunpack.c.l.s4 1983009808
        %v3058 = vunpack.c.0.s8 %v3057
        %v3059 = vlaneseq
        %v3060 = vshrl.u32 %v3059, 7
        %v3061 = vsub.s32 %v3058, %v3060
        %v3062 = vrot.slane %v3048, %v3061
        %v3063 = vcombine.low %v2379, %v2443
        %v3064 = vcombine.high %v2379, %v2443
        %v3066 = vunpack.c.l.s4 1983009808
        %v3067 = vunpack.c.0.s8 %v3066
        %v3068 = vlaneseq
        %v3069 = vshrl.u32 %v3068, 7
        %v3070 = vsub.s32 %v3067, %v3069
        %v3071 = vrot.slane %v3063, %v3070
        %v3073 = vunpack.c.l.s4 1983009808
        %v3074 = vunpack.c.0.s8 %v3073
        %v3075 = vlaneseq
        %v3076 = vshrl.u32 %v3075, 7
        %v3077 = vsub.s32 %v3074, %v3076
        %v3078 = vrot.slane %v3064, %v3077
        %v3079 = vcombine.low %v2411, %v2475
        %v3080 = vcombine.high %v2411, %v2475
        %v3082 = vunpack.c.l.s4 1983009808
        %v3083 = vunpack.c.0.s8 %v3082
        %v3084 = vlaneseq
        %v3085 = vshrl.u32 %v3084, 7
        %v3086 = vsub.s32 %v3083, %v3085
        %v3087 = vrot.slane %v3079, %v3086
        %v3089 = vunpack.c.l.s4 1983009808
        %v3090 = vunpack.c.0.s8 %v3089
        %v3091 = vlaneseq
        %v3092 = vshrl.u32 %v3091, 7
        %v3093 = vsub.s32 %v3090, %v3092
        %v3094 = vrot.slane %v3080, %v3093
        %v3095 = vcombine.low %v3039, %v3055
        %v3096 = vcombine.high %v3039, %v3055
        %v3098 = vunpack.c.l.s4 1934713408
        %v3099 = vunpack.c.0.s8 %v3098
        %v3100 = vlaneseq
        %v3101 = vshrl.u32 %v3100, 7
        %v3102 = vsub.s32 %v3099, %v3101
        %v3103 = vrot.slane %v3095, %v3102
        %v3105 = vunpack.c.l.s4 1934713408
        %v3106 = vunpack.c.0.s8 %v3105
        %v3107 = vlaneseq
        %v3108 = vshrl.u32 %v3107, 7
        %v3109 = vsub.s32 %v3106, %v3108
        %v3110 = vrot.slane %v3096, %v3109
        %v3111 = vcombine.low %v3046, %v3062
        %v3112 = vcombine.high %v3046, %v3062
        %v3114 = vunpack.c.l.s4 1934713408
        %v3115 = vunpack.c.0.s8 %v3114
        %v3116 = vlaneseq
        %v3117 = vshrl.u32 %v3116, 7
        %v3118 = vsub.s32 %v3115, %v3117
        %v3119 = vrot.slane %v3111, %v3118
        %v3121 = vunpack.c.l.s4 1934713408
        %v3122 = vunpack.c.0.s8 %v3121
        %v3123 = vlaneseq
        %v3124 = vshrl.u32 %v3123, 7
        %v3125 = vsub.s32 %v3122, %v3124
        %v3126 = vrot.slane %v3112, %v3125
        %v3127 = vcombine.low %v3071, %v3087
        %v3128 = vcombine.high %v3071, %v3087
        %v3130 = vunpack.c.l.s4 1934713408
        %v3131 = vunpack.c.0.s8 %v3130
        %v3132 = vlaneseq
        %v3133 = vshrl.u32 %v3132, 7
        %v3134 = vsub.s32 %v3131, %v3133
        %v3135 = vrot.slane %v3127, %v3134
        %v3137 = vunpack.c.l.s4 1934713408
        %v3138 = vunpack.c.0.s8 %v3137
        %v3139 = vlaneseq
        %v3140 = vshrl.u32 %v3139, 7
        %v3141 = vsub.s32 %v3138, %v3140
        %v3142 = vrot.slane %v3128, %v3141
        %v3143 = vcombine.low %v3078, %v3094
        %v3144 = vcombine.high %v3078, %v3094
        %v3146 = vunpack.c.l.s4 1934713408
        %v3147 = vunpack.c.0.s8 %v3146
        %v3148 = vlaneseq
        %v3149 = vshrl.u32 %v3148, 7
        %v3150 = vsub.s32 %v3147, %v3149
        %v3151 = vrot.slane %v3143, %v3150
        %v3153 = vunpack.c.l.s4 1934713408
        %v3154 = vunpack.c.0.s8 %v3153
        %v3155 = vlaneseq
        %v3156 = vshrl.u32 %v3155, 7
        %v3157 = vsub.s32 %v3154, %v3156
        %v3158 = vrot.slane %v3144, %v3157
        %v3159 = vcombine.low %v3103, %v3135
        %v3160 = vcombine.high %v3103, %v3135
        %v3161 = vcombine.low %v3110, %v3142
        %v3162 = vcombine.high %v3110, %v3142
        %v3163 = vcombine.low %v3119, %v3151
        %v3164 = vcombine.high %v3119, %v3151
        %v3165 = vcombine.low %v3126, %v3158
        %v3166 = vcombine.high %v3126, %v3158
        %v3167 = vcombine.low %v2252, %v2316
        %v3168 = vcombine.high %v2252, %v2316
        %v3170 = vunpack.c.l.s4 1983009808
        %v3171 = vunpack.c.0.s8 %v3170
        %v3172 = vlaneseq
        %v3173 = vshrl.u32 %v3172, 7
        %v3174 = vsub.s32 %v3171, %v3173
        %v3175 = vrot.slane %v3167, %v3174
        %v3177 = vunpack.c.l.s4 1983009808
        %v3178 = vunpack.c.0.s8 %v3177
        %v3179 = vlaneseq
        %v3180 = vshrl.u32 %v3179, 7
        %v3181 = vsub.s32 %v3178, %v3180
        %v3182 = vrot.slane %v3168, %v3181
        %v3183 = vcombine.low %v2284, %v2348
        %v3184 = vcombine.high %v2284, %v2348
        %v3186 = vunpack.c.l.s4 1983009808
        %v3187 = vunpack.c.0.s8 %v3186
        %v3188 = vlaneseq
        %v3189 = vshrl.u32 %v3188, 7
        %v3190 = vsub.s32 %v3187, %v3189
        %v3191 = vrot.slane %v3183, %v3190
        %v3193 = vunpack.c.l.s4 1983009808
        %v3194 = vunpack.c.0.s8 %v3193
        %v3195 = vlaneseq
        %v3196 = vshrl.u32 %v3195, 7
        %v3197 = vsub.s32 %v3194, %v3196
        %v3198 = vrot.slane %v3184, %v3197
        %v3199 = vcombine.low %v2380, %v2444
        %v3200 = vcombine.high %v2380, %v2444
        %v3202 = vunpack.c.l.s4 1983009808
        %v3203 = vunpack.c.0.s8 %v3202
        %v3204 = vlaneseq
        %v3205 = vshrl.u32 %v3204, 7
        %v3206 = vsub.s32 %v3203, %v3205
        %v3207 = vrot.slane %v3199, %v3206
        %v3209 = vunpack.c.l.s4 1983009808
        %v3210 = vunpack.c.0.s8 %v3209
        %v3211 = vlaneseq
        %v3212 = vshrl.u32 %v3211, 7
        %v3213 = vsub.s32 %v3210, %v3212
        %v3214 = vrot.slane %v3200, %v3213
        %v3215 = vcombine.low %v2412, %v2476
        %v3216 = vcombine.high %v2412, %v2476
        %v3218 = vunpack.c.l.s4 1983009808
        %v3219 = vunpack.c.0.s8 %v3218
        %v3220 = vlaneseq
        %v3221 = vshrl.u32 %v3220, 7
        %v3222 = vsub.s32 %v3219, %v3221
        %v3223 = vrot.slane %v3215, %v3222
        %v3225 = vunpack.c.l.s4 1983009808
        %v3226 = vunpack.c.0.s8 %v3225
        %v3227 = vlaneseq
        %v3228 = vshrl.u32 %v3227, 7
        %v3229 = vsub.s32 %v3226, %v3228
        %v3230 = vrot.slane %v3216, %v3229
        %v3231 = vcombine.low %v3175, %v3191
        %v3232 = vcombine.high %v3175, %v3191
        %v3234 = vunpack.c.l.s4 1934713408
        %v3235 = vunpack.c.0.s8 %v3234
        %v3236 = vlaneseq
        %v3237 = vshrl.u32 %v3236, 7
        %v3238 = vsub.s32 %v3235, %v3237
        %v3239 = vrot.slane %v3231, %v3238
        %v3241 = vunpack.c.l.s4 1934713408
        %v3242 = vunpack.c.0.s8 %v3241
        %v3243 = vlaneseq
        %v3244 = vshrl.u32 %v3243, 7
        %v3245 = vsub.s32 %v3242, %v3244
        %v3246 = vrot.slane %v3232, %v3245
        %v3247 = vcombine.low %v3182, %v3198
        %v3248 = vcombine.high %v3182, %v3198
        %v3250 = vunpack.c.l.s4 1934713408
        %v3251 = vunpack.c.0.s8 %v3250
        %v3252 = vlaneseq
        %v3253 = vshrl.u32 %v3252, 7
        %v3254 = vsub.s32 %v3251, %v3253
        %v3255 = vrot.slane %v3247, %v3254
        %v3257 = vunpack.c.l.s4 1934713408
        %v3258 = vunpack.c.0.s8 %v3257
        %v3259 = vlaneseq
        %v3260 = vshrl.u32 %v3259, 7
        %v3261 = vsub.s32 %v3258, %v3260
        %v3262 = vrot.slane %v3248, %v3261
        %v3263 = vcombine.low %v3207, %v3223
        %v3264 = vcombine.high %v3207, %v3223
        %v3266 = vunpack.c.l.s4 1934713408
        %v3267 = vunpack.c.0.s8 %v3266
        %v3268 = vlaneseq
        %v3269 = vshrl.u32 %v3268, 7
        %v3270 = vsub.s32 %v3267, %v3269
        %v3271 = vrot.slane %v3263, %v3270
        %v3273 = vunpack.c.l.s4 1934713408
        %v3274 = vunpack.c.0.s8 %v3273
        %v3275 = vlaneseq
        %v3276 = vshrl.u32 %v3275, 7
        %v3277 = vsub.s32 %v3274, %v3276
        %v3278 = vrot.slane %v3264, %v3277
        %v3279 = vcombine.low %v3214, %v3230
        %v3280 = vcombine.high %v3214, %v3230
        %v3282 = vunpack.c.l.s4 1934713408
        %v3283 = vunpack.c.0.s8 %v3282
        %v3284 = vlaneseq
        %v3285 = vshrl.u32 %v3284, 7
        %v3286 = vsub.s32 %v3283, %v3285
        %v3287 = vrot.slane %v3279, %v3286
        %v3289 = vunpack.c.l.s4 1934713408
        %v3290 = vunpack.c.0.s8 %v3289
        %v3291 = vlaneseq
        %v3292 = vshrl.u32 %v3291, 7
        %v3293 = vsub.s32 %v3290, %v3292
        %v3294 = vrot.slane %v3280, %v3293
        %v3295 = vcombine.low %v3239, %v3271
        %v3296 = vcombine.high %v3239, %v3271
        %v3297 = vcombine.low %v3246, %v3278
        %v3298 = vcombine.high %v3246, %v3278
        %v3299 = vcombine.low %v3255, %v3287
        %v3300 = vcombine.high %v3255, %v3287
        %v3301 = vcombine.low %v3262, %v3294
        %v3302 = vcombine.high %v3262, %v3294
        %v3303 = vcombine.low %v2253, %v2317
        %v3304 = vcombine.high %v2253, %v2317
        %v3306 = vunpack.c.l.s4 1983009808
        %v3307 = vunpack.c.0.s8 %v3306
        %v3308 = vlaneseq
        %v3309 = vshrl.u32 %v3308, 7
        %v3310 = vsub.s32 %v3307, %v3309
        %v3311 = vrot.slane %v3303, %v3310
        %v3313 = vunpack.c.l.s4 1983009808
        %v3314 = vunpack.c.0.s8 %v3313
        %v3315 = vlaneseq
        %v3316 = vshrl.u32 %v3315, 7
        %v3317 = vsub.s32 %v3314, %v3316
        %v3318 = vrot.slane %v3304, %v3317
        %v3319 = vcombine.low %v2285, %v2349
        %v3320 = vcombine.high %v2285, %v2349
        %v3322 = vunpack.c.l.s4 1983009808
        %v3323 = vunpack.c.0.s8 %v3322
        %v3324 = vlaneseq
        %v3325 = vshrl.u32 %v3324, 7
        %v3326 = vsub.s32 %v3323, %v3325
        %v3327 = vrot.slane %v3319, %v3326
        %v3329 = vunpack.c.l.s4 1983009808
        %v3330 = vunpack.c.0.s8 %v3329
        %v3331 = vlaneseq
        %v3332 = vshrl.u32 %v3331, 7
        %v3333 = vsub.s32 %v3330, %v3332
        %v3334 = vrot.slane %v3320, %v3333
        %v3335 = vcombine.low %v2381, %v2445
        %v3336 = vcombine.high %v2381, %v2445
        %v3338 = vunpack.c.l.s4 1983009808
        %v3339 = vunpack.c.0.s8 %v3338
        %v3340 = vlaneseq
        %v3341 = vshrl.u32 %v3340, 7
        %v3342 = vsub.s32 %v3339, %v3341
        %v3343 = vrot.slane %v3335, %v3342
        %v3345 = vunpack.c.l.s4 1983009808
        %v3346 = vunpack.c.0.s8 %v3345
        %v3347 = vlaneseq
        %v3348 = vshrl.u32 %v3347, 7
        %v3349 = vsub.s32 %v3346, %v3348
        %v3350 = vrot.slane %v3336, %v3349
        %v3351 = vcombine.low %v2413, %v2477
        %v3352 = vcombine.high %v2413, %v2477
        %v3354 = vunpack.c.l.s4 1983009808
        %v3355 = vunpack.c.0.s8 %v3354
        %v3356 = vlaneseq
        %v3357 = vshrl.u32 %v3356, 7
        %v3358 = vsub.s32 %v3355, %v3357
        %v3359 = vrot.slane %v3351, %v3358
        %v3361 = vunpack.c.l.s4 1983009808
        %v3362 = vunpack.c.0.s8 %v3361
        %v3363 = vlaneseq
        %v3364 = vshrl.u32 %v3363, 7
        %v3365 = vsub.s32 %v3362, %v3364
        %v3366 = vrot.slane %v3352, %v3365
        %v3367 = vcombine.low %v3311, %v3327
        %v3368 = vcombine.high %v3311, %v3327
        %v3370 = vunpack.c.l.s4 1934713408
        %v3371 = vunpack.c.0.s8 %v3370
        %v3372 = vlaneseq
        %v3373 = vshrl.u32 %v3372, 7
        %v3374 = vsub.s32 %v3371, %v3373
        %v3375 = vrot.slane %v3367, %v3374
        %v3377 = vunpack.c.l.s4 1934713408
        %v3378 = vunpack.c.0.s8 %v3377
        %v3379 = vlaneseq
        %v3380 = vshrl.u32 %v3379, 7
        %v3381 = vsub.s32 %v3378, %v3380
        %v3382 = vrot.slane %v3368, %v3381
        %v3383 = vcombine.low %v3318, %v3334
        %v3384 = vcombine.high %v3318, %v3334
        %v3386 = vunpack.c.l.s4 1934713408
        %v3387 = vunpack.c.0.s8 %v3386
        %v3388 = vlaneseq
        %v3389 = vshrl.u32 %v3388, 7
        %v3390 = vsub.s32 %v3387, %v3389
        %v3391 = vrot.slane %v3383, %v3390
        %v3393 = vunpack.c.l.s4 1934713408
        %v3394 = vunpack.c.0.s8 %v3393
        %v3395 = vlaneseq
        %v3396 = vshrl.u32 %v3395, 7
        %v3397 = vsub.s32 %v3394, %v3396
        %v3398 = vrot.slane %v3384, %v3397
        %v3399 = vcombine.low %v3343, %v3359
        %v3400 = vcombine.high %v3343, %v3359
        %v3402 = vunpack.c.l.s4 1934713408
        %v3403 = vunpack.c.0.s8 %v3402
        %v3404 = vlaneseq
        %v3405 = vshrl.u32 %v3404, 7
        %v3406 = vsub.s32 %v3403, %v3405
        %v3407 = vrot.slane %v3399, %v3406
        %v3409 = vunpack.c.l.s4 1934713408
        %v3410 = vunpack.c.0.s8 %v3409
        %v3411 = vlaneseq
        %v3412 = vshrl.u32 %v3411, 7
        %v3413 = vsub.s32 %v3410, %v3412
        %v3414 = vrot.slane %v3400, %v3413
        %v3415 = vcombine.low %v3350, %v3366
        %v3416 = vcombine.high %v3350, %v3366
        %v3418 = vunpack.c.l.s4 1934713408
        %v3419 = vunpack.c.0.s8 %v3418
        %v3420 = vlaneseq
        %v3421 = vshrl.u32 %v3420, 7
        %v3422 = vsub.s32 %v3419, %v3421
        %v3423 = vrot.slane %v3415, %v3422
        %v3425 = vunpack.c.l.s4 1934713408
        %v3426 = vunpack.c.0.s8 %v3425
        %v3427 = vlaneseq
        %v3428 = vshrl.u32 %v3427, 7
        %v3429 = vsub.s32 %v3426, %v3428
        %v3430 = vrot.slane %v3416, %v3429
        %v3431 = vcombine.low %v3375, %v3407
        %v3432 = vcombine.high %v3375, %v3407
        %v3433 = vcombine.low %v3382, %v3414
        %v3434 = vcombine.high %v3382, %v3414
        %v3435 = vcombine.low %v3391, %v3423
        %v3436 = vcombine.high %v3391, %v3423
        %v3437 = vcombine.low %v3398, %v3430
        %v3438 = vcombine.high %v3398, %v3430
        %v3439 = vcombine.low %v2254, %v2318
        %v3440 = vcombine.high %v2254, %v2318
        %v3442 = vunpack.c.l.s4 1983009808
        %v3443 = vunpack.c.0.s8 %v3442
        %v3444 = vlaneseq
        %v3445 = vshrl.u32 %v3444, 7
        %v3446 = vsub.s32 %v3443, %v3445
        %v3447 = vrot.slane %v3439, %v3446
        %v3449 = vunpack.c.l.s4 1983009808
        %v3450 = vunpack.c.0.s8 %v3449
        %v3451 = vlaneseq
        %v3452 = vshrl.u32 %v3451, 7
        %v3453 = vsub.s32 %v3450, %v3452
        %v3454 = vrot.slane %v3440, %v3453
        %v3455 = vcombine.low %v2286, %v2350
        %v3456 = vcombine.high %v2286, %v2350
        %v3458 = vunpack.c.l.s4 1983009808
        %v3459 = vunpack.c.0.s8 %v3458
        %v3460 = vlaneseq
        %v3461 = vshrl.u32 %v3460, 7
        %v3462 = vsub.s32 %v3459, %v3461
        %v3463 = vrot.slane %v3455, %v3462
        %v3465 = vunpack.c.l.s4 1983009808
        %v3466 = vunpack.c.0.s8 %v3465
        %v3467 = vlaneseq
        %v3468 = vshrl.u32 %v3467, 7
        %v3469 = vsub.s32 %v3466, %v3468
        %v3470 = vrot.slane %v3456, %v3469
        %v3471 = vcombine.low %v2382, %v2446
        %v3472 = vcombine.high %v2382, %v2446
        %v3474 = vunpack.c.l.s4 1983009808
        %v3475 = vunpack.c.0.s8 %v3474
        %v3476 = vlaneseq
        %v3477 = vshrl.u32 %v3476, 7
        %v3478 = vsub.s32 %v3475, %v3477
        %v3479 = vrot.slane %v3471, %v3478
        %v3481 = vunpack.c.l.s4 1983009808
        %v3482 = vunpack.c.0.s8 %v3481
        %v3483 = vlaneseq
        %v3484 = vshrl.u32 %v3483, 7
        %v3485 = vsub.s32 %v3482, %v3484
        %v3486 = vrot.slane %v3472, %v3485
        %v3487 = vcombine.low %v2414, %v2478
        %v3488 = vcombine.high %v2414, %v2478
        %v3490 = vunpack.c.l.s4 1983009808
        %v3491 = vunpack.c.0.s8 %v3490
        %v3492 = vlaneseq
        %v3493 = vshrl.u32 %v3492, 7
        %v3494 = vsub.s32 %v3491, %v3493
        %v3495 = vrot.slane %v3487, %v3494
        %v3497 = vunpack.c.l.s4 1983009808
        %v3498 = vunpack.c.0.s8 %v3497
        %v3499 = vlaneseq
        %v3500 = vshrl.u32 %v3499, 7
        %v3501 = vsub.s32 %v3498, %v3500
        %v3502 = vrot.slane %v3488, %v3501
        %v3503 = vcombine.low %v3447, %v3463
        %v3504 = vcombine.high %v3447, %v3463
        %v3506 = vunpack.c.l.s4 1934713408
        %v3507 = vunpack.c.0.s8 %v3506
        %v3508 = vlaneseq
        %v3509 = vshrl.u32 %v3508, 7
        %v3510 = vsub.s32 %v3507, %v3509
        %v3511 = vrot.slane %v3503, %v3510
        %v3513 = vunpack.c.l.s4 1934713408
        %v3514 = vunpack.c.0.s8 %v3513
        %v3515 = vlaneseq
        %v3516 = vshrl.u32 %v3515, 7
        %v3517 = vsub.s32 %v3514, %v3516
        %v3518 = vrot.slane %v3504, %v3517
        %v3519 = vcombine.low %v3454, %v3470
        %v3520 = vcombine.high %v3454, %v3470
        %v3522 = vunpack.c.l.s4 1934713408
        %v3523 = vunpack.c.0.s8 %v3522
        %v3524 = vlaneseq
        %v3525 = vshrl.u32 %v3524, 7
        %v3526 = vsub.s32 %v3523, %v3525
        %v3527 = vrot.slane %v3519, %v3526
        %v3529 = vunpack.c.l.s4 1934713408
        %v3530 = vunpack.c.0.s8 %v3529
        %v3531 = vlaneseq
        %v3532 = vshrl.u32 %v3531, 7
        %v3533 = vsub.s32 %v3530, %v3532
        %v3534 = vrot.slane %v3520, %v3533
        %v3535 = vcombine.low %v3479, %v3495
        %v3536 = vcombine.high %v3479, %v3495
        %v3538 = vunpack.c.l.s4 1934713408
        %v3539 = vunpack.c.0.s8 %v3538
        %v3540 = vlaneseq
        %v3541 = vshrl.u32 %v3540, 7
        %v3542 = vsub.s32 %v3539, %v3541
        %v3543 = vrot.slane %v3535, %v3542
        %v3545 = vunpack.c.l.s4 1934713408
        %v3546 = vunpack.c.0.s8 %v3545
        %v3547 = vlaneseq
        %v3548 = vshrl.u32 %v3547, 7
        %v3549 = vsub.s32 %v3546, %v3548
        %v3550 = vrot.slane %v3536, %v3549
        %v3551 = vcombine.low %v3486, %v3502
        %v3552 = vcombine.high %v3486, %v3502
        %v3554 = vunpack.c.l.s4 1934713408
        %v3555 = vunpack.c.0.s8 %v3554
        %v3556 = vlaneseq
        %v3557 = vshrl.u32 %v3556, 7
        %v3558 = vsub.s32 %v3555, %v3557
        %v3559 = vrot.slane %v3551, %v3558
        %v3561 = vunpack.c.l.s4 1934713408
        %v3562 = vunpack.c.0.s8 %v3561
        %v3563 = vlaneseq
        %v3564 = vshrl.u32 %v3563, 7
        %v3565 = vsub.s32 %v3562, %v3564
        %v3566 = vrot.slane %v3552, %v3565
        %v3567 = vcombine.low %v3511, %v3543
        %v3568 = vcombine.high %v3511, %v3543
        %v3569 = vcombine.low %v3518, %v3550
        %v3570 = vcombine.high %v3518, %v3550
        %v3571 = vcombine.low %v3527, %v3559
        %v3572 = vcombine.high %v3527, %v3559
        %v3573 = vcombine.low %v3534, %v3566
        %v3574 = vcombine.high %v3534, %v3566
        %v3575 = vcombine.low %v2255, %v2319
        %v3576 = vcombine.high %v2255, %v2319
        %v3578 = vunpack.c.l.s4 1983009808
        %v3579 = vunpack.c.0.s8 %v3578
        %v3580 = vlaneseq
        %v3581 = vshrl.u32 %v3580, 7
        %v3582 = vsub.s32 %v3579, %v3581
        %v3583 = vrot.slane %v3575, %v3582
        %v3585 = vunpack.c.l.s4 1983009808
        %v3586 = vunpack.c.0.s8 %v3585
        %v3587 = vlaneseq
        %v3588 = vshrl.u32 %v3587, 7
        %v3589 = vsub.s32 %v3586, %v3588
        %v3590 = vrot.slane %v3576, %v3589
        %v3591 = vcombine.low %v2287, %v2351
        %v3592 = vcombine.high %v2287, %v2351
        %v3594 = vunpack.c.l.s4 1983009808
        %v3595 = vunpack.c.0.s8 %v3594
        %v3596 = vlaneseq
        %v3597 = vshrl.u32 %v3596, 7
        %v3598 = vsub.s32 %v3595, %v3597
        %v3599 = vrot.slane %v3591, %v3598
        %v3601 = vunpack.c.l.s4 1983009808
        %v3602 = vunpack.c.0.s8 %v3601
        %v3603 = vlaneseq
        %v3604 = vshrl.u32 %v3603, 7
        %v3605 = vsub.s32 %v3602, %v3604
        %v3606 = vrot.slane %v3592, %v3605
        %v3607 = vcombine.low %v2383, %v2447
        %v3608 = vcombine.high %v2383, %v2447
        %v3610 = vunpack.c.l.s4 1983009808
        %v3611 = vunpack.c.0.s8 %v3610
        %v3612 = vlaneseq
        %v3613 = vshrl.u32 %v3612, 7
        %v3614 = vsub.s32 %v3611, %v3613
        %v3615 = vrot.slane %v3607, %v3614
        %v3617 = vunpack.c.l.s4 1983009808
        %v3618 = vunpack.c.0.s8 %v3617
        %v3619 = vlaneseq
        %v3620 = vshrl.u32 %v3619, 7
        %v3621 = vsub.s32 %v3618, %v3620
        %v3622 = vrot.slane %v3608, %v3621
        %v3623 = vcombine.low %v2415, %v2479
        %v3624 = vcombine.high %v2415, %v2479
        %v3626 = vunpack.c.l.s4 1983009808
        %v3627 = vunpack.c.0.s8 %v3626
        %v3628 = vlaneseq
        %v3629 = vshrl.u32 %v3628, 7
        %v3630 = vsub.s32 %v3627, %v3629
        %v3631 = vrot.slane %v3623, %v3630
        %v3633 = vunpack.c.l.s4 1983009808
        %v3634 = vunpack.c.0.s8 %v3633
        %v3635 = vlaneseq
        %v3636 = vshrl.u32 %v3635, 7
        %v3637 = vsub.s32 %v3634, %v3636
        %v3638 = vrot.slane %v3624, %v3637
        %v3639 = vcombine.low %v3583, %v3599
        %v3640 = vcombine.high %v3583, %v3599
        %v3642 = vunpack.c.l.s4 1934713408
        %v3643 = vunpack.c.0.s8 %v3642
        %v3644 = vlaneseq
        %v3645 = vshrl.u32 %v3644, 7
        %v3646 = vsub.s32 %v3643, %v3645
        %v3647 = vrot.slane %v3639, %v3646
        %v3649 = vunpack.c.l.s4 1934713408
        %v3650 = vunpack.c.0.s8 %v3649
        %v3651 = vlaneseq
        %v3652 = vshrl.u32 %v3651, 7
        %v3653 = vsub.s32 %v3650, %v3652
        %v3654 = vrot.slane %v3640, %v3653
        %v3655 = vcombine.low %v3590, %v3606
        %v3656 = vcombine.high %v3590, %v3606
        %v3658 = vunpack.c.l.s4 1934713408
        %v3659 = vunpack.c.0.s8 %v3658
        %v3660 = vlaneseq
        %v3661 = vshrl.u32 %v3660, 7
        %v3662 = vsub.s32 %v3659, %v3661
        %v3663 = vrot.slane %v3655, %v3662
        %v3665 = vunpack.c.l.s4 1934713408
        %v3666 = vunpack.c.0.s8 %v3665
        %v3667 = vlaneseq
        %v3668 = vshrl.u32 %v3667, 7
        %v3669 = vsub.s32 %v3666, %v3668
        %v3670 = vrot.slane %v3656, %v3669
        %v3671 = vcombine.low %v3615, %v3631
        %v3672 = vcombine.high %v3615, %v3631
        %v3674 = vunpack.c.l.s4 1934713408
        %v3675 = vunpack.c.0.s8 %v3674
        %v3676 = vlaneseq
        %v3677 = vshrl.u32 %v3676, 7
        %v3678 = vsub.s32 %v3675, %v3677
        %v3679 = vrot.slane %v3671, %v3678
        %v3681 = vunpack.c.l.s4 1934713408
        %v3682 = vunpack.c.0.s8 %v3681
        %v3683 = vlaneseq
        %v3684 = vshrl.u32 %v3683, 7
        %v3685 = vsub.s32 %v3682, %v3684
        %v3686 = vrot.slane %v3672, %v3685
        %v3687 = vcombine.low %v3622, %v3638
        %v3688 = vcombine.high %v3622, %v3638
        %v3690 = vunpack.c.l.s4 1934713408
        %v3691 = vunpack.c.0.s8 %v3690
        %v3692 = vlaneseq
        %v3693 = vshrl.u32 %v3692, 7
        %v3694 = vsub.s32 %v3691, %v3693
        %v3695 = vrot.slane %v3687, %v3694
        %v3697 = vunpack.c.l.s4 1934713408
        %v3698 = vunpack.c.0.s8 %v3697
        %v3699 = vlaneseq
        %v3700 = vshrl.u32 %v3699, 7
        %v3701 = vsub.s32 %v3698, %v3700
        %v3702 = vrot.slane %v3688, %v3701
        %v3703 = vcombine.low %v3647, %v3679
        %v3704 = vcombine.high %v3647, %v3679
        %v3705 = vcombine.low %v3654, %v3686
        %v3706 = vcombine.high %v3654, %v3686
        %v3707 = vcombine.low %v3663, %v3695
        %v3708 = vcombine.high %v3663, %v3695
        %v3709 = vcombine.low %v3670, %v3702
        %v3710 = vcombine.high %v3670, %v3702
        %v3711 = vcombine.low %v2256, %v2320
        %v3712 = vcombine.high %v2256, %v2320
        %v3714 = vunpack.c.l.s4 1983009808
        %v3715 = vunpack.c.0.s8 %v3714
        %v3716 = vlaneseq
        %v3717 = vshrl.u32 %v3716, 7
        %v3718 = vsub.s32 %v3715, %v3717
        %v3719 = vrot.slane %v3711, %v3718
        %v3721 = vunpack.c.l.s4 1983009808
        %v3722 = vunpack.c.0.s8 %v3721
        %v3723 = vlaneseq
        %v3724 = vshrl.u32 %v3723, 7
        %v3725 = vsub.s32 %v3722, %v3724
        %v3726 = vrot.slane %v3712, %v3725
        %v3727 = vcombine.low %v2288, %v2352
        %v3728 = vcombine.high %v2288, %v2352
        %v3730 = vunpack.c.l.s4 1983009808
        %v3731 = vunpack.c.0.s8 %v3730
        %v3732 = vlaneseq
        %v3733 = vshrl.u32 %v3732, 7
        %v3734 = vsub.s32 %v3731, %v3733
        %v3735 = vrot.slane %v3727, %v3734
        %v3737 = vunpack.c.l.s4 1983009808
        %v3738 = vunpack.c.0.s8 %v3737
        %v3739 = vlaneseq
        %v3740 = vshrl.u32 %v3739, 7
        %v3741 = vsub.s32 %v3738, %v3740
        %v3742 = vrot.slane %v3728, %v3741
        %v3743 = vcombine.low %v2384, %v2448
        %v3744 = vcombine.high %v2384, %v2448
        %v3746 = vunpack.c.l.s4 1983009808
        %v3747 = vunpack.c.0.s8 %v3746
        %v3748 = vlaneseq
        %v3749 = vshrl.u32 %v3748, 7
        %v3750 = vsub.s32 %v3747, %v3749
        %v3751 = vrot.slane %v3743, %v3750
        %v3753 = vunpack.c.l.s4 1983009808
        %v3754 = vunpack.c.0.s8 %v3753
        %v3755 = vlaneseq
        %v3756 = vshrl.u32 %v3755, 7
        %v3757 = vsub.s32 %v3754, %v3756
        %v3758 = vrot.slane %v3744, %v3757
        %v3759 = vcombine.low %v2416, %v2480
        %v3760 = vcombine.high %v2416, %v2480
        %v3762 = vunpack.c.l.s4 1983009808
        %v3763 = vunpack.c.0.s8 %v3762
        %v3764 = vlaneseq
        %v3765 = vshrl.u32 %v3764, 7
        %v3766 = vsub.s32 %v3763, %v3765
        %v3767 = vrot.slane %v3759, %v3766
        %v3769 = vunpack.c.l.s4 1983009808
        %v3770 = vunpack.c.0.s8 %v3769
        %v3771 = vlaneseq
        %v3772 = vshrl.u32 %v3771, 7
        %v3773 = vsub.s32 %v3770, %v3772
        %v3774 = vrot.slane %v3760, %v3773
        %v3775 = vcombine.low %v3719, %v3735
        %v3776 = vcombine.high %v3719, %v3735
        %v3778 = vunpack.c.l.s4 1934713408
        %v3779 = vunpack.c.0.s8 %v3778
        %v3780 = vlaneseq
        %v3781 = vshrl.u32 %v3780, 7
        %v3782 = vsub.s32 %v3779, %v3781
        %v3783 = vrot.slane %v3775, %v3782
        %v3785 = vunpack.c.l.s4 1934713408
        %v3786 = vunpack.c.0.s8 %v3785
        %v3787 = vlaneseq
        %v3788 = vshrl.u32 %v3787, 7
        %v3789 = vsub.s32 %v3786, %v3788
        %v3790 = vrot.slane %v3776, %v3789
        %v3791 = vcombine.low %v3726, %v3742
        %v3792 = vcombine.high %v3726, %v3742
        %v3794 = vunpack.c.l.s4 1934713408
        %v3795 = vunpack.c.0.s8 %v3794
        %v3796 = vlaneseq
        %v3797 = vshrl.u32 %v3796, 7
        %v3798 = vsub.s32 %v3795, %v3797
        %v3799 = vrot.slane %v3791, %v3798
        %v3801 = vunpack.c.l.s4 1934713408
        %v3802 = vunpack.c.0.s8 %v3801
        %v3803 = vlaneseq
        %v3804 = vshrl.u32 %v3803, 7
        %v3805 = vsub.s32 %v3802, %v3804
        %v3806 = vrot.slane %v3792, %v3805
        %v3807 = vcombine.low %v3751, %v3767
        %v3808 = vcombine.high %v3751, %v3767
        %v3810 = vunpack.c.l.s4 1934713408
        %v3811 = vunpack.c.0.s8 %v3810
        %v3812 = vlaneseq
        %v3813 = vshrl.u32 %v3812, 7
        %v3814 = vsub.s32 %v3811, %v3813
        %v3815 = vrot.slane %v3807, %v3814
        %v3817 = vunpack.c.l.s4 1934713408
        %v3818 = vunpack.c.0.s8 %v3817
        %v3819 = vlaneseq
        %v3820 = vshrl.u32 %v3819, 7
        %v3821 = vsub.s32 %v3818, %v3820
        %v3822 = vrot.slane %v3808, %v3821
        %v3823 = vcombine.low %v3758, %v3774
        %v3824 = vcombine.high %v3758, %v3774
        %v3826 = vunpack.c.l.s4 1934713408
        %v3827 = vunpack.c.0.s8 %v3826
        %v3828 = vlaneseq
        %v3829 = vshrl.u32 %v3828, 7
        %v3830 = vsub.s32 %v3827, %v3829
        %v3831 = vrot.slane %v3823, %v3830
        %v3833 = vunpack.c.l.s4 1934713408
        %v3834 = vunpack.c.0.s8 %v3833
        %v3835 = vlaneseq
        %v3836 = vshrl.u32 %v3835, 7
        %v3837 = vsub.s32 %v3834, %v3836
        %v3838 = vrot.slane %v3824, %v3837
        %v3839 = vcombine.low %v3783, %v3815
        %v3840 = vcombine.high %v3783, %v3815
        %v3841 = vcombine.low %v3790, %v3822
        %v3842 = vcombine.high %v3790, %v3822
        %v3843 = vcombine.low %v3799, %v3831
        %v3844 = vcombine.high %v3799, %v3831
        %v3845 = vcombine.low %v3806, %v3838
        %v3846 = vcombine.high %v3806, %v3838
        %v3847 = vcombine.low %v2257, %v2321
        %v3848 = vcombine.high %v2257, %v2321
        %v3850 = vunpack.c.l.s4 1983009808
        %v3851 = vunpack.c.0.s8 %v3850
        %v3852 = vlaneseq
        %v3853 = vshrl.u32 %v3852, 7
        %v3854 = vsub.s32 %v3851, %v3853
        %v3855 = vrot.slane %v3847, %v3854
        %v3857 = vunpack.c.l.s4 1983009808
        %v3858 = vunpack.c.0.s8 %v3857
        %v3859 = vlaneseq
        %v3860 = vshrl.u32 %v3859, 7
        %v3861 = vsub.s32 %v3858, %v3860
        %v3862 = vrot.slane %v3848, %v3861
        %v3863 = vcombine.low %v2289, %v2353
        %v3864 = vcombine.high %v2289, %v2353
        %v3866 = vunpack.c.l.s4 1983009808
        %v3867 = vunpack.c.0.s8 %v3866
        %v3868 = vlaneseq
        %v3869 = vshrl.u32 %v3868, 7
        %v3870 = vsub.s32 %v3867, %v3869
        %v3871 = vrot.slane %v3863, %v3870
        %v3873 = vunpack.c.l.s4 1983009808
        %v3874 = vunpack.c.0.s8 %v3873
        %v3875 = vlaneseq
        %v3876 = vshrl.u32 %v3875, 7
        %v3877 = vsub.s32 %v3874, %v3876
        %v3878 = vrot.slane %v3864, %v3877
        %v3879 = vcombine.low %v2385, %v2449
        %v3880 = vcombine.high %v2385, %v2449
        %v3882 = vunpack.c.l.s4 1983009808
        %v3883 = vunpack.c.0.s8 %v3882
        %v3884 = vlaneseq
        %v3885 = vshrl.u32 %v3884, 7
        %v3886 = vsub.s32 %v3883, %v3885
        %v3887 = vrot.slane %v3879, %v3886
        %v3889 = vunpack.c.l.s4 1983009808
        %v3890 = vunpack.c.0.s8 %v3889
        %v3891 = vlaneseq
        %v3892 = vshrl.u32 %v3891, 7
        %v3893 = vsub.s32 %v3890, %v3892
        %v3894 = vrot.slane %v3880, %v3893
        %v3895 = vcombine.low %v2417, %v2481
        %v3896 = vcombine.high %v2417, %v2481
        %v3898 = vunpack.c.l.s4 1983009808
        %v3899 = vunpack.c.0.s8 %v3898
        %v3900 = vlaneseq
        %v3901 = vshrl.u32 %v3900, 7
        %v3902 = vsub.s32 %v3899, %v3901
        %v3903 = vrot.slane %v3895, %v3902
        %v3905 = vunpack.c.l.s4 1983009808
        %v3906 = vunpack.c.0.s8 %v3905
        %v3907 = vlaneseq
        %v3908 = vshrl.u32 %v3907, 7
        %v3909 = vsub.s32 %v3906, %v3908
        %v3910 = vrot.slane %v3896, %v3909
        %v3911 = vcombine.low %v3855, %v3871
        %v3912 = vcombine.high %v3855, %v3871
        %v3914 = vunpack.c.l.s4 1934713408
        %v3915 = vunpack.c.0.s8 %v3914
        %v3916 = vlaneseq
        %v3917 = vshrl.u32 %v3916, 7
        %v3918 = vsub.s32 %v3915, %v3917
        %v3919 = vrot.slane %v3911, %v3918
        %v3921 = vunpack.c.l.s4 1934713408
        %v3922 = vunpack.c.0.s8 %v3921
        %v3923 = vlaneseq
        %v3924 = vshrl.u32 %v3923, 7
        %v3925 = vsub.s32 %v3922, %v3924
        %v3926 = vrot.slane %v3912, %v3925
        %v3927 = vcombine.low %v3862, %v3878
        %v3928 = vcombine.high %v3862, %v3878
        %v3930 = vunpack.c.l.s4 1934713408
        %v3931 = vunpack.c.0.s8 %v3930
        %v3932 = vlaneseq
        %v3933 = vshrl.u32 %v3932, 7
        %v3934 = vsub.s32 %v3931, %v3933
        %v3935 = vrot.slane %v3927, %v3934
        %v3937 = vunpack.c.l.s4 1934713408
        %v3938 = vunpack.c.0.s8 %v3937
        %v3939 = vlaneseq
        %v3940 = vshrl.u32 %v3939, 7
        %v3941 = vsub.s32 %v3938, %v3940
        %v3942 = vrot.slane %v3928, %v3941
        %v3943 = vcombine.low %v3887, %v3903
        %v3944 = vcombine.high %v3887, %v3903
        %v3946 = vunpack.c.l.s4 1934713408
        %v3947 = vunpack.c.0.s8 %v3946
        %v3948 = vlaneseq
        %v3949 = vshrl.u32 %v3948, 7
        %v3950 = vsub.s32 %v3947, %v3949
        %v3951 = vrot.slane %v3943, %v3950
        %v3953 = vunpack.c.l.s4 1934713408
        %v3954 = vunpack.c.0.s8 %v3953
        %v3955 = vlaneseq
        %v3956 = vshrl.u32 %v3955, 7
        %v3957 = vsub.s32 %v3954, %v3956
        %v3958 = vrot.slane %v3944, %v3957
        %v3959 = vcombine.low %v3894, %v3910
        %v3960 = vcombine.high %v3894, %v3910
        %v3962 = vunpack.c.l.s4 1934713408
        %v3963 = vunpack.c.0.s8 %v3962
        %v3964 = vlaneseq
        %v3965 = vshrl.u32 %v3964, 7
        %v3966 = vsub.s32 %v3963, %v3965
        %v3967 = vrot.slane %v3959, %v3966
        %v3969 = vunpack.c.l.s4 1934713408
        %v3970 = vunpack.c.0.s8 %v3969
        %v3971 = vlaneseq
        %v3972 = vshrl.u32 %v3971, 7
        %v3973 = vsub.s32 %v3970, %v3972
        %v3974 = vrot.slane %v3960, %v3973
        %v3975 = vcombine.low %v3919, %v3951
        %v3976 = vcombine.high %v3919, %v3951
        %v3977 = vcombine.low %v3926, %v3958
        %v3978 = vcombine.high %v3926, %v3958
        %v3979 = vcombine.low %v3935, %v3967
        %v3980 = vcombine.high %v3935, %v3967
        %v3981 = vcombine.low %v3942, %v3974
        %v3982 = vcombine.high %v3942, %v3974
        %v3983 = vcombine.low %v2258, %v2322
        %v3984 = vcombine.high %v2258, %v2322
        %v3986 = vunpack.c.l.s4 1983009808
        %v3987 = vunpack.c.0.s8 %v3986
        %v3988 = vlaneseq
        %v3989 = vshrl.u32 %v3988, 7
        %v3990 = vsub.s32 %v3987, %v3989
        %v3991 = vrot.slane %v3983, %v3990
        %v3993 = vunpack.c.l.s4 1983009808
        %v3994 = vunpack.c.0.s8 %v3993
        %v3995 = vlaneseq
        %v3996 = vshrl.u32 %v3995, 7
        %v3997 = vsub.s32 %v3994, %v3996
        %v3998 = vrot.slane %v3984, %v3997
        %v3999 = vcombine.low %v2290, %v2354
        %v4000 = vcombine.high %v2290, %v2354
        %v4002 = vunpack.c.l.s4 1983009808
        %v4003 = vunpack.c.0.s8 %v4002
        %v4004 = vlaneseq
        %v4005 = vshrl.u32 %v4004, 7
        %v4006 = vsub.s32 %v4003, %v4005
        %v4007 = vrot.slane %v3999, %v4006
        %v4009 = vunpack.c.l.s4 1983009808
        %v4010 = vunpack.c.0.s8 %v4009
        %v4011 = vlaneseq
        %v4012 = vshrl.u32 %v4011, 7
        %v4013 = vsub.s32 %v4010, %v4012
        %v4014 = vrot.slane %v4000, %v4013
        %v4015 = vcombine.low %v2386, %v2450
        %v4016 = vcombine.high %v2386, %v2450
        %v4018 = vunpack.c.l.s4 1983009808
        %v4019 = vunpack.c.0.s8 %v4018
        %v4020 = vlaneseq
        %v4021 = vshrl.u32 %v4020, 7
        %v4022 = vsub.s32 %v4019, %v4021
        %v4023 = vrot.slane %v4015, %v4022
        %v4025 = vunpack.c.l.s4 1983009808
        %v4026 = vunpack.c.0.s8 %v4025
        %v4027 = vlaneseq
        %v4028 = vshrl.u32 %v4027, 7
        %v4029 = vsub.s32 %v4026, %v4028
        %v4030 = vrot.slane %v4016, %v4029
        %v4031 = vcombine.low %v2418, %v2482
        %v4032 = vcombine.high %v2418, %v2482
        %v4034 = vunpack.c.l.s4 1983009808
        %v4035 = vunpack.c.0.s8 %v4034
        %v4036 = vlaneseq
        %v4037 = vshrl.u32 %v4036, 7
        %v4038 = vsub.s32 %v4035, %v4037
        %v4039 = vrot.slane %v4031, %v4038
        %v4041 = vunpack.c.l.s4 1983009808
        %v4042 = vunpack.c.0.s8 %v4041
        %v4043 = vlaneseq
        %v4044 = vshrl.u32 %v4043, 7
        %v4045 = vsub.s32 %v4042, %v4044
        %v4046 = vrot.slane %v4032, %v4045
        %v4047 = vcombine.low %v3991, %v4007
        %v4048 = vcombine.high %v3991, %v4007
        %v4050 = vunpack.c.l.s4 1934713408
        %v4051 = vunpack.c.0.s8 %v4050
        %v4052 = vlaneseq
        %v4053 = vshrl.u32 %v4052, 7
        %v4054 = vsub.s32 %v4051, %v4053
        %v4055 = vrot.slane %v4047, %v4054
        %v4057 = vunpack.c.l.s4 1934713408
        %v4058 = vunpack.c.0.s8 %v4057
        %v4059 = vlaneseq
        %v4060 = vshrl.u32 %v4059, 7
        %v4061 = vsub.s32 %v4058, %v4060
        %v4062 = vrot.slane %v4048, %v4061
        %v4063 = vcombine.low %v3998, %v4014
        %v4064 = vcombine.high %v3998, %v4014
        %v4066 = vunpack.c.l.s4 1934713408
        %v4067 = vunpack.c.0.s8 %v4066
        %v4068 = vlaneseq
        %v4069 = vshrl.u32 %v4068, 7
        %v4070 = vsub.s32 %v4067, %v4069
        %v4071 = vrot.slane %v4063, %v4070
        %v4073 = vunpack.c.l.s4 1934713408
        %v4074 = vunpack.c.0.s8 %v4073
        %v4075 = vlaneseq
        %v4076 = vshrl.u32 %v4075, 7
        %v4077 = vsub.s32 %v4074, %v4076
        %v4078 = vrot.slane %v4064, %v4077
        %v4079 = vcombine.low %v4023, %v4039
        %v4080 = vcombine.high %v4023, %v4039
        %v4082 = vunpack.c.l.s4 1934713408
        %v4083 = vunpack.c.0.s8 %v4082
        %v4084 = vlaneseq
        %v4085 = vshrl.u32 %v4084, 7
        %v4086 = vsub.s32 %v4083, %v4085
        %v4087 = vrot.slane %v4079, %v4086
        %v4089 = vunpack.c.l.s4 1934713408
        %v4090 = vunpack.c.0.s8 %v4089
        %v4091 = vlaneseq
        %v4092 = vshrl.u32 %v4091, 7
        %v4093 = vsub.s32 %v4090, %v4092
        %v4094 = vrot.slane %v4080, %v4093
        %v4095 = vcombine.low %v4030, %v4046
        %v4096 = vcombine.high %v4030, %v4046
        %v4098 = vunpack.c.l.s4 1934713408
        %v4099 = vunpack.c.0.s8 %v4098
        %v4100 = vlaneseq
        %v4101 = vshrl.u32 %v4100, 7
        %v4102 = vsub.s32 %v4099, %v4101
        %v4103 = vrot.slane %v4095, %v4102
        %v4105 = vunpack.c.l.s4 1934713408
        %v4106 = vunpack.c.0.s8 %v4105
        %v4107 = vlaneseq
        %v4108 = vshrl.u32 %v4107, 7
        %v4109 = vsub.s32 %v4106, %v4108
        %v4110 = vrot.slane %v4096, %v4109
        %v4111 = vcombine.low %v4055, %v4087
        %v4112 = vcombine.high %v4055, %v4087
        %v4113 = vcombine.low %v4062, %v4094
        %v4114 = vcombine.high %v4062, %v4094
        %v4115 = vcombine.low %v4071, %v4103
        %v4116 = vcombine.high %v4071, %v4103
        %v4117 = vcombine.low %v4078, %v4110
        %v4118 = vcombine.high %v4078, %v4110
        %v4119 = vcombine.low %v2259, %v2323
        %v4121 = vunpack.c.l.s4 1983009808
        %v4122 = vunpack.c.0.s8 %v4121
        %v4123 = vlaneseq
        %v4124 = vshrl.u32 %v4123, 7
        %v4125 = vsub.s32 %v4122, %v4124
        %v4126 = vrot.slane %v4119, %v4125
        %v4127 = vcombine.low %v2291, %v2355
        %v4129 = vunpack.c.l.s4 1983009808
        %v4130 = vunpack.c.0.s8 %v4129
        %v4131 = vlaneseq
        %v4132 = vshrl.u32 %v4131, 7
        %v4133 = vsub.s32 %v4130, %v4132
        %v4134 = vrot.slane %v4127, %v4133
        %v4135 = vcombine.low %v2387, %v2451
        %v4137 = vunpack.c.l.s4 1983009808
        %v4138 = vunpack.c.0.s8 %v4137
        %v4139 = vlaneseq
        %v4140 = vshrl.u32 %v4139, 7
        %v4141 = vsub.s32 %v4138, %v4140
        %v4142 = vrot.slane %v4135, %v4141
        %v4143 = vcombine.low %v2419, %v2483
        %v4145 = vunpack.c.l.s4 1983009808
        %v4146 = vunpack.c.0.s8 %v4145
        %v4147 = vlaneseq
        %v4148 = vshrl.u32 %v4147, 7
        %v4149 = vsub.s32 %v4146, %v4148
        %v4150 = vrot.slane %v4143, %v4149
        %v4151 = vcombine.low %v4126, %v4134
        %v4153 = vunpack.c.l.s4 1934713408
        %v4154 = vunpack.c.0.s8 %v4153
        %v4155 = vlaneseq
        %v4156 = vshrl.u32 %v4155, 7
        %v4157 = vsub.s32 %v4154, %v4156
        %v4158 = vrot.slane %v4151, %v4157
        %v4159 = vcombine.low %v4142, %v4150
        %v4161 = vunpack.c.l.s4 1934713408
        %v4162 = vunpack.c.0.s8 %v4161
        %v4163 = vlaneseq
        %v4164 = vshrl.u32 %v4163, 7
        %v4165 = vsub.s32 %v4162, %v4164
        %v4166 = vrot.slane %v4159, %v4165
        %v4167 = vcombine.low %v4158, %v4166
        %v4168 = vcombine.high %v4158, %v4166
        %4169 = vst.msk [vmem:[%s500] sm:$0xff] %vm2025, %v2615
        %4170 = vst.msk [vmem:[%s500 + $0x8] sm:$0xff] %vm2025, %v2616
        %4171 = vst.msk [vmem:[%s500 + $0x10] sm:$0xff] %vm2025, %v2617
        %4172 = vst.msk [vmem:[%s500 + $0x18] sm:$0xff] %vm2025, %v2618
        %4173 = vst.msk [vmem:[%s500 + $0x20] sm:$0xff] %vm2025, %v2619
        %4174 = vst.msk [vmem:[%s500 + $0x28] sm:$0xff] %vm2025, %v2620
        %4175 = vst.msk [vmem:[%s500 + $0x30] sm:$0xff] %vm2025, %v2621
        %4176 = vst.msk [vmem:[%s500 + $0x38] sm:$0xff] %vm2025, %v2622
        %4177 = vst.msk [vmem:[%s500 + $0x40] sm:$0xff] %vm2025, %v2751
        %4178 = vst.msk [vmem:[%s500 + $0x48] sm:$0xff] %vm2025, %v2752
        %4179 = vst.msk [vmem:[%s500 + $0x50] sm:$0xff] %vm2025, %v2753
        %4180 = vst.msk [vmem:[%s500 + $0x58] sm:$0xff] %vm2025, %v2754
        %4181 = vst.msk [vmem:[%s500 + $0x60] sm:$0xff] %vm2025, %v2755
        %4182 = vst.msk [vmem:[%s500 + $0x68] sm:$0xff] %vm2025, %v2756
        %4183 = vst.msk [vmem:[%s500 + $0x70] sm:$0xff] %vm2025, %v2757
        %4184 = vst.msk [vmem:[%s500 + $0x78] sm:$0xff] %vm2025, %v2758
        %4185 = vst.msk [vmem:[%s500 + $0x80] sm:$0xff] %vm2025, %v2887
        %4186 = vst.msk [vmem:[%s500 + $0x88] sm:$0xff] %vm2025, %v2888
        %4187 = vst.msk [vmem:[%s500 + $0x90] sm:$0xff] %vm2025, %v2889
        %4188 = vst.msk [vmem:[%s500 + $0x98] sm:$0xff] %vm2025, %v2890
        %4189 = vst.msk [vmem:[%s500 + $0xa0] sm:$0xff] %vm2025, %v2891
        %4190 = vst.msk [vmem:[%s500 + $0xa8] sm:$0xff] %vm2025, %v2892
        %4191 = vst.msk [vmem:[%s500 + $0xb0] sm:$0xff] %vm2025, %v2893
        %4192 = vst.msk [vmem:[%s500 + $0xb8] sm:$0xff] %vm2025, %v2894
        %4193 = vst.msk [vmem:[%s500 + $0xc0] sm:$0xff] %vm2025, %v3023
        %4194 = vst.msk [vmem:[%s500 + $0xc8] sm:$0xff] %vm2025, %v3024
        %4195 = vst.msk [vmem:[%s500 + $0xd0] sm:$0xff] %vm2025, %v3025
        %4196 = vst.msk [vmem:[%s500 + $0xd8] sm:$0xff] %vm2025, %v3026
        %4197 = vst.msk [vmem:[%s500 + $0xe0] sm:$0xff] %vm2025, %v3027
        %4198 = vst.msk [vmem:[%s500 + $0xe8] sm:$0xff] %vm2025, %v3028
        %4199 = vst.msk [vmem:[%s500 + $0xf0] sm:$0xff] %vm2025, %v3029
        %4200 = vst.msk [vmem:[%s500 + $0xf8] sm:$0xff] %vm2025, %v3030
        %4201 = vst.msk [vmem:[%s500 + $0x100] sm:$0xff] %vm2025, %v3159
        %4202 = vst.msk [vmem:[%s500 + $0x108] sm:$0xff] %vm2025, %v3160
        %4203 = vst.msk [vmem:[%s500 + $0x110] sm:$0xff] %vm2025, %v3161
        %4204 = vst.msk [vmem:[%s500 + $0x118] sm:$0xff] %vm2025, %v3162
        %4205 = vst.msk [vmem:[%s500 + $0x120] sm:$0xff] %vm2025, %v3163
        %4206 = vst.msk [vmem:[%s500 + $0x128] sm:$0xff] %vm2025, %v3164
        %4207 = vst.msk [vmem:[%s500 + $0x130] sm:$0xff] %vm2025, %v3165
        %4208 = vst.msk [vmem:[%s500 + $0x138] sm:$0xff] %vm2025, %v3166
        %4209 = vst.msk [vmem:[%s500 + $0x140] sm:$0xff] %vm2025, %v3295
        %4210 = vst.msk [vmem:[%s500 + $0x148] sm:$0xff] %vm2025, %v3296
        %4211 = vst.msk [vmem:[%s500 + $0x150] sm:$0xff] %vm2025, %v3297
        %4212 = vst.msk [vmem:[%s500 + $0x158] sm:$0xff] %vm2025, %v3298
        %4213 = vst.msk [vmem:[%s500 + $0x160] sm:$0xff] %vm2025, %v3299
        %4214 = vst.msk [vmem:[%s500 + $0x168] sm:$0xff] %vm2025, %v3300
        %4215 = vst.msk [vmem:[%s500 + $0x170] sm:$0xff] %vm2025, %v3301
        %4216 = vst.msk [vmem:[%s500 + $0x178] sm:$0xff] %vm2025, %v3302
        %4217 = vst.msk [vmem:[%s500 + $0x180] sm:$0xff] %vm2025, %v3431
        %4218 = vst.msk [vmem:[%s500 + $0x188] sm:$0xff] %vm2025, %v3432
        %4219 = vst.msk [vmem:[%s500 + $0x190] sm:$0xff] %vm2025, %v3433
        %4220 = vst.msk [vmem:[%s500 + $0x198] sm:$0xff] %vm2025, %v3434
        %4221 = vst.msk [vmem:[%s500 + $0x1a0] sm:$0xff] %vm2025, %v3435
        %4222 = vst.msk [vmem:[%s500 + $0x1a8] sm:$0xff] %vm2025, %v3436
        %4223 = vst.msk [vmem:[%s500 + $0x1b0] sm:$0xff] %vm2025, %v3437
        %4224 = vst.msk [vmem:[%s500 + $0x1b8] sm:$0xff] %vm2025, %v3438
        %4225 = vst.msk [vmem:[%s500 + $0x1c0] sm:$0xff] %vm2025, %v3567
        %4226 = vst.msk [vmem:[%s500 + $0x1c8] sm:$0xff] %vm2025, %v3568
        %4227 = vst.msk [vmem:[%s500 + $0x1d0] sm:$0xff] %vm2025, %v3569
        %4228 = vst.msk [vmem:[%s500 + $0x1d8] sm:$0xff] %vm2025, %v3570
        %4229 = vst.msk [vmem:[%s500 + $0x1e0] sm:$0xff] %vm2025, %v3571
        %4230 = vst.msk [vmem:[%s507] sm:$0xff] %vm2025, %v3572
        %4231 = vst.msk [vmem:[%s507 + $0x8] sm:$0xff] %vm2025, %v3573
        %4232 = vst.msk [vmem:[%s507 + $0x10] sm:$0xff] %vm2025, %v3574
        %4233 = vst.msk [vmem:[%s507 + $0x18] sm:$0xff] %vm2025, %v3703
        %4234 = vst.msk [vmem:[%s507 + $0x20] sm:$0xff] %vm2025, %v3704
        %4235 = vst.msk [vmem:[%s507 + $0x28] sm:$0xff] %vm2025, %v3705
        %4236 = vst.msk [vmem:[%s507 + $0x30] sm:$0xff] %vm2025, %v3706
        %4237 = vst.msk [vmem:[%s507 + $0x38] sm:$0xff] %vm2025, %v3707
        %4238 = vst.msk [vmem:[%s507 + $0x40] sm:$0xff] %vm2025, %v3708
        %4239 = vst.msk [vmem:[%s507 + $0x48] sm:$0xff] %vm2025, %v3709
        %4240 = vst.msk [vmem:[%s507 + $0x50] sm:$0xff] %vm2025, %v3710
        %4241 = vst.msk [vmem:[%s507 + $0x58] sm:$0xff] %vm2025, %v3839
        %4242 = vst.msk [vmem:[%s507 + $0x60] sm:$0xff] %vm2025, %v3840
        %4243 = vst.msk [vmem:[%s507 + $0x68] sm:$0xff] %vm2025, %v3841
        %4244 = vst.msk [vmem:[%s507 + $0x70] sm:$0xff] %vm2025, %v3842
        %4245 = vst.msk [vmem:[%s507 + $0x78] sm:$0xff] %vm2025, %v3843
        %4246 = vst.msk [vmem:[%s507 + $0x80] sm:$0xff] %vm2025, %v3844
        %4247 = vst.msk [vmem:[%s507 + $0x88] sm:$0xff] %vm2025, %v3845
        %4248 = vst.msk [vmem:[%s507 + $0x90] sm:$0xff] %vm2025, %v3846
        %4249 = vst.msk [vmem:[%s507 + $0x98] sm:$0xff] %vm2025, %v3975
        %4250 = vst.msk [vmem:[%s507 + $0xa0] sm:$0xff] %vm2025, %v3976
        %4251 = vst.msk [vmem:[%s507 + $0xa8] sm:$0xff] %vm2025, %v3977
        %4252 = vst.msk [vmem:[%s507 + $0xb0] sm:$0xff] %vm2025, %v3978
        %4253 = vst.msk [vmem:[%s507 + $0xb8] sm:$0xff] %vm2025, %v3979
        %4254 = vst.msk [vmem:[%s507 + $0xc0] sm:$0xff] %vm2025, %v3980
        %4255 = vst.msk [vmem:[%s507 + $0xc8] sm:$0xff] %vm2025, %v3981
        %4256 = vst.msk [vmem:[%s507 + $0xd0] sm:$0xff] %vm2025, %v3982
        %4257 = vst.msk [vmem:[%s507 + $0xd8] sm:$0xff] %vm2025, %v4111
        %4258 = vst.msk [vmem:[%s507 + $0xe0] sm:$0xff] %vm2025, %v4112
        %4259 = vst.msk [vmem:[%s507 + $0xe8] sm:$0xff] %vm2025, %v4113
        %4260 = vst.msk [vmem:[%s507 + $0xf0] sm:$0xff] %vm2025, %v4114
        %4261 = vst.msk [vmem:[%s507 + $0xf8] sm:$0xff] %vm2025, %v4115
        %4262 = vst.msk [vmem:[%s507 + $0x100] sm:$0xff] %vm2025, %v4116
        %4263 = vst.msk [vmem:[%s507 + $0x108] sm:$0xff] %vm2025, %v4117
        %4264 = vst.msk [vmem:[%s507 + $0x110] sm:$0xff] %vm2025, %v4118
        %4265 = vst.msk [vmem:[%s507 + $0x118] sm:$0xff] %vm2025, %v4167
        %4266 = vst.msk [vmem:[%s507 + $0x120] sm:$0xff] %vm2025, %v4168
        %s4267 = sand.u32 %s213, 1
        %s4268 = scalar_lea.sflag [#allocation4], %s4267
        %s4269 = sand.u32 %s213, 1
        %s4270 = smul.addr %s4269, 488
        %s4271 = scalar_lea.vmem [#allocation13], %s4270
        %s4272 = sand.u32 %s38, 1
        %s4273 = scalar_lea.sflag [#allocation15], %s4272
        %s4274 = sand.u32 %s243, 1
        %s4275 = smul.addr %s4274, 296
        %s4276 = scalar_lea.vmem [#allocation14], %s4275
        %s4277 = sand.u32 %s38, 1
        %s4278 = scalar_lea.sflag [#allocation15], %s4277
        %s4279 = sand.u32 %s273, 1
        %s4280 = smul.addr %s4279, 296
        %s4281 = scalar_lea.vmem [#allocation16], %s4280
        %s4282 = sand.u32 %s303, 1
        %s4283 = scalar_lea.sflag [#allocation18], %s4282
        %s4284 = sand.u32 %s303, 1
        %s4285 = smul.addr %s4284, 152
        %s4286 = scalar_lea.vmem [#allocation17], %s4285
        // Predicated region
        $region69: #{distance_network.1} parent=43 // pred_check
          %p4287 = pneg %p223
        $region70: #{distance_network.1} parent=43 // pred_check_branch
          %4289 = sbr.rel (%p4287) target = $region72
        $region71: #{distance_network.1} parent=43 // pred_region
          %s4291 = ssub.s32 7808, 7808
          %4292 = vsyncadd %s4268, %s4291
          %s4293 = sadd.s32 %s45, %s44
          %s4294 = smul.addr %s43, 61
          %s4295 = sadd.s32 %s4293, %s4294
          %s4296 = smul.addr %s4295, 128
          %s4297 = scalar_lea.hbm %s6, %s4296
          %s4298 = sshll.u32 %s4271, 4
          %s4299 = int_to_ptr.vmem [resolvable:$true] %s4298
          %4304 = dma.vmem_to_hbm [thread:$0]  %s4299, 7808, %s4297, %s4268, 128, 128, 8
        $region72: #{distance_network.1} parent=43 // pred_fallthru
          _
        // Predicated region
        $region73: #{distance_network.1} parent=43 // pred_check
          %p4305 = pneg %p253
        $region74: #{distance_network.1} parent=43 // pred_check_branch
          %4307 = sbr.rel (%p4305) target = $region76
        $region75: #{distance_network.1} parent=43 // pred_region
          %s4309 = ssub.s32 4736, 4736
          %4310 = vsyncadd %s4273, %s4309
          %s4311 = sadd.s32 %s45, %s44
          %s4312 = smul.addr %s43, 37
          %s4313 = sadd.s32 %s4311, %s4312
          %s4314 = smul.addr %s4313, 128
          %s4315 = scalar_lea.hbm %s7, %s4314
          %s4316 = sshll.u32 %s4276, 4
          %s4317 = int_to_ptr.vmem [resolvable:$true] %s4316
          %4322 = dma.vmem_to_hbm [thread:$0]  %s4317, 4736, %s4315, %s4273, 128, 128, 8
        $region76: #{distance_network.1} parent=43 // pred_fallthru
          _
        // Predicated region
        $region77: #{distance_network.1} parent=43 // pred_check
          %p4323 = pneg %p283
        $region78: #{distance_network.1} parent=43 // pred_check_branch
          %4325 = sbr.rel (%p4323) target = $region80
        $region79: #{distance_network.1} parent=43 // pred_region
          %s4327 = ssub.s32 4736, 4736
          %4328 = vsyncadd %s4278, %s4327
          %s4329 = sadd.s32 %s45, %s44
          %s4330 = smul.addr %s43, 37
          %s4331 = sadd.s32 %s4329, %s4330
          %s4332 = smul.addr %s4331, 128
          %s4333 = scalar_lea.hbm %s8, %s4332
          %s4334 = sshll.u32 %s4281, 4
          %s4335 = int_to_ptr.vmem [resolvable:$true] %s4334
          %4340 = dma.vmem_to_hbm [thread:$0]  %s4335, 4736, %s4333, %s4278, 128, 128, 8
        $region80: #{distance_network.1} parent=43 // pred_fallthru
          _
        // Predicated region
        $region81: #{distance_network.1} parent=43 // pred_check
          %p4341 = pneg %p313
        $region82: #{distance_network.1} parent=43 // pred_check_branch
          %4343 = sbr.rel (%p4341) target = $region84
        $region83: #{distance_network.1} parent=43 // pred_region
          %s4345 = ssub.s32 2432, 2432
          %4346 = vsyncadd %s4283, %s4345
          %s4347 = sadd.s32 %s45, %s44
          %s4348 = smul.addr %s43, 19
          %s4349 = sadd.s32 %s4347, %s4348
          %s4350 = smul.addr %s4349, 128
          %s4351 = scalar_lea.hbm %s9, %s4350
          %s4352 = sshll.u32 %s4286, 4
          %s4353 = int_to_ptr.vmem [resolvable:$true] %s4352
          %4358 = dma.vmem_to_hbm [thread:$0]  %s4353, 2432, %s4351, %s4283, 128, 128, 8
        $region84: #{distance_network.1} parent=43 // pred_fallthru
          _
      $region44: #{distance_network.1} parent=5 // pred_fallthru
        _
      %p4359 = scmp.le.s32.totalorder 2, %s33
      // Predicated region
      $region85: #{distance_network.1} parent=5 // pred_check
        %p4360 = pneg %p4359
      $region86: #{distance_network.1} parent=5 // pred_check_branch
        %4362 = sbr.rel (%p4360) target = $region88
      $region87: #{distance_network.1} parent=5 // pred_region
        %s4363 = ssub.s32 %s33, 2
        // Predicated region
        $region89: #{distance_network.1} parent=87 // pred_check
          %p4364 = pneg %p229
        $region90: #{distance_network.1} parent=87 // pred_check_branch
          %4366 = sbr.rel (%p4364) target = $region92
        $region91: #{distance_network.1} parent=87 // pred_region
          %s4367 = sand.u32 %s214, 1
          %s4368 = scalar_lea.sflag [#allocation4], %s4367
          %s4369 = sand.u32 %s214, 1
          %s4370 = smul.addr %s4369, 488
          %s4371 = scalar_lea.vmem [#allocation13], %s4370
          %4372 = dma.done %s4368, 7808
        $region92: #{distance_network.1} parent=87 // pred_fallthru
          _
        // Predicated region
        $region93: #{distance_network.1} parent=87 // pred_check
          %p4373 = pneg %p259
        $region94: #{distance_network.1} parent=87 // pred_check_branch
          %4375 = sbr.rel (%p4373) target = $region96
        $region95: #{distance_network.1} parent=87 // pred_region
          %s4376 = sand.u32 %s39, 1
          %s4377 = scalar_lea.sflag [#allocation15], %s4376
          %s4378 = sand.u32 %s244, 1
          %s4379 = smul.addr %s4378, 296
          %s4380 = scalar_lea.vmem [#allocation14], %s4379
          %4381 = dma.done %s4377, 4736
        $region96: #{distance_network.1} parent=87 // pred_fallthru
          _
        // Predicated region
        $region97: #{distance_network.1} parent=87 // pred_check
          %p4382 = pneg %p289
        $region98: #{distance_network.1} parent=87 // pred_check_branch
          %4384 = sbr.rel (%p4382) target = $region100
        $region99: #{distance_network.1} parent=87 // pred_region
          %s4385 = sand.u32 %s39, 1
          %s4386 = scalar_lea.sflag [#allocation15], %s4385
          %s4387 = sand.u32 %s274, 1
          %s4388 = smul.addr %s4387, 296
          %s4389 = scalar_lea.vmem [#allocation16], %s4388
          %4390 = dma.done %s4386, 4736
        $region100: #{distance_network.1} parent=87 // pred_fallthru
          _
        // Predicated region
        $region101: #{distance_network.1} parent=87 // pred_check
          %p4391 = pneg %p319
        $region102: #{distance_network.1} parent=87 // pred_check_branch
          %4393 = sbr.rel (%p4391) target = $region104
        $region103: #{distance_network.1} parent=87 // pred_region
          %s4394 = sand.u32 %s304, 1
          %s4395 = scalar_lea.sflag [#allocation18], %s4394
          %s4396 = sand.u32 %s304, 1
          %s4397 = smul.addr %s4396, 152
          %s4398 = scalar_lea.vmem [#allocation17], %s4397
          %4399 = dma.done %s4395, 2432
        $region104: #{distance_network.1} parent=87 // pred_fallthru
          _
      $region88: #{distance_network.1} parent=5 // pred_fallthru
        _
    $region6: #{distance_network.1} parent=1 // loop_footer
      %s37 = sadd.s32 1, %s33
    $region7: #{distance_network.1} parent=1 // loop_footer_branch
      %32 = sbr.rel target = $region3
    $region8: #{distance_network.1} parent=1 // loop_exit
      _
    %4400 = vsyncpa [#allocation3], 1
    %s4401 = scalar_lea.sflag [#allocation3], 1
    %4402 = vsyncpa %s4401, 1
    %4403 = vsyncpa [#allocation6], 1
    %s4404 = scalar_lea.sflag [#allocation6], 1
    %4405 = vsyncpa %s4404, 1
    %4406 = vsyncpa [#allocation9], 1
    %4407 = vsyncpa [#allocation12], 1
    %4408 = vsyncpa [#allocation4], 1
    %s4409 = scalar_lea.sflag [#allocation4], 1
    %4410 = vsyncpa %s4409, 1
    %4411 = vsyncpa [#allocation15], 1
    %s4412 = scalar_lea.sflag [#allocation15], 1
    %4413 = vsyncpa %s4412, 1
    %4414 = vsyncpa [#allocation18], 1
    %s4415 = scalar_lea.sflag [#allocation18], 1
    %4416 = vsyncpa %s4415, 1

</llo_original>
